<compile_context>
chip_gen: v5e
topology: v5e:2x2
jax: 0.10.0
libtpu: 0.0.40
codegen_flags: <defaults>
</compile_context>

<pallas_src>
import functools

import jax
import jax.numpy as jnp
from jax.experimental import pallas as pl
from jax.experimental.pallas import tpu as pltpu

LANES = 128                      # lane width: channel / K dims padded to multiples of this
MAX_TM = 512                     # M (output-pixel) tile rows per grid step
VMEM_LIMIT = 32 * 1024 * 1024    # explicit scoped-VMEM limit (safe on v5e/v6e/v7x)


def _round_up(x, m):
    return ((x + m - 1) // m) * m


def _cdiv(a, b):
    return -(-a // b)


def _pick_m_tiling(m):
    """Return (m_pad, tm): tm a multiple of 8, tm <= MAX_TM, tm | m_pad.

    Ensures >= 2 parallel M tiles whenever m >= 16 so the parallel grid axis can
    be sharded across both TensorCores on v7x (no effect on v5e/v6e, 1 TC/chip).
    """
    min_tiles = 2 if m >= 16 else 1
    tiles = max(min_tiles, _cdiv(m, MAX_TM))
    tm = min(MAX_TM, _round_up(_cdiv(m, tiles), 8))
    m_pad = _round_up(m, tm)
    return m_pad, tm


# ----------------------------------------------------------------------------
# Pallas kernels (hot path)
# ----------------------------------------------------------------------------

def _conv_kernel(x_ref, w_ref, b_ref, o_ref, *, relu):
    """Single-step im2col-matmul conv + folded-BN bias (+ReLU).  Grid = (M,)."""
    y = jnp.dot(x_ref[...], w_ref[...], preferred_element_type=jnp.float32)
    y = y + b_ref[...]
    if relu:
        y = jnp.maximum(y, 0.0)
    o_ref[...] = y.astype(o_ref.dtype)


def _conv_res_kernel(x_ref, w_ref, b_ref, r_ref, o_ref):
    """Second conv of a BasicBlock: matmul + bias + residual add + ReLU fused."""
    y = jnp.dot(x_ref[...], w_ref[...], preferred_element_type=jnp.float32)
    y = y + b_ref[...] + r_ref[...].astype(jnp.float32)
    o_ref[...] = jnp.maximum(y, 0.0).astype(o_ref.dtype)


def _maxpool_kernel(x_ref, o_ref):
    # x: (k*k, tm, C) window taps -> elementwise max over the tap axis.
    o_ref[...] = jnp.max(x_ref[...].astype(jnp.float32), axis=0).astype(o_ref.dtype)


def _global_avgpool_kernel(x_ref, o_ref):
    # x: (N, H*W, C) -> mean over spatial axis (AdaptiveAvgPool2d((1,1)) + flatten).
    o_ref[...] = jnp.mean(x_ref[...].astype(jnp.float32), axis=1).astype(o_ref.dtype)


# ----------------------------------------------------------------------------
# Tiled conv-as-matmul caller (single K step, resident weights/bias)
# ----------------------------------------------------------------------------

def _conv_matmul(patches, wmat, bias, residual, relu, tm):
    m_pad, k_pad = patches.shape
    c_pad = wmat.shape[1]
    grid = (m_pad // tm,)

    in_specs = [
        # im2col patches (bf16): streamed per M tile.
        # TODO(synk): pipeline_mode=pl.Buffered(3) here if DMA is exposed on v5e.
        pl.BlockSpec((tm, k_pad), lambda i: (i, 0)),
        # BN-folded weights (bf16): grid-invariant -> DMA'd once, VMEM-resident.
        pl.BlockSpec((k_pad, c_pad), lambda i: (0, 0)),
        # bias (f32): grid-invariant.
        pl.BlockSpec((1, c_pad), lambda i: (0, 0)),
    ]
    args = [patches, wmat, bias]
    if residual is None:
        kernel = functools.partial(_conv_kernel, relu=relu)
    else:
        in_specs.append(pl.BlockSpec((tm, c_pad), lambda i: (i, 0)))
        args.append(residual)
        kernel = _conv_res_kernel

    return pl.pallas_call(
        kernel,
        out_shape=jax.ShapeDtypeStruct((m_pad, c_pad), jnp.bfloat16),
        grid_spec=pltpu.PrefetchScalarGridSpec(
            num_scalar_prefetch=0,
            grid=grid,
            in_specs=in_specs,
            out_specs=pl.BlockSpec((tm, c_pad), lambda i: (i, 0)),
        ),
        compiler_params=pltpu.CompilerParams(
            dimension_semantics=("parallel",),
            vmem_limit_bytes=VMEM_LIMIT,
        ),
    )(*args)


# ----------------------------------------------------------------------------
# Glue: im2col, conv+bn wrapper, pooling wrappers
# ----------------------------------------------------------------------------

def _im2col(x, k, stride, pad):
    """x: (N, H, W, C) -> patches (N*Ho*Wo, k*k*C), ordered (ky, kx, c)."""
    n, h, w, c = x.shape
    xp = jnp.pad(x, ((0, 0), (pad, pad), (pad, pad), (0, 0)))
    ho = (h + 2 * pad - k) // stride + 1
    wo = (w + 2 * pad - k) // stride + 1
    cols = []
    for ky in range(k):
        for kx in range(k):
            cols.append(
                xp[:, ky:ky + stride * (ho - 1) + 1:stride,
                      kx:kx + stride * (wo - 1) + 1:stride, :])
    patches = jnp.concatenate(cols, axis=-1).reshape(n * ho * wo, k * k * c)
    return patches, (n, ho, wo)


def conv_bn(x, w, scale, bias, *, stride, pad, relu=True, residual=None):
    """Conv2d(bias=False) + folded BatchNorm (+ residual) (+ ReLU) via tiled matmul."""
    k, _, cin, cout = w.shape
    # Stored activations are lane-padded (last dim 128); keep only real channels
    # so K = k*k*cin stays small, then pad K / Cout up to lane multiples.
    patches, (n, ho, wo) = _im2col(x[..., :cin], k, stride, pad)
    m, kdim = patches.shape
    c_pad = _round_up(cout, LANES)
    k_pad = _round_up(kdim, LANES)
    m_pad, tm = _pick_m_tiling(m)

    # Fold the BN scale into the weight matrix (kernel epilogue is just "+bias").
    wmat = w.reshape(kdim, cout) * scale.reshape(1, cout)
    wmat = jnp.pad(wmat, ((0, k_pad - kdim), (0, c_pad - cout))).astype(jnp.bfloat16)
    bias_p = jnp.pad(bias.reshape(1, cout),
                     ((0, 0), (0, c_pad - cout))).astype(jnp.float32)
    patches_p = jnp.pad(patches, ((0, m_pad - m), (0, k_pad - kdim))).astype(jnp.bfloat16)

    res_p = None
    if residual is not None:
        res_p = jnp.pad(residual.reshape(m, residual.shape[-1]),
                        ((0, m_pad - m), (0, 0))).astype(jnp.bfloat16)

    out = _conv_matmul(patches_p, wmat, bias_p, res_p, relu, tm)
    return out[:m].reshape(n, ho, wo, c_pad)


def maxpool2d(x, *, k=3, stride=2, pad=1):
    """MaxPool2d(kernel=3, stride=2, padding=1): lane-dense elementwise-max kernel."""
    n, h, w, c = x.shape
    xp = jnp.pad(x, ((0, 0), (pad, pad), (pad, pad), (0, 0)),
                 constant_values=-jnp.inf)
    ho = (h + 2 * pad - k) // stride + 1
    wo = (w + 2 * pad - k) // stride + 1
    taps = []
    for ky in range(k):
        for kx in range(k):
            taps.append(
                xp[:, ky:ky + stride * (ho - 1) + 1:stride,
                      kx:kx + stride * (wo - 1) + 1:stride, :])
    m = n * ho * wo
    m_pad, tm = _pick_m_tiling(m)
    stacked = jnp.stack(taps, axis=0).reshape(k * k, m, c)
    stacked = jnp.pad(stacked, ((0, 0), (0, m_pad - m), (0, 0)))
    # TODO(synk): fuse this reduction into the conv1 epilogue (or read the NHWC
    # conv1 activation directly in-kernel) to avoid the 9x stacked HBM tensor.
    out = pl.pallas_call(
        _maxpool_kernel,
        out_shape=jax.ShapeDtypeStruct((m_pad, c), x.dtype),
        grid_spec=pltpu.PrefetchScalarGridSpec(
            num_scalar_prefetch=0,
            grid=(m_pad // tm,),
            in_specs=[pl.BlockSpec((k * k, tm, c), lambda i: (0, i, 0))],
            out_specs=pl.BlockSpec((tm, c), lambda i: (i, 0)),
        ),
        compiler_params=pltpu.CompilerParams(
            dimension_semantics=("parallel",),
            vmem_limit_bytes=VMEM_LIMIT,
        ),
    )(stacked)
    return out[:m].reshape(n, ho, wo, c)


def global_avgpool_flatten(x, real_c):
    """AdaptiveAvgPool2d((1,1)) followed by view(N, -1); slices off padded channels."""
    n, h, w, c = x.shape
    xf = x.reshape(n, h * w, c)
    # TODO(synk): grid over batch / spatial chunks for realistic sizes; whole-array
    # VMEM block is fine for this toy shape.
    out = pl.pallas_call(
        _global_avgpool_kernel,
        out_shape=jax.ShapeDtypeStruct((n, c), jnp.float32),
        in_specs=[pl.BlockSpec(memory_space=pltpu.MemorySpace.VMEM)],
        out_specs=pl.BlockSpec(memory_space=pltpu.MemorySpace.VMEM),
        compiler_params=pltpu.CompilerParams(vmem_limit_bytes=VMEM_LIMIT),
    )(xf)
    return out[:, :real_c]


# ----------------------------------------------------------------------------
# Deterministic synthetic "pretrained" parameters
# ----------------------------------------------------------------------------

_BN_EPS = 1e-5


def _init_conv_bn(key, k, cin, cout):
    kw, kg, kb, km, kv = jax.random.split(key, 5)
    fan_in = k * k * cin
    w = jax.random.normal(kw, (k, k, cin, cout), jnp.float32) / jnp.sqrt(float(fan_in))
    gamma = 1.0 + 0.1 * jax.random.normal(kg, (cout,), jnp.float32)
    beta = 0.1 * jax.random.normal(kb, (cout,), jnp.float32)
    mean = 0.1 * jax.random.normal(km, (cout,), jnp.float32)
    var = jnp.abs(jax.random.normal(kv, (cout,), jnp.float32)) + 0.5
    scale = gamma / jnp.sqrt(var + _BN_EPS)        # BN folded (inference mode)
    bias = beta - mean * scale
    return (w, scale, bias)


def _init_basic_block(key, cin, cout, stride):
    k1, k2, k3 = jax.random.split(key, 3)
    block = {
        "conv1": _init_conv_bn(k1, 3, cin, cout),
        "conv2": _init_conv_bn(k2, 3, cout, cout),
    }
    if stride != 1 or cin != cout:
        block["down"] = _init_conv_bn(k3, 1, cin, cout)
    return block


def init_resnet_params(key, widths=(8, 16, 32, 64), blocks_per_layer=(2, 2, 2, 2)):
    keys = jax.random.split(key, 6)
    params = {"conv1": _init_conv_bn(keys[0], 7, 3, widths[0]), "layers": []}
    cin = widths[0]
    for li, (cout, nblocks) in enumerate(zip(widths, blocks_per_layer)):
        stride = 1 if li == 0 else 2
        bkeys = jax.random.split(keys[li + 1], nblocks)
        layer = []
        for bi in range(nblocks):
            s = stride if bi == 0 else 1
            layer.append(_init_basic_block(bkeys[bi], cin, cout, s))
            cin = cout
        params["layers"].append(layer)
    return params


# ----------------------------------------------------------------------------
# Forward pass (== ResNetFeaturesPool.forward)
# ----------------------------------------------------------------------------

def _basic_block_fwd(x, p, stride):
    # TODO(synk): fuse the whole BasicBlock (conv1 -> conv2 + downsample +
    # residual + ReLU) into a single pallas_call keeping the intermediate in VMEM,
    # and share one GEMM between conv1 and the 1x1 downsample (concat along Cout).
    identity = x
    out = conv_bn(x, *p["conv1"], stride=stride, pad=1, relu=True)
    if "down" in p:
        identity = conv_bn(x, *p["down"], stride=stride, pad=0, relu=False)
    out = conv_bn(out, *p["conv2"], stride=1, pad=1, relu=True, residual=identity)
    return out


def resnet_features_pool(x_nchw, params):
    # PyTorch NCHW input -> NHWC for the TPU kernels.
    x = jnp.transpose(x_nchw, (0, 2, 3, 1))
    x = conv_bn(x, *params["conv1"], stride=2, pad=3, relu=True)   # conv1 + bn1 + relu
    x = maxpool2d(x, k=3, stride=2, pad=1)                         # maxpool
    for li, layer in enumerate(params["layers"]):                  # layer1..layer4
        for bi, block in enumerate(layer):
            stride = 1 if (li == 0 or bi > 0) else 2
            x = _basic_block_fwd(x, block, stride)
    real_c = params["layers"][-1][-1]["conv2"][0].shape[-1]
    return global_avgpool_flatten(x, real_c)                       # avgpool + view(N, -1)


# ----------------------------------------------------------------------------

if __name__ == "__main__":
    key = jax.random.PRNGKey(0)
    kparams, kx = jax.random.split(key)
    params = init_resnet_params(kparams)

    # Small ResNet-style input (PyTorch NCHW): batch=2, channels=3, spatial=32.
    x = jax.random.normal(kx, (2, 3, 32, 32), jnp.float32)

    feats = jax.jit(resnet_features_pool)(x, params)
    feats = jax.block_until_ready(feats)

    assert feats.shape == (2, 64), feats.shape
    assert bool(jnp.all(jnp.isfinite(feats)))
    print("KERNEL_OK")
</pallas_src>

<mosaic_0001>
module attributes {stable_mosaic.version = 11 : i64} {
  func.func @_conv_kernel(%arg0: i32, %arg1: memref<256x256xbf16, #tpu.memory_space<vmem>>, %arg2: memref<256x128xbf16, #tpu.memory_space<vmem>>, %arg3: memref<1x128xf32, #tpu.memory_space<vmem>>, %arg4: memref<256x128xbf16, #tpu.memory_space<vmem>>) attributes {dimension_semantics = [#tpu.dimension_semantics<parallel>], iteration_bounds = array<i64: 2>, scalar_prefetch = 0 : i64, scratch_operands = 0 : i64, tpu.core_type = #tpu.core_type<tc>, window_params = [{transform_indices = @transform_0, window_bounds = array<i64: 256, 256>}, {pipeline_mode = #tpu.pipeline_mode<synchronous>, transform_indices = @transform_1, window_bounds = array<i64: 256, 128>}, {pipeline_mode = #tpu.pipeline_mode<synchronous>, transform_indices = @transform_2, window_bounds = array<i64: 1, 128>}, {transform_indices = @transform_3, window_bounds = array<i64: 256, 128>}]} {
    %c0 = arith.constant 0 : index
    %c0_0 = arith.constant 0 : index
    %0 = vector.load %arg1[%c0, %c0_0] : memref<256x256xbf16, #tpu.memory_space<vmem>>, vector<256x256xbf16>
    %c0_1 = arith.constant 0 : index
    %c0_2 = arith.constant 0 : index
    %1 = vector.load %arg2[%c0_1, %c0_2] : memref<256x128xbf16, #tpu.memory_space<vmem>>, vector<256x128xbf16>
    %cst = arith.constant dense<0.000000e+00> : vector<256x128xf32>
    %2 = tpu.matmul %0, %1, %cst {dimension_numbers = #tpu.dot_dimension_numbers<[1], [0], [0], [1], [0, 0, 1, 1], [], []>} : vector<256x256xbf16>, vector<256x128xbf16>, vector<256x128xf32> -> vector<256x128xf32>
    %c0_3 = arith.constant 0 : index
    %c0_4 = arith.constant 0 : index
    %3 = vector.load %arg3[%c0_3, %c0_4] : memref<1x128xf32, #tpu.memory_space<vmem>>, vector<1x128xf32>
    %4 = vector.broadcast %3 : vector<1x128xf32> to vector<256x128xf32>
    %5 = arith.addf %2, %4 : vector<256x128xf32>
    %cst_5 = arith.constant 0.000000e+00 : f32
    %6 = vector.broadcast %cst_5 : f32 to vector<256x128xf32>
    %7 = arith.maximumf %5, %6 : vector<256x128xf32>
    %8 = arith.truncf %7 : vector<256x128xf32> to vector<256x128xbf16>
    %c0_6 = arith.constant 0 : index
    %c0_7 = arith.constant 0 : index
    %9 = vector.load %arg4[%c0_6, %c0_7] : memref<256x128xbf16, #tpu.memory_space<vmem>>, vector<256x128xbf16>
    tpu.vector_store %arg4[%c0_6, %c0_7], %8 {strides = array<i32>} : memref<256x128xbf16, #tpu.memory_space<vmem>>, vector<256x128xbf16>,
    return
  }
  func.func @transform_0(%arg0: i32) -> (i32, i32) {
    %c0_i32 = arith.constant 0 : i32
    %c0_i32_0 = arith.constant 0 : i32
    return %arg0, %c0_i32 : i32, i32
  }
  func.func @transform_1(%arg0: i32) -> (i32, i32) {
    %c0_i32 = arith.constant 0 : i32
    %c0_i32_0 = arith.constant 0 : i32
    %c0_i32_1 = arith.constant 0 : i32
    return %c0_i32, %c0_i32_0 : i32, i32
  }
  func.func @transform_2(%arg0: i32) -> (i32, i32) {
    %c0_i32 = arith.constant 0 : i32
    %c0_i32_0 = arith.constant 0 : i32
    %c0_i32_1 = arith.constant 0 : i32
    return %c0_i32, %c0_i32_0 : i32, i32
  }
  func.func @transform_3(%arg0: i32) -> (i32, i32) {
    %c0_i32 = arith.constant 0 : i32
    %c0_i32_0 = arith.constant 0 : i32
    return %arg0, %c0_i32 : i32, i32
  }
}

module attributes {stable_mosaic.version = 11 : i64} {
  func.func @_maxpool_kernel(%arg0: i32, %arg1: memref<9x64x128xbf16, #tpu.memory_space<vmem>>, %arg2: memref<64x128xbf16, #tpu.memory_space<vmem>>) attributes {dimension_semantics = [#tpu.dimension_semantics<parallel>], iteration_bounds = array<i64: 2>, scalar_prefetch = 0 : i64, scratch_operands = 0 : i64, tpu.core_type = #tpu.core_type<tc>, window_params = [{transform_indices = @transform_0, window_bounds = array<i64: 9, 64, 128>}, {transform_indices = @transform_1, window_bounds = array<i64: 64, 128>}]} {
    %c0 = arith.constant 0 : index
    %c0_0 = arith.constant 0 : index
    %c0_1 = arith.constant 0 : index
    %0 = vector.load %arg1[%c0, %c0_0, %c0_1] : memref<9x64x128xbf16, #tpu.memory_space<vmem>>, vector<9x64x128xbf16>
    %1 = arith.extf %0 : vector<9x64x128xbf16> to vector<9x64x128xf32>
    %cst = arith.constant dense<0xFF800000> : vector<64x128xf32>
    %2 = vector.multi_reduction <maximumf>, %1, %cst [0] : vector<9x64x128xf32> to vector<64x128xf32>
    %3 = arith.truncf %2 : vector<64x128xf32> to vector<64x128xbf16>
    %c0_2 = arith.constant 0 : index
    %c0_3 = arith.constant 0 : index
    %4 = vector.load %arg2[%c0_2, %c0_3] : memref<64x128xbf16, #tpu.memory_space<vmem>>, vector<64x128xbf16>
    tpu.vector_store %arg2[%c0_2, %c0_3], %3 {strides = array<i32>} : memref<64x128xbf16, #tpu.memory_space<vmem>>, vector<64x128xbf16>,
    return
  }
  func.func @transform_0(%arg0: i32) -> (i32, i32, i32) {
    %c0_i32 = arith.constant 0 : i32
    %c0_i32_0 = arith.constant 0 : i32
    %c0_i32_1 = arith.constant 0 : i32
    return %c0_i32, %arg0, %c0_i32_0 : i32, i32, i32
  }
  func.func @transform_1(%arg0: i32) -> (i32, i32) {
    %c0_i32 = arith.constant 0 : i32
    %c0_i32_0 = arith.constant 0 : i32
    return %arg0, %c0_i32 : i32, i32
  }
}

module attributes {stable_mosaic.version = 11 : i64} {
  func.func @_conv_kernel(%arg0: i32, %arg1: memref<64x128xbf16, #tpu.memory_space<vmem>>, %arg2: memref<128x128xbf16, #tpu.memory_space<vmem>>, %arg3: memref<1x128xf32, #tpu.memory_space<vmem>>, %arg4: memref<64x128xbf16, #tpu.memory_space<vmem>>) attributes {dimension_semantics = [#tpu.dimension_semantics<parallel>], iteration_bounds = array<i64: 2>, scalar_prefetch = 0 : i64, scratch_operands = 0 : i64, tpu.core_type = #tpu.core_type<tc>, window_params = [{transform_indices = @transform_0, window_bounds = array<i64: 64, 128>}, {pipeline_mode = #tpu.pipeline_mode<synchronous>, transform_indices = @transform_1, window_bounds = array<i64: 128, 128>}, {pipeline_mode = #tpu.pipeline_mode<synchronous>, transform_indices = @transform_2, window_bounds = array<i64: 1, 128>}, {transform_indices = @transform_3, window_bounds = array<i64: 64, 128>}]} {
    %c0 = arith.constant 0 : index
    %c0_0 = arith.constant 0 : index
    %0 = vector.load %arg1[%c0, %c0_0] : memref<64x128xbf16, #tpu.memory_space<vmem>>, vector<64x128xbf16>
    %c0_1 = arith.constant 0 : index
    %c0_2 = arith.constant 0 : index
    %1 = vector.load %arg2[%c0_1, %c0_2] : memref<128x128xbf16, #tpu.memory_space<vmem>>, vector<128x128xbf16>
    %cst = arith.constant dense<0.000000e+00> : vector<64x128xf32>
    %2 = tpu.matmul %0, %1, %cst {dimension_numbers = #tpu.dot_dimension_numbers<[1], [0], [0], [1], [0, 0, 1, 1], [], []>} : vector<64x128xbf16>, vector<128x128xbf16>, vector<64x128xf32> -> vector<64x128xf32>
    %c0_3 = arith.constant 0 : index
    %c0_4 = arith.constant 0 : index
    %3 = vector.load %arg3[%c0_3, %c0_4] : memref<1x128xf32, #tpu.memory_space<vmem>>, vector<1x128xf32>
    %4 = vector.broadcast %3 : vector<1x128xf32> to vector<64x128xf32>
    %5 = arith.addf %2, %4 : vector<64x128xf32>
    %cst_5 = arith.constant 0.000000e+00 : f32
    %6 = vector.broadcast %cst_5 : f32 to vector<64x128xf32>
    %7 = arith.maximumf %5, %6 : vector<64x128xf32>
    %8 = arith.truncf %7 : vector<64x128xf32> to vector<64x128xbf16>
    %c0_6 = arith.constant 0 : index
    %c0_7 = arith.constant 0 : index
    %9 = vector.load %arg4[%c0_6, %c0_7] : memref<64x128xbf16, #tpu.memory_space<vmem>>, vector<64x128xbf16>
    tpu.vector_store %arg4[%c0_6, %c0_7], %8 {strides = array<i32>} : memref<64x128xbf16, #tpu.memory_space<vmem>>, vector<64x128xbf16>,
    return
  }
  func.func @transform_0(%arg0: i32) -> (i32, i32) {
    %c0_i32 = arith.constant 0 : i32
    %c0_i32_0 = arith.constant 0 : i32
    return %arg0, %c0_i32 : i32, i32
  }
  func.func @transform_1(%arg0: i32) -> (i32, i32) {
    %c0_i32 = arith.constant 0 : i32
    %c0_i32_0 = arith.constant 0 : i32
    %c0_i32_1 = arith.constant 0 : i32
    return %c0_i32, %c0_i32_0 : i32, i32
  }
  func.func @transform_2(%arg0: i32) -> (i32, i32) {
    %c0_i32 = arith.constant 0 : i32
    %c0_i32_0 = arith.constant 0 : i32
    %c0_i32_1 = arith.constant 0 : i32
    return %c0_i32, %c0_i32_0 : i32, i32
  }
  func.func @transform_3(%arg0: i32) -> (i32, i32) {
    %c0_i32 = arith.constant 0 : i32
    %c0_i32_0 = arith.constant 0 : i32
    return %arg0, %c0_i32 : i32, i32
  }
}

module attributes {stable_mosaic.version = 11 : i64} {
  func.func @_conv_res_kernel(%arg0: i32, %arg1: memref<64x128xbf16, #tpu.memory_space<vmem>>, %arg2: memref<128x128xbf16, #tpu.memory_space<vmem>>, %arg3: memref<1x128xf32, #tpu.memory_space<vmem>>, %arg4: memref<64x128xbf16, #tpu.memory_space<vmem>>, %arg5: memref<64x128xbf16, #tpu.memory_space<vmem>>) attributes {dimension_semantics = [#tpu.dimension_semantics<parallel>], iteration_bounds = array<i64: 2>, scalar_prefetch = 0 : i64, scratch_operands = 0 : i64, tpu.core_type = #tpu.core_type<tc>, window_params = [{transform_indices = @transform_0, window_bounds = array<i64: 64, 128>}, {pipeline_mode = #tpu.pipeline_mode<synchronous>, transform_indices = @transform_1, window_bounds = array<i64: 128, 128>}, {pipeline_mode = #tpu.pipeline_mode<synchronous>, transform_indices = @transform_2, window_bounds = array<i64: 1, 128>}, {transform_indices = @transform_3, window_bounds = array<i64: 64, 128>}, {transform_indices = @transform_4, window_bounds = array<i64: 64, 128>}]} {
    %c0 = arith.constant 0 : index
    %c0_0 = arith.constant 0 : index
    %0 = vector.load %arg1[%c0, %c0_0] : memref<64x128xbf16, #tpu.memory_space<vmem>>, vector<64x128xbf16>
    %c0_1 = arith.constant 0 : index
    %c0_2 = arith.constant 0 : index
    %1 = vector.load %arg2[%c0_1, %c0_2] : memref<128x128xbf16, #tpu.memory_space<vmem>>, vector<128x128xbf16>
    %cst = arith.constant dense<0.000000e+00> : vector<64x128xf32>
    %2 = tpu.matmul %0, %1, %cst {dimension_numbers = #tpu.dot_dimension_numbers<[1], [0], [0], [1], [0, 0, 1, 1], [], []>} : vector<64x128xbf16>, vector<128x128xbf16>, vector<64x128xf32> -> vector<64x128xf32>
    %c0_3 = arith.constant 0 : index
    %c0_4 = arith.constant 0 : index
    %3 = vector.load %arg3[%c0_3, %c0_4] : memref<1x128xf32, #tpu.memory_space<vmem>>, vector<1x128xf32>
    %4 = vector.broadcast %3 : vector<1x128xf32> to vector<64x128xf32>
    %5 = arith.addf %2, %4 : vector<64x128xf32>
    %c0_5 = arith.constant 0 : index
    %c0_6 = arith.constant 0 : index
    %6 = vector.load %arg4[%c0_5, %c0_6] : memref<64x128xbf16, #tpu.memory_space<vmem>>, vector<64x128xbf16>
    %7 = arith.extf %6 : vector<64x128xbf16> to vector<64x128xf32>
    %8 = arith.addf %5, %7 : vector<64x128xf32>
    %cst_7 = arith.constant 0.000000e+00 : f32
    %9 = vector.broadcast %cst_7 : f32 to vector<64x128xf32>
    %10 = arith.maximumf %8, %9 : vector<64x128xf32>
    %11 = arith.truncf %10 : vector<64x128xf32> to vector<64x128xbf16>
    %c0_8 = arith.constant 0 : index
    %c0_9 = arith.constant 0 : index
    %12 = vector.load %arg5[%c0_8, %c0_9] : memref<64x128xbf16, #tpu.memory_space<vmem>>, vector<64x128xbf16>
    tpu.vector_store %arg5[%c0_8, %c0_9], %11 {strides = array<i32>} : memref<64x128xbf16, #tpu.memory_space<vmem>>, vector<64x128xbf16>,
    return
  }
  func.func @transform_0(%arg0: i32) -> (i32, i32) {
    %c0_i32 = arith.constant 0 : i32
    %c0_i32_0 = arith.constant 0 : i32
    return %arg0, %c0_i32 : i32, i32
  }
  func.func @transform_1(%arg0: i32) -> (i32, i32) {
    %c0_i32 = arith.constant 0 : i32
    %c0_i32_0 = arith.constant 0 : i32
    %c0_i32_1 = arith.constant 0 : i32
    return %c0_i32, %c0_i32_0 : i32, i32
  }
  func.func @transform_2(%arg0: i32) -> (i32, i32) {
    %c0_i32 = arith.constant 0 : i32
    %c0_i32_0 = arith.constant 0 : i32
    %c0_i32_1 = arith.constant 0 : i32
    return %c0_i32, %c0_i32_0 : i32, i32
  }
  func.func @transform_3(%arg0: i32) -> (i32, i32) {
    %c0_i32 = arith.constant 0 : i32
    %c0_i32_0 = arith.constant 0 : i32
    return %arg0, %c0_i32 : i32, i32
  }
  func.func @transform_4(%arg0: i32) -> (i32, i32) {
    %c0_i32 = arith.constant 0 : i32
    %c0_i32_0 = arith.constant 0 : i32
    return %arg0, %c0_i32 : i32, i32
  }
}

module attributes {stable_mosaic.version = 11 : i64} {
  func.func @_conv_kernel(%arg0: i32, %arg1: memref<16x128xbf16, #tpu.memory_space<vmem>>, %arg2: memref<128x128xbf16, #tpu.memory_space<vmem>>, %arg3: memref<1x128xf32, #tpu.memory_space<vmem>>, %arg4: memref<16x128xbf16, #tpu.memory_space<vmem>>) attributes {dimension_semantics = [#tpu.dimension_semantics<parallel>], iteration_bounds = array<i64: 2>, scalar_prefetch = 0 : i64, scratch_operands = 0 : i64, tpu.core_type = #tpu.core_type<tc>, window_params = [{transform_indices = @transform_0, window_bounds = array<i64: 16, 128>}, {pipeline_mode = #tpu.pipeline_mode<synchronous>, transform_indices = @transform_1, window_bounds = array<i64: 128, 128>}, {pipeline_mode = #tpu.pipeline_mode<synchronous>, transform_indices = @transform_2, window_bounds = array<i64: 1, 128>}, {transform_indices = @transform_3, window_bounds = array<i64: 16, 128>}]} {
    %c0 = arith.constant 0 : index
    %c0_0 = arith.constant 0 : index
    %0 = vector.load %arg1[%c0, %c0_0] : memref<16x128xbf16, #tpu.memory_space<vmem>>, vector<16x128xbf16>
    %c0_1 = arith.constant 0 : index
    %c0_2 = arith.constant 0 : index
    %1 = vector.load %arg2[%c0_1, %c0_2] : memref<128x128xbf16, #tpu.memory_space<vmem>>, vector<128x128xbf16>
    %cst = arith.constant dense<0.000000e+00> : vector<16x128xf32>
    %2 = tpu.matmul %0, %1, %cst {dimension_numbers = #tpu.dot_dimension_numbers<[1], [0], [0], [1], [0, 0, 1, 1], [], []>} : vector<16x128xbf16>, vector<128x128xbf16>, vector<16x128xf32> -> vector<16x128xf32>
    %c0_3 = arith.constant 0 : index
    %c0_4 = arith.constant 0 : index
    %3 = vector.load %arg3[%c0_3, %c0_4] : memref<1x128xf32, #tpu.memory_space<vmem>>, vector<1x128xf32>
    %4 = vector.broadcast %3 : vector<1x128xf32> to vector<16x128xf32>
    %5 = arith.addf %2, %4 : vector<16x128xf32>
    %cst_5 = arith.constant 0.000000e+00 : f32
    %6 = vector.broadcast %cst_5 : f32 to vector<16x128xf32>
    %7 = arith.maximumf %5, %6 : vector<16x128xf32>
    %8 = arith.truncf %7 : vector<16x128xf32> to vector<16x128xbf16>
    %c0_6 = arith.constant 0 : index
    %c0_7 = arith.constant 0 : index
    %9 = vector.load %arg4[%c0_6, %c0_7] : memref<16x128xbf16, #tpu.memory_space<vmem>>, vector<16x128xbf16>
    tpu.vector_store %arg4[%c0_6, %c0_7], %8 {strides = array<i32>} : memref<16x128xbf16, #tpu.memory_space<vmem>>, vector<16x128xbf16>,
    return
  }
  func.func @transform_0(%arg0: i32) -> (i32, i32) {
    %c0_i32 = arith.constant 0 : i32
    %c0_i32_0 = arith.constant 0 : i32
    return %arg0, %c0_i32 : i32, i32
  }
  func.func @transform_1(%arg0: i32) -> (i32, i32) {
    %c0_i32 = arith.constant 0 : i32
    %c0_i32_0 = arith.constant 0 : i32
    %c0_i32_1 = arith.constant 0 : i32
    return %c0_i32, %c0_i32_0 : i32, i32
  }
  func.func @transform_2(%arg0: i32) -> (i32, i32) {
    %c0_i32 = arith.constant 0 : i32
    %c0_i32_0 = arith.constant 0 : i32
    %c0_i32_1 = arith.constant 0 : i32
    return %c0_i32, %c0_i32_0 : i32, i32
  }
  func.func @transform_3(%arg0: i32) -> (i32, i32) {
    %c0_i32 = arith.constant 0 : i32
    %c0_i32_0 = arith.constant 0 : i32
    return %arg0, %c0_i32 : i32, i32
  }
}

module attributes {stable_mosaic.version = 11 : i64} {
  func.func @_conv_kernel(%arg0: i32, %arg1: memref<16x128xbf16, #tpu.memory_space<vmem>>, %arg2: memref<128x128xbf16, #tpu.memory_space<vmem>>, %arg3: memref<1x128xf32, #tpu.memory_space<vmem>>, %arg4: memref<16x128xbf16, #tpu.memory_space<vmem>>) attributes {dimension_semantics = [#tpu.dimension_semantics<parallel>], iteration_bounds = array<i64: 2>, scalar_prefetch = 0 : i64, scratch_operands = 0 : i64, tpu.core_type = #tpu.core_type<tc>, window_params = [{transform_indices = @transform_0, window_bounds = array<i64: 16, 128>}, {pipeline_mode = #tpu.pipeline_mode<synchronous>, transform_indices = @transform_1, window_bounds = array<i64: 128, 128>}, {pipeline_mode = #tpu.pipeline_mode<synchronous>, transform_indices = @transform_2, window_bounds = array<i64: 1, 128>}, {transform_indices = @transform_3, window_bounds = array<i64: 16, 128>}]} {
    %c0 = arith.constant 0 : index
    %c0_0 = arith.constant 0 : index
    %0 = vector.load %arg1[%c0, %c0_0] : memref<16x128xbf16, #tpu.memory_space<vmem>>, vector<16x128xbf16>
    %c0_1 = arith.constant 0 : index
    %c0_2 = arith.constant 0 : index
    %1 = vector.load %arg2[%c0_1, %c0_2] : memref<128x128xbf16, #tpu.memory_space<vmem>>, vector<128x128xbf16>
    %cst = arith.constant dense<0.000000e+00> : vector<16x128xf32>
    %2 = tpu.matmul %0, %1, %cst {dimension_numbers = #tpu.dot_dimension_numbers<[1], [0], [0], [1], [0, 0, 1, 1], [], []>} : vector<16x128xbf16>, vector<128x128xbf16>, vector<16x128xf32> -> vector<16x128xf32>
    %c0_3 = arith.constant 0 : index
    %c0_4 = arith.constant 0 : index
    %3 = vector.load %arg3[%c0_3, %c0_4] : memref<1x128xf32, #tpu.memory_space<vmem>>, vector<1x128xf32>
    %4 = vector.broadcast %3 : vector<1x128xf32> to vector<16x128xf32>
    %5 = arith.addf %2, %4 : vector<16x128xf32>
    %6 = arith.truncf %5 : vector<16x128xf32> to vector<16x128xbf16>
    %c0_5 = arith.constant 0 : index
    %c0_6 = arith.constant 0 : index
    %7 = vector.load %arg4[%c0_5, %c0_6] : memref<16x128xbf16, #tpu.memory_space<vmem>>, vector<16x128xbf16>
    tpu.vector_store %arg4[%c0_5, %c0_6], %6 {strides = array<i32>} : memref<16x128xbf16, #tpu.memory_space<vmem>>, vector<16x128xbf16>,
    return
  }
  func.func @transform_0(%arg0: i32) -> (i32, i32) {
    %c0_i32 = arith.constant 0 : i32
    %c0_i32_0 = arith.constant 0 : i32
    return %arg0, %c0_i32 : i32, i32
  }
  func.func @transform_1(%arg0: i32) -> (i32, i32) {
    %c0_i32 = arith.constant 0 : i32
    %c0_i32_0 = arith.constant 0 : i32
    %c0_i32_1 = arith.constant 0 : i32
    return %c0_i32, %c0_i32_0 : i32, i32
  }
  func.func @transform_2(%arg0: i32) -> (i32, i32) {
    %c0_i32 = arith.constant 0 : i32
    %c0_i32_0 = arith.constant 0 : i32
    %c0_i32_1 = arith.constant 0 : i32
    return %c0_i32, %c0_i32_0 : i32, i32
  }
  func.func @transform_3(%arg0: i32) -> (i32, i32) {
    %c0_i32 = arith.constant 0 : i32
    %c0_i32_0 = arith.constant 0 : i32
    return %arg0, %c0_i32 : i32, i32
  }
}

module attributes {stable_mosaic.version = 11 : i64} {
  func.func @_conv_res_kernel(%arg0: i32, %arg1: memref<16x256xbf16, #tpu.memory_space<vmem>>, %arg2: memref<256x128xbf16, #tpu.memory_space<vmem>>, %arg3: memref<1x128xf32, #tpu.memory_space<vmem>>, %arg4: memref<16x128xbf16, #tpu.memory_space<vmem>>, %arg5: memref<16x128xbf16, #tpu.memory_space<vmem>>) attributes {dimension_semantics = [#tpu.dimension_semantics<parallel>], iteration_bounds = array<i64: 2>, scalar_prefetch = 0 : i64, scratch_operands = 0 : i64, tpu.core_type = #tpu.core_type<tc>, window_params = [{transform_indices = @transform_0, window_bounds = array<i64: 16, 256>}, {pipeline_mode = #tpu.pipeline_mode<synchronous>, transform_indices = @transform_1, window_bounds = array<i64: 256, 128>}, {pipeline_mode = #tpu.pipeline_mode<synchronous>, transform_indices = @transform_2, window_bounds = array<i64: 1, 128>}, {transform_indices = @transform_3, window_bounds = array<i64: 16, 128>}, {transform_indices = @transform_4, window_bounds = array<i64: 16, 128>}]} {
    %c0 = arith.constant 0 : index
    %c0_0 = arith.constant 0 : index
    %0 = vector.load %arg1[%c0, %c0_0] : memref<16x256xbf16, #tpu.memory_space<vmem>>, vector<16x256xbf16>
    %c0_1 = arith.constant 0 : index
    %c0_2 = arith.constant 0 : index
    %1 = vector.load %arg2[%c0_1, %c0_2] : memref<256x128xbf16, #tpu.memory_space<vmem>>, vector<256x128xbf16>
    %cst = arith.constant dense<0.000000e+00> : vector<16x128xf32>
    %2 = tpu.matmul %0, %1, %cst {dimension_numbers = #tpu.dot_dimension_numbers<[1], [0], [0], [1], [0, 0, 1, 1], [], []>} : vector<16x256xbf16>, vector<256x128xbf16>, vector<16x128xf32> -> vector<16x128xf32>
    %c0_3 = arith.constant 0 : index
    %c0_4 = arith.constant 0 : index
    %3 = vector.load %arg3[%c0_3, %c0_4] : memref<1x128xf32, #tpu.memory_space<vmem>>, vector<1x128xf32>
    %4 = vector.broadcast %3 : vector<1x128xf32> to vector<16x128xf32>
    %5 = arith.addf %2, %4 : vector<16x128xf32>
    %c0_5 = arith.constant 0 : index
    %c0_6 = arith.constant 0 : index
    %6 = vector.load %arg4[%c0_5, %c0_6] : memref<16x128xbf16, #tpu.memory_space<vmem>>, vector<16x128xbf16>
    %7 = arith.extf %6 : vector<16x128xbf16> to vector<16x128xf32>
    %8 = arith.addf %5, %7 : vector<16x128xf32>
    %cst_7 = arith.constant 0.000000e+00 : f32
    %9 = vector.broadcast %cst_7 : f32 to vector<16x128xf32>
    %10 = arith.maximumf %8, %9 : vector<16x128xf32>
    %11 = arith.truncf %10 : vector<16x128xf32> to vector<16x128xbf16>
    %c0_8 = arith.constant 0 : index
    %c0_9 = arith.constant 0 : index
    %12 = vector.load %arg5[%c0_8, %c0_9] : memref<16x128xbf16, #tpu.memory_space<vmem>>, vector<16x128xbf16>
    tpu.vector_store %arg5[%c0_8, %c0_9], %11 {strides = array<i32>} : memref<16x128xbf16, #tpu.memory_space<vmem>>, vector<16x128xbf16>,
    return
  }
  func.func @transform_0(%arg0: i32) -> (i32, i32) {
    %c0_i32 = arith.constant 0 : i32
    %c0_i32_0 = arith.constant 0 : i32
    return %arg0, %c0_i32 : i32, i32
  }
  func.func @transform_1(%arg0: i32) -> (i32, i32) {
    %c0_i32 = arith.constant 0 : i32
    %c0_i32_0 = arith.constant 0 : i32
    %c0_i32_1 = arith.constant 0 : i32
    return %c0_i32, %c0_i32_0 : i32, i32
  }
  func.func @transform_2(%arg0: i32) -> (i32, i32) {
    %c0_i32 = arith.constant 0 : i32
    %c0_i32_0 = arith.constant 0 : i32
    %c0_i32_1 = arith.constant 0 : i32
    return %c0_i32, %c0_i32_0 : i32, i32
  }
  func.func @transform_3(%arg0: i32) -> (i32, i32) {
    %c0_i32 = arith.constant 0 : i32
    %c0_i32_0 = arith.constant 0 : i32
    return %arg0, %c0_i32 : i32, i32
  }
  func.func @transform_4(%arg0: i32) -> (i32, i32) {
    %c0_i32 = arith.constant 0 : i32
    %c0_i32_0 = arith.constant 0 : i32
    return %arg0, %c0_i32 : i32, i32
  }
}

module attributes {stable_mosaic.version = 11 : i64} {
  func.func @_conv_kernel(%arg0: i32, %arg1: memref<16x256xbf16, #tpu.memory_space<vmem>>, %arg2: memref<256x128xbf16, #tpu.memory_space<vmem>>, %arg3: memref<1x128xf32, #tpu.memory_space<vmem>>, %arg4: memref<16x128xbf16, #tpu.memory_space<vmem>>) attributes {dimension_semantics = [#tpu.dimension_semantics<parallel>], iteration_bounds = array<i64: 2>, scalar_prefetch = 0 : i64, scratch_operands = 0 : i64, tpu.core_type = #tpu.core_type<tc>, window_params = [{transform_indices = @transform_0, window_bounds = array<i64: 16, 256>}, {pipeline_mode = #tpu.pipeline_mode<synchronous>, transform_indices = @transform_1, window_bounds = array<i64: 256, 128>}, {pipeline_mode = #tpu.pipeline_mode<synchronous>, transform_indices = @transform_2, window_bounds = array<i64: 1, 128>}, {transform_indices = @transform_3, window_bounds = array<i64: 16, 128>}]} {
    %c0 = arith.constant 0 : index
    %c0_0 = arith.constant 0 : index
    %0 = vector.load %arg1[%c0, %c0_0] : memref<16x256xbf16, #tpu.memory_space<vmem>>, vector<16x256xbf16>
    %c0_1 = arith.constant 0 : index
    %c0_2 = arith.constant 0 : index
    %1 = vector.load %arg2[%c0_1, %c0_2] : memref<256x128xbf16, #tpu.memory_space<vmem>>, vector<256x128xbf16>
    %cst = arith.constant dense<0.000000e+00> : vector<16x128xf32>
    %2 = tpu.matmul %0, %1, %cst {dimension_numbers = #tpu.dot_dimension_numbers<[1], [0], [0], [1], [0, 0, 1, 1], [], []>} : vector<16x256xbf16>, vector<256x128xbf16>, vector<16x128xf32> -> vector<16x128xf32>
    %c0_3 = arith.constant 0 : index
    %c0_4 = arith.constant 0 : index
    %3 = vector.load %arg3[%c0_3, %c0_4] : memref<1x128xf32, #tpu.memory_space<vmem>>, vector<1x128xf32>
    %4 = vector.broadcast %3 : vector<1x128xf32> to vector<16x128xf32>
    %5 = arith.addf %2, %4 : vector<16x128xf32>
    %cst_5 = arith.constant 0.000000e+00 : f32
    %6 = vector.broadcast %cst_5 : f32 to vector<16x128xf32>
    %7 = arith.maximumf %5, %6 : vector<16x128xf32>
    %8 = arith.truncf %7 : vector<16x128xf32> to vector<16x128xbf16>
    %c0_6 = arith.constant 0 : index
    %c0_7 = arith.constant 0 : index
    %9 = vector.load %arg4[%c0_6, %c0_7] : memref<16x128xbf16, #tpu.memory_space<vmem>>, vector<16x128xbf16>
    tpu.vector_store %arg4[%c0_6, %c0_7], %8 {strides = array<i32>} : memref<16x128xbf16, #tpu.memory_space<vmem>>, vector<16x128xbf16>,
    return
  }
  func.func @transform_0(%arg0: i32) -> (i32, i32) {
    %c0_i32 = arith.constant 0 : i32
    %c0_i32_0 = arith.constant 0 : i32
    return %arg0, %c0_i32 : i32, i32
  }
  func.func @transform_1(%arg0: i32) -> (i32, i32) {
    %c0_i32 = arith.constant 0 : i32
    %c0_i32_0 = arith.constant 0 : i32
    %c0_i32_1 = arith.constant 0 : i32
    return %c0_i32, %c0_i32_0 : i32, i32
  }
  func.func @transform_2(%arg0: i32) -> (i32, i32) {
    %c0_i32 = arith.constant 0 : i32
    %c0_i32_0 = arith.constant 0 : i32
    %c0_i32_1 = arith.constant 0 : i32
    return %c0_i32, %c0_i32_0 : i32, i32
  }
  func.func @transform_3(%arg0: i32) -> (i32, i32) {
    %c0_i32 = arith.constant 0 : i32
    %c0_i32_0 = arith.constant 0 : i32
    return %arg0, %c0_i32 : i32, i32
  }
}

module attributes {stable_mosaic.version = 11 : i64} {
  func.func @_conv_kernel(%arg0: i32, %arg1: memref<8x256xbf16, #tpu.memory_space<vmem>>, %arg2: memref<256x128xbf16, #tpu.memory_space<vmem>>, %arg3: memref<1x128xf32, #tpu.memory_space<vmem>>, %arg4: memref<8x128xbf16, #tpu.memory_space<vmem>>) attributes {dimension_semantics = [#tpu.dimension_semantics<parallel>], iteration_bounds = array<i64: 1>, scalar_prefetch = 0 : i64, scratch_operands = 0 : i64, tpu.core_type = #tpu.core_type<tc>, window_params = [{transform_indices = @transform_0, window_bounds = array<i64: 8, 256>}, {pipeline_mode = #tpu.pipeline_mode<synchronous>, transform_indices = @transform_1, window_bounds = array<i64: 256, 128>}, {pipeline_mode = #tpu.pipeline_mode<synchronous>, transform_indices = @transform_2, window_bounds = array<i64: 1, 128>}, {transform_indices = @transform_3, window_bounds = array<i64: 8, 128>}]} {
    %c0 = arith.constant 0 : index
    %c0_0 = arith.constant 0 : index
    %0 = vector.load %arg1[%c0, %c0_0] : memref<8x256xbf16, #tpu.memory_space<vmem>>, vector<8x256xbf16>
    %c0_1 = arith.constant 0 : index
    %c0_2 = arith.constant 0 : index
    %1 = vector.load %arg2[%c0_1, %c0_2] : memref<256x128xbf16, #tpu.memory_space<vmem>>, vector<256x128xbf16>
    %cst = arith.constant dense<0.000000e+00> : vector<8x128xf32>
    %2 = tpu.matmul %0, %1, %cst {dimension_numbers = #tpu.dot_dimension_numbers<[1], [0], [0], [1], [0, 0, 1, 1], [], []>} : vector<8x256xbf16>, vector<256x128xbf16>, vector<8x128xf32> -> vector<8x128xf32>
    %c0_3 = arith.constant 0 : index
    %c0_4 = arith.constant 0 : index
    %3 = vector.load %arg3[%c0_3, %c0_4] : memref<1x128xf32, #tpu.memory_space<vmem>>, vector<1x128xf32>
    %4 = vector.broadcast %3 : vector<1x128xf32> to vector<8x128xf32>
    %5 = arith.addf %2, %4 : vector<8x128xf32>
    %cst_5 = arith.constant 0.000000e+00 : f32
    %6 = vector.broadcast %cst_5 : f32 to vector<8x128xf32>
    %7 = arith.maximumf %5, %6 : vector<8x128xf32>
    %8 = arith.truncf %7 : vector<8x128xf32> to vector<8x128xbf16>
    %c0_6 = arith.constant 0 : index
    %c0_7 = arith.constant 0 : index
    %9 = vector.load %arg4[%c0_6, %c0_7] : memref<8x128xbf16, #tpu.memory_space<vmem>>, vector<8x128xbf16>
    tpu.vector_store %arg4[%c0_6, %c0_7], %8 {strides = array<i32>} : memref<8x128xbf16, #tpu.memory_space<vmem>>, vector<8x128xbf16>,
    return
  }
  func.func @transform_0(%arg0: i32) -> (i32, i32) {
    %c0_i32 = arith.constant 0 : i32
    %c0_i32_0 = arith.constant 0 : i32
    return %arg0, %c0_i32 : i32, i32
  }
  func.func @transform_1(%arg0: i32) -> (i32, i32) {
    %c0_i32 = arith.constant 0 : i32
    %c0_i32_0 = arith.constant 0 : i32
    %c0_i32_1 = arith.constant 0 : i32
    return %c0_i32, %c0_i32_0 : i32, i32
  }
  func.func @transform_2(%arg0: i32) -> (i32, i32) {
    %c0_i32 = arith.constant 0 : i32
    %c0_i32_0 = arith.constant 0 : i32
    %c0_i32_1 = arith.constant 0 : i32
    return %c0_i32, %c0_i32_0 : i32, i32
  }
  func.func @transform_3(%arg0: i32) -> (i32, i32) {
    %c0_i32 = arith.constant 0 : i32
    %c0_i32_0 = arith.constant 0 : i32
    return %arg0, %c0_i32 : i32, i32
  }
}

module attributes {stable_mosaic.version = 11 : i64} {
  func.func @_conv_kernel(%arg0: i32, %arg1: memref<8x128xbf16, #tpu.memory_space<vmem>>, %arg2: memref<128x128xbf16, #tpu.memory_space<vmem>>, %arg3: memref<1x128xf32, #tpu.memory_space<vmem>>, %arg4: memref<8x128xbf16, #tpu.memory_space<vmem>>) attributes {dimension_semantics = [#tpu.dimension_semantics<parallel>], iteration_bounds = array<i64: 1>, scalar_prefetch = 0 : i64, scratch_operands = 0 : i64, tpu.core_type = #tpu.core_type<tc>, window_params = [{transform_indices = @transform_0, window_bounds = array<i64: 8, 128>}, {pipeline_mode = #tpu.pipeline_mode<synchronous>, transform_indices = @transform_1, window_bounds = array<i64: 128, 128>}, {pipeline_mode = #tpu.pipeline_mode<synchronous>, transform_indices = @transform_2, window_bounds = array<i64: 1, 128>}, {transform_indices = @transform_3, window_bounds = array<i64: 8, 128>}]} {
    %c0 = arith.constant 0 : index
    %c0_0 = arith.constant 0 : index
    %0 = vector.load %arg1[%c0, %c0_0] : memref<8x128xbf16, #tpu.memory_space<vmem>>, vector<8x128xbf16>
    %c0_1 = arith.constant 0 : index
    %c0_2 = arith.constant 0 : index
    %1 = vector.load %arg2[%c0_1, %c0_2] : memref<128x128xbf16, #tpu.memory_space<vmem>>, vector<128x128xbf16>
    %cst = arith.constant dense<0.000000e+00> : vector<8x128xf32>
    %2 = tpu.matmul %0, %1, %cst {dimension_numbers = #tpu.dot_dimension_numbers<[1], [0], [0], [1], [0, 0, 1, 1], [], []>} : vector<8x128xbf16>, vector<128x128xbf16>, vector<8x128xf32> -> vector<8x128xf32>
    %c0_3 = arith.constant 0 : index
    %c0_4 = arith.constant 0 : index
    %3 = vector.load %arg3[%c0_3, %c0_4] : memref<1x128xf32, #tpu.memory_space<vmem>>, vector<1x128xf32>
    %4 = vector.broadcast %3 : vector<1x128xf32> to vector<8x128xf32>
    %5 = arith.addf %2, %4 : vector<8x128xf32>
    %6 = arith.truncf %5 : vector<8x128xf32> to vector<8x128xbf16>
    %c0_5 = arith.constant 0 : index
    %c0_6 = arith.constant 0 : index
    %7 = vector.load %arg4[%c0_5, %c0_6] : memref<8x128xbf16, #tpu.memory_space<vmem>>, vector<8x128xbf16>
    tpu.vector_store %arg4[%c0_5, %c0_6], %6 {strides = array<i32>} : memref<8x128xbf16, #tpu.memory_space<vmem>>, vector<8x128xbf16>,
    return
  }
  func.func @transform_0(%arg0: i32) -> (i32, i32) {
    %c0_i32 = arith.constant 0 : i32
    %c0_i32_0 = arith.constant 0 : i32
    return %arg0, %c0_i32 : i32, i32
  }
  func.func @transform_1(%arg0: i32) -> (i32, i32) {
    %c0_i32 = arith.constant 0 : i32
    %c0_i32_0 = arith.constant 0 : i32
    %c0_i32_1 = arith.constant 0 : i32
    return %c0_i32, %c0_i32_0 : i32, i32
  }
  func.func @transform_2(%arg0: i32) -> (i32, i32) {
    %c0_i32 = arith.constant 0 : i32
    %c0_i32_0 = arith.constant 0 : i32
    %c0_i32_1 = arith.constant 0 : i32
    return %c0_i32, %c0_i32_0 : i32, i32
  }
  func.func @transform_3(%arg0: i32) -> (i32, i32) {
    %c0_i32 = arith.constant 0 : i32
    %c0_i32_0 = arith.constant 0 : i32
    return %arg0, %c0_i32 : i32, i32
  }
}

module attributes {stable_mosaic.version = 11 : i64} {
  func.func @_conv_kernel(%arg0: i32, %arg1: memref<8x384xbf16, #tpu.memory_space<vmem>>, %arg2: memref<384x128xbf16, #tpu.memory_space<vmem>>, %arg3: memref<1x128xf32, #tpu.memory_space<vmem>>, %arg4: memref<8x128xbf16, #tpu.memory_space<vmem>>) attributes {dimension_semantics = [#tpu.dimension_semantics<parallel>], iteration_bounds = array<i64: 1>, scalar_prefetch = 0 : i64, scratch_operands = 0 : i64, tpu.core_type = #tpu.core_type<tc>, window_params = [{transform_indices = @transform_0, window_bounds = array<i64: 8, 384>}, {pipeline_mode = #tpu.pipeline_mode<synchronous>, transform_indices = @transform_1, window_bounds = array<i64: 384, 128>}, {pipeline_mode = #tpu.pipeline_mode<synchronous>, transform_indices = @transform_2, window_bounds = array<i64: 1, 128>}, {transform_indices = @transform_3, window_bounds = array<i64: 8, 128>}]} {
    %c0 = arith.constant 0 : index
    %c0_0 = arith.constant 0 : index
    %0 = vector.load %arg1[%c0, %c0_0] : memref<8x384xbf16, #tpu.memory_space<vmem>>, vector<8x384xbf16>
    %c0_1 = arith.constant 0 : index
    %c0_2 = arith.constant 0 : index
    %1 = vector.load %arg2[%c0_1, %c0_2] : memref<384x128xbf16, #tpu.memory_space<vmem>>, vector<384x128xbf16>
    %cst = arith.constant dense<0.000000e+00> : vector<8x128xf32>
    %2 = tpu.matmul %0, %1, %cst {dimension_numbers = #tpu.dot_dimension_numbers<[1], [0], [0], [1], [0, 0, 1, 1], [], []>} : vector<8x384xbf16>, vector<384x128xbf16>, vector<8x128xf32> -> vector<8x128xf32>
    %c0_3 = arith.constant 0 : index
    %c0_4 = arith.constant 0 : index
    %3 = vector.load %arg3[%c0_3, %c0_4] : memref<1x128xf32, #tpu.memory_space<vmem>>, vector<1x128xf32>
    %4 = vector.broadcast %3 : vector<1x128xf32> to vector<8x128xf32>
    %5 = arith.addf %2, %4 : vector<8x128xf32>
    %cst_5 = arith.constant 0.000000e+00 : f32
    %6 = vector.broadcast %cst_5 : f32 to vector<8x128xf32>
    %7 = arith.maximumf %5, %6 : vector<8x128xf32>
    %8 = arith.truncf %7 : vector<8x128xf32> to vector<8x128xbf16>
    %c0_6 = arith.constant 0 : index
    %c0_7 = arith.constant 0 : index
    %9 = vector.load %arg4[%c0_6, %c0_7] : memref<8x128xbf16, #tpu.memory_space<vmem>>, vector<8x128xbf16>
    tpu.vector_store %arg4[%c0_6, %c0_7], %8 {strides = array<i32>} : memref<8x128xbf16, #tpu.memory_space<vmem>>, vector<8x128xbf16>,
    return
  }
  func.func @transform_0(%arg0: i32) -> (i32, i32) {
    %c0_i32 = arith.constant 0 : i32
    %c0_i32_0 = arith.constant 0 : i32
    return %arg0, %c0_i32 : i32, i32
  }
  func.func @transform_1(%arg0: i32) -> (i32, i32) {
    %c0_i32 = arith.constant 0 : i32
    %c0_i32_0 = arith.constant 0 : i32
    %c0_i32_1 = arith.constant 0 : i32
    return %c0_i32, %c0_i32_0 : i32, i32
  }
  func.func @transform_2(%arg0: i32) -> (i32, i32) {
    %c0_i32 = arith.constant 0 : i32
    %c0_i32_0 = arith.constant 0 : i32
    %c0_i32_1 = arith.constant 0 : i32
    return %c0_i32, %c0_i32_0 : i32, i32
  }
  func.func @transform_3(%arg0: i32) -> (i32, i32) {
    %c0_i32 = arith.constant 0 : i32
    %c0_i32_0 = arith.constant 0 : i32
    return %arg0, %c0_i32 : i32, i32
  }
}

module attributes {stable_mosaic.version = 11 : i64} {
  func.func @_conv_res_kernel(%arg0: i32, %arg1: memref<8x384xbf16, #tpu.memory_space<vmem>>, %arg2: memref<384x128xbf16, #tpu.memory_space<vmem>>, %arg3: memref<1x128xf32, #tpu.memory_space<vmem>>, %arg4: memref<8x128xbf16, #tpu.memory_space<vmem>>, %arg5: memref<8x128xbf16, #tpu.memory_space<vmem>>) attributes {dimension_semantics = [#tpu.dimension_semantics<parallel>], iteration_bounds = array<i64: 1>, scalar_prefetch = 0 : i64, scratch_operands = 0 : i64, tpu.core_type = #tpu.core_type<tc>, window_params = [{transform_indices = @transform_0, window_bounds = array<i64: 8, 384>}, {pipeline_mode = #tpu.pipeline_mode<synchronous>, transform_indices = @transform_1, window_bounds = array<i64: 384, 128>}, {pipeline_mode = #tpu.pipeline_mode<synchronous>, transform_indices = @transform_2, window_bounds = array<i64: 1, 128>}, {transform_indices = @transform_3, window_bounds = array<i64: 8, 128>}, {transform_indices = @transform_4, window_bounds = array<i64: 8, 128>}]} {
    %c0 = arith.constant 0 : index
    %c0_0 = arith.constant 0 : index
    %0 = vector.load %arg1[%c0, %c0_0] : memref<8x384xbf16, #tpu.memory_space<vmem>>, vector<8x384xbf16>
    %c0_1 = arith.constant 0 : index
    %c0_2 = arith.constant 0 : index
    %1 = vector.load %arg2[%c0_1, %c0_2] : memref<384x128xbf16, #tpu.memory_space<vmem>>, vector<384x128xbf16>
    %cst = arith.constant dense<0.000000e+00> : vector<8x128xf32>
    %2 = tpu.matmul %0, %1, %cst {dimension_numbers = #tpu.dot_dimension_numbers<[1], [0], [0], [1], [0, 0, 1, 1], [], []>} : vector<8x384xbf16>, vector<384x128xbf16>, vector<8x128xf32> -> vector<8x128xf32>
    %c0_3 = arith.constant 0 : index
    %c0_4 = arith.constant 0 : index
    %3 = vector.load %arg3[%c0_3, %c0_4] : memref<1x128xf32, #tpu.memory_space<vmem>>, vector<1x128xf32>
    %4 = vector.broadcast %3 : vector<1x128xf32> to vector<8x128xf32>
    %5 = arith.addf %2, %4 : vector<8x128xf32>
    %c0_5 = arith.constant 0 : index
    %c0_6 = arith.constant 0 : index
    %6 = vector.load %arg4[%c0_5, %c0_6] : memref<8x128xbf16, #tpu.memory_space<vmem>>, vector<8x128xbf16>
    %7 = arith.extf %6 : vector<8x128xbf16> to vector<8x128xf32>
    %8 = arith.addf %5, %7 : vector<8x128xf32>
    %cst_7 = arith.constant 0.000000e+00 : f32
    %9 = vector.broadcast %cst_7 : f32 to vector<8x128xf32>
    %10 = arith.maximumf %8, %9 : vector<8x128xf32>
    %11 = arith.truncf %10 : vector<8x128xf32> to vector<8x128xbf16>
    %c0_8 = arith.constant 0 : index
    %c0_9 = arith.constant 0 : index
    %12 = vector.load %arg5[%c0_8, %c0_9] : memref<8x128xbf16, #tpu.memory_space<vmem>>, vector<8x128xbf16>
    tpu.vector_store %arg5[%c0_8, %c0_9], %11 {strides = array<i32>} : memref<8x128xbf16, #tpu.memory_space<vmem>>, vector<8x128xbf16>,
    return
  }
  func.func @transform_0(%arg0: i32) -> (i32, i32) {
    %c0_i32 = arith.constant 0 : i32
    %c0_i32_0 = arith.constant 0 : i32
    return %arg0, %c0_i32 : i32, i32
  }
  func.func @transform_1(%arg0: i32) -> (i32, i32) {
    %c0_i32 = arith.constant 0 : i32
    %c0_i32_0 = arith.constant 0 : i32
    %c0_i32_1 = arith.constant 0 : i32
    return %c0_i32, %c0_i32_0 : i32, i32
  }
  func.func @transform_2(%arg0: i32) -> (i32, i32) {
    %c0_i32 = arith.constant 0 : i32
    %c0_i32_0 = arith.constant 0 : i32
    %c0_i32_1 = arith.constant 0 : i32
    return %c0_i32, %c0_i32_0 : i32, i32
  }
  func.func @transform_3(%arg0: i32) -> (i32, i32) {
    %c0_i32 = arith.constant 0 : i32
    %c0_i32_0 = arith.constant 0 : i32
    return %arg0, %c0_i32 : i32, i32
  }
  func.func @transform_4(%arg0: i32) -> (i32, i32) {
    %c0_i32 = arith.constant 0 : i32
    %c0_i32_0 = arith.constant 0 : i32
    return %arg0, %c0_i32 : i32, i32
  }
}

module attributes {stable_mosaic.version = 11 : i64} {
  func.func @_conv_res_kernel(%arg0: i32, %arg1: memref<8x640xbf16, #tpu.memory_space<vmem>>, %arg2: memref<640x128xbf16, #tpu.memory_space<vmem>>, %arg3: memref<1x128xf32, #tpu.memory_space<vmem>>, %arg4: memref<8x128xbf16, #tpu.memory_space<vmem>>, %arg5: memref<8x128xbf16, #tpu.memory_space<vmem>>) attributes {dimension_semantics = [#tpu.dimension_semantics<parallel>], iteration_bounds = array<i64: 1>, scalar_prefetch = 0 : i64, scratch_operands = 0 : i64, tpu.core_type = #tpu.core_type<tc>, window_params = [{transform_indices = @transform_0, window_bounds = array<i64: 8, 640>}, {pipeline_mode = #tpu.pipeline_mode<synchronous>, transform_indices = @transform_1, window_bounds = array<i64: 640, 128>}, {pipeline_mode = #tpu.pipeline_mode<synchronous>, transform_indices = @transform_2, window_bounds = array<i64: 1, 128>}, {transform_indices = @transform_3, window_bounds = array<i64: 8, 128>}, {transform_indices = @transform_4, window_bounds = array<i64: 8, 128>}]} {
    %c0 = arith.constant 0 : index
    %c0_0 = arith.constant 0 : index
    %0 = vector.load %arg1[%c0, %c0_0] : memref<8x640xbf16, #tpu.memory_space<vmem>>, vector<8x640xbf16>
    %c0_1 = arith.constant 0 : index
    %c0_2 = arith.constant 0 : index
    %1 = vector.load %arg2[%c0_1, %c0_2] : memref<640x128xbf16, #tpu.memory_space<vmem>>, vector<640x128xbf16>
    %cst = arith.constant dense<0.000000e+00> : vector<8x128xf32>
    %2 = tpu.matmul %0, %1, %cst {dimension_numbers = #tpu.dot_dimension_numbers<[1], [0], [0], [1], [0, 0, 1, 1], [], []>} : vector<8x640xbf16>, vector<640x128xbf16>, vector<8x128xf32> -> vector<8x128xf32>
    %c0_3 = arith.constant 0 : index
    %c0_4 = arith.constant 0 : index
    %3 = vector.load %arg3[%c0_3, %c0_4] : memref<1x128xf32, #tpu.memory_space<vmem>>, vector<1x128xf32>
    %4 = vector.broadcast %3 : vector<1x128xf32> to vector<8x128xf32>
    %5 = arith.addf %2, %4 : vector<8x128xf32>
    %c0_5 = arith.constant 0 : index
    %c0_6 = arith.constant 0 : index
    %6 = vector.load %arg4[%c0_5, %c0_6] : memref<8x128xbf16, #tpu.memory_space<vmem>>, vector<8x128xbf16>
    %7 = arith.extf %6 : vector<8x128xbf16> to vector<8x128xf32>
    %8 = arith.addf %5, %7 : vector<8x128xf32>
    %cst_7 = arith.constant 0.000000e+00 : f32
    %9 = vector.broadcast %cst_7 : f32 to vector<8x128xf32>
    %10 = arith.maximumf %8, %9 : vector<8x128xf32>
    %11 = arith.truncf %10 : vector<8x128xf32> to vector<8x128xbf16>
    %c0_8 = arith.constant 0 : index
    %c0_9 = arith.constant 0 : index
    %12 = vector.load %arg5[%c0_8, %c0_9] : memref<8x128xbf16, #tpu.memory_space<vmem>>, vector<8x128xbf16>
    tpu.vector_store %arg5[%c0_8, %c0_9], %11 {strides = array<i32>} : memref<8x128xbf16, #tpu.memory_space<vmem>>, vector<8x128xbf16>,
    return
  }
  func.func @transform_0(%arg0: i32) -> (i32, i32) {
    %c0_i32 = arith.constant 0 : i32
    %c0_i32_0 = arith.constant 0 : i32
    return %arg0, %c0_i32 : i32, i32
  }
  func.func @transform_1(%arg0: i32) -> (i32, i32) {
    %c0_i32 = arith.constant 0 : i32
    %c0_i32_0 = arith.constant 0 : i32
    %c0_i32_1 = arith.constant 0 : i32
    return %c0_i32, %c0_i32_0 : i32, i32
  }
  func.func @transform_2(%arg0: i32) -> (i32, i32) {
    %c0_i32 = arith.constant 0 : i32
    %c0_i32_0 = arith.constant 0 : i32
    %c0_i32_1 = arith.constant 0 : i32
    return %c0_i32, %c0_i32_0 : i32, i32
  }
  func.func @transform_3(%arg0: i32) -> (i32, i32) {
    %c0_i32 = arith.constant 0 : i32
    %c0_i32_0 = arith.constant 0 : i32
    return %arg0, %c0_i32 : i32, i32
  }
  func.func @transform_4(%arg0: i32) -> (i32, i32) {
    %c0_i32 = arith.constant 0 : i32
    %c0_i32_0 = arith.constant 0 : i32
    return %arg0, %c0_i32 : i32, i32
  }
}

module attributes {stable_mosaic.version = 11 : i64} {
  func.func @_global_avgpool_kernel(%arg0: memref<2x1x128xbf16, #tpu.memory_space<vmem>>, %arg1: memref<2x128xf32, #tpu.memory_space<vmem>>) attributes {dimension_semantics = [], scalar_prefetch = 0 : i64, scratch_operands = 0 : i64, tpu.core_type = #tpu.core_type<tc>} {
    %c0 = arith.constant 0 : index
    %c0_0 = arith.constant 0 : index
    %c0_1 = arith.constant 0 : index
    %0 = vector.load %arg0[%c0, %c0_0, %c0_1] : memref<2x1x128xbf16, #tpu.memory_space<vmem>>, vector<2x1x128xbf16>
    %1 = arith.extf %0 : vector<2x1x128xbf16> to vector<2x1x128xf32>
    %cst = arith.constant dense<0.000000e+00> : vector<2x128xf32>
    %2 = vector.multi_reduction <add>, %1, %cst [1] : vector<2x1x128xf32> to vector<2x128xf32>
    %cst_2 = arith.constant 1.000000e+00 : f32
    %3 = vector.broadcast %cst_2 : f32 to vector<2x128xf32>
    %4 = arith.divf %2, %3 : vector<2x128xf32>
    %c0_3 = arith.constant 0 : index
    %c0_4 = arith.constant 0 : index
    %5 = vector.load %arg1[%c0_3, %c0_4] : memref<2x128xf32, #tpu.memory_space<vmem>>, vector<2x128xf32>
    tpu.vector_store %arg1[%c0_3, %c0_4], %4 {strides = array<i32>} : memref<2x128xf32, #tpu.memory_space<vmem>>, vector<2x128xf32>,
    return
  }
}

module attributes {stable_mosaic.version = 11 : i64} {
  func.func @_conv_kernel(%arg0: i32, %arg1: memref<8x640xbf16, #tpu.memory_space<vmem>>, %arg2: memref<640x128xbf16, #tpu.memory_space<vmem>>, %arg3: memref<1x128xf32, #tpu.memory_space<vmem>>, %arg4: memref<8x128xbf16, #tpu.memory_space<vmem>>) attributes {dimension_semantics = [#tpu.dimension_semantics<parallel>], iteration_bounds = array<i64: 1>, scalar_prefetch = 0 : i64, scratch_operands = 0 : i64, tpu.core_type = #tpu.core_type<tc>, window_params = [{transform_indices = @transform_0, window_bounds = array<i64: 8, 640>}, {pipeline_mode = #tpu.pipeline_mode<synchronous>, transform_indices = @transform_1, window_bounds = array<i64: 640, 128>}, {pipeline_mode = #tpu.pipeline_mode<synchronous>, transform_indices = @transform_2, window_bounds = array<i64: 1, 128>}, {transform_indices = @transform_3, window_bounds = array<i64: 8, 128>}]} {
    %c0 = arith.constant 0 : index
    %c0_0 = arith.constant 0 : index
    %0 = vector.load %arg1[%c0, %c0_0] : memref<8x640xbf16, #tpu.memory_space<vmem>>, vector<8x640xbf16>
    %c0_1 = arith.constant 0 : index
    %c0_2 = arith.constant 0 : index
    %1 = vector.load %arg2[%c0_1, %c0_2] : memref<640x128xbf16, #tpu.memory_space<vmem>>, vector<640x128xbf16>
    %cst = arith.constant dense<0.000000e+00> : vector<8x128xf32>
    %2 = tpu.matmul %0, %1, %cst {dimension_numbers = #tpu.dot_dimension_numbers<[1], [0], [0], [1], [0, 0, 1, 1], [], []>} : vector<8x640xbf16>, vector<640x128xbf16>, vector<8x128xf32> -> vector<8x128xf32>
    %c0_3 = arith.constant 0 : index
    %c0_4 = arith.constant 0 : index
    %3 = vector.load %arg3[%c0_3, %c0_4] : memref<1x128xf32, #tpu.memory_space<vmem>>, vector<1x128xf32>
    %4 = vector.broadcast %3 : vector<1x128xf32> to vector<8x128xf32>
    %5 = arith.addf %2, %4 : vector<8x128xf32>
    %cst_5 = arith.constant 0.000000e+00 : f32
    %6 = vector.broadcast %cst_5 : f32 to vector<8x128xf32>
    %7 = arith.maximumf %5, %6 : vector<8x128xf32>
    %8 = arith.truncf %7 : vector<8x128xf32> to vector<8x128xbf16>
    %c0_6 = arith.constant 0 : index
    %c0_7 = arith.constant 0 : index
    %9 = vector.load %arg4[%c0_6, %c0_7] : memref<8x128xbf16, #tpu.memory_space<vmem>>, vector<8x128xbf16>
    tpu.vector_store %arg4[%c0_6, %c0_7], %8 {strides = array<i32>} : memref<8x128xbf16, #tpu.memory_space<vmem>>, vector<8x128xbf16>,
    return
  }
  func.func @transform_0(%arg0: i32) -> (i32, i32) {
    %c0_i32 = arith.constant 0 : i32
    %c0_i32_0 = arith.constant 0 : i32
    return %arg0, %c0_i32 : i32, i32
  }
  func.func @transform_1(%arg0: i32) -> (i32, i32) {
    %c0_i32 = arith.constant 0 : i32
    %c0_i32_0 = arith.constant 0 : i32
    %c0_i32_1 = arith.constant 0 : i32
    return %c0_i32, %c0_i32_0 : i32, i32
  }
  func.func @transform_2(%arg0: i32) -> (i32, i32) {
    %c0_i32 = arith.constant 0 : i32
    %c0_i32_0 = arith.constant 0 : i32
    %c0_i32_1 = arith.constant 0 : i32
    return %c0_i32, %c0_i32_0 : i32, i32
  }
  func.func @transform_3(%arg0: i32) -> (i32, i32) {
    %c0_i32 = arith.constant 0 : i32
    %c0_i32_0 = arith.constant 0 : i32
    return %arg0, %c0_i32 : i32, i32
  }
}

</mosaic_0001>

<llo_original>
// kernel: resnet_features_pool.22
$region0: #{resnet_features_pool.22}
  #allocation0 [shape = 'u32[]', space=smem, size = 0x4, offset = 0x4, fixed_abs, tag = 'smem constant byte address 0x4 - core index']
  #allocation1 [shape = 'u32[72,128]{1,0:T(1,128)}', space=vmem, size = 0x9000, scoped, tag = 'internal scratch']
  %s0 = inlined_call_operand.vmem [shape: bf16[512,256], index: 0, kind: input, shape index: {}]
  %s1 = inlined_call_operand.vmem [shape: bf16[256,128], index: 1, kind: input, shape index: {}]
  %s2 = inlined_call_operand.vmem [shape: f32[1,128], index: 2, kind: input, shape index: {}]
  %s3 = inlined_call_operand.vmem [shape: bf16[512,128], index: 3, kind: output, shape index: {}]
  %s4 = sld [smem:[#allocation0]]
  $region45: #{resnet_features_pool.22} parent=0
    _
  %s6 = ssub.s32 1, %s4
  %s7 = scalar_select 0, %s6, %s4
  loop: start=0, step=1, limit=4
  $region2: #{resnet_features_pool.22} parent=0 // loop_pre_header
    _
  $region3: #{resnet_features_pool.22} parent=0 // loop_header
    %s9 = sphi 0, %s13
    %p10 = scmp.ge.s32.totalorder %s9, 4
    %s19 = sphi 0, %s21
    %s22 = sphi 0, %s19
    %s23 = sphi 0, %s22
    %s39 = sphi 0, %s23
    %s43 = sphi 0, %s43
    %s45 = sphi 0, %s43
    %s46 = sphi 0, %s45
    %s60 = sphi 0, %s46
    %s64 = sphi 0, %s64
    %s66 = sphi 0, %s64
    %s67 = sphi 0, %s66
    %s81 = sphi 0, %s67
    %s87 = sphi 0, %s89
    %s90 = sphi 0, %s87
    %s91 = sphi 0, %s90
    %s107 = sphi 0, %s91
  $region4: #{resnet_features_pool.22} parent=0 // loop_header_branch
    %12 = sbr.rel (%p10) target = $region8
  $region5: #{resnet_features_pool.22} parent=0 // loop_body
    %s14 = ssub.s32 %s9, 1
    %s15 = ssub.s32 %s9, 2
    %s16 = sadd.s32 %s9, 1
    %s17 = ssub.s32 %s9, %s16
    %p18 = scmp.eq.s32.totalorder %s17, 0
    %s20 = sadd.s32 %s19, 1
    %s21 = scalar_select %p18, %s19, %s20
    %p24 = pneg %p18
    %p25 = scmp.eq.s32.totalorder %s9, 1
    %p26 = por %p24, %p25
    %p27 = scmp.ne.s32.totalorder %s19, %s22
    %p28 = scmp.eq.s32.totalorder %s9, 0
    %p29 = por %p27, %p28
    %p30 = scmp.ne.s32.totalorder %s19, %s22
    %p31 = scmp.eq.s32.totalorder %s14, 1
    %p32 = por %p30, %p31
    %p33 = scmp.ne.s32.totalorder %s22, %s23
    %p34 = scmp.eq.s32.totalorder %s14, 0
    %p35 = por %p33, %p34
    %p36 = scmp.ne.s32.totalorder %s22, %s23
    %p37 = scmp.eq.s32.totalorder %s15, 1
    %p38 = por %p36, %p37
    %p40 = scmp.ne.s32.totalorder %s23, %s39
    %p41 = scmp.eq.s32.totalorder %s15, 0
    %p42 = por %p40, %p41
    %s44 = sadd.s32 %s43, 1
    %p47 = scmp.eq.s32.totalorder %s9, 1
    %p48 = scmp.ne.s32.totalorder %s43, %s45
    %p49 = scmp.eq.s32.totalorder %s9, 0
    %p50 = por %p48, %p49
    %p51 = scmp.ne.s32.totalorder %s43, %s45
    %p52 = scmp.eq.s32.totalorder %s14, 1
    %p53 = por %p51, %p52
    %p54 = scmp.ne.s32.totalorder %s45, %s46
    %p55 = scmp.eq.s32.totalorder %s14, 0
    %p56 = por %p54, %p55
    %p57 = scmp.ne.s32.totalorder %s45, %s46
    %p58 = scmp.eq.s32.totalorder %s15, 1
    %p59 = por %p57, %p58
    %p61 = scmp.ne.s32.totalorder %s46, %s60
    %p62 = scmp.eq.s32.totalorder %s15, 0
    %p63 = por %p61, %p62
    %s65 = sadd.s32 %s64, 1
    %p68 = scmp.eq.s32.totalorder %s9, 1
    %p69 = scmp.ne.s32.totalorder %s64, %s66
    %p70 = scmp.eq.s32.totalorder %s9, 0
    %p71 = por %p69, %p70
    %p72 = scmp.ne.s32.totalorder %s64, %s66
    %p73 = scmp.eq.s32.totalorder %s14, 1
    %p74 = por %p72, %p73
    %p75 = scmp.ne.s32.totalorder %s66, %s67
    %p76 = scmp.eq.s32.totalorder %s14, 0
    %p77 = por %p75, %p76
    %p78 = scmp.ne.s32.totalorder %s66, %s67
    %p79 = scmp.eq.s32.totalorder %s15, 1
    %p80 = por %p78, %p79
    %p82 = scmp.ne.s32.totalorder %s67, %s81
    %p83 = scmp.eq.s32.totalorder %s15, 0
    %p84 = por %p82, %p83
    %s85 = ssub.s32 %s9, %s16
    %p86 = scmp.eq.s32.totalorder %s85, 0
    %s88 = sadd.s32 %s87, 1
    %s89 = scalar_select %p86, %s87, %s88
    %p92 = pneg %p86
    %p93 = scmp.eq.s32.totalorder %s9, 1
    %p94 = por %p92, %p93
    %p95 = scmp.ne.s32.totalorder %s87, %s90
    %p96 = scmp.eq.s32.totalorder %s9, 0
    %p97 = por %p95, %p96
    %p98 = scmp.ne.s32.totalorder %s87, %s90
    %p99 = scmp.eq.s32.totalorder %s14, 1
    %p100 = por %p98, %p99
    %p101 = scmp.ne.s32.totalorder %s90, %s91
    %p102 = scmp.eq.s32.totalorder %s14, 0
    %p103 = por %p101, %p102
    %p104 = scmp.ne.s32.totalorder %s90, %s91
    %p105 = scmp.eq.s32.totalorder %s15, 1
    %p106 = por %p104, %p105
    %p108 = scmp.ne.s32.totalorder %s91, %s107
    %p109 = scmp.eq.s32.totalorder %s15, 0
    %p110 = por %p108, %p109
    %p111 = scmp.le.s32.totalorder 1, %s9
    %p112 = scmp.lt.s32.totalorder %s9, 3
    %p113 = pnand %p111, %p112
    %p114 = pneg %p113
    // Predicated region
    $region9: #{resnet_features_pool.22} parent=5 // pred_check
      _
    $region10: #{resnet_features_pool.22} parent=5 // pred_check_branch
      %116 = sbr.rel (%p113) target = $region12
    $region11: #{resnet_features_pool.22} parent=5 // pred_region
      %s117 = ssub.s32 %s9, 1
      // Predicated region
      $region13: #{resnet_features_pool.22} parent=11 // pred_check
        %p118 = pneg %p56
      $region14: #{resnet_features_pool.22} parent=11 // pred_check_branch
        %120 = sbr.rel (%p118) target = $region16
      $region15: #{resnet_features_pool.22} parent=11 // pred_region
        _
      $region16: #{resnet_features_pool.22} parent=11 // pred_fallthru
        _
      // Predicated region
      $region17: #{resnet_features_pool.22} parent=11 // pred_check
        %p121 = pneg %p77
      $region18: #{resnet_features_pool.22} parent=11 // pred_check_branch
        %123 = sbr.rel (%p121) target = $region20
      $region19: #{resnet_features_pool.22} parent=11 // pred_region
        _
      $region20: #{resnet_features_pool.22} parent=11 // pred_fallthru
        _
    $region12: #{resnet_features_pool.22} parent=5 // pred_fallthru
      _
    %p124 = scmp.lt.s32.totalorder %s9, 2
    // Predicated region
    $region21: #{resnet_features_pool.22} parent=5 // pred_check
      %p125 = pneg %p124
    $region22: #{resnet_features_pool.22} parent=5 // pred_check_branch
      %127 = sbr.rel (%p125) target = $region24
    $region23: #{resnet_features_pool.22} parent=5 // pred_region
      // Predicated region
      $region25: #{resnet_features_pool.22} parent=23 // pred_check
        %p128 = pneg %p29
      $region26: #{resnet_features_pool.22} parent=23 // pred_check_branch
        %130 = sbr.rel (%p128) target = $region28
      $region27: #{resnet_features_pool.22} parent=23 // pred_region
        %s131 = smul.u32 32, %s9
        %p132 = scmp.lt.s32.totalorder %s131, 63
        %s133 = scalar_select %p132, %s131, 63
        %s134 = smul.addr %s133, 2
        %s135 = smul.addr %s134, 4
        %s136 = scalar_lea.vmem %s0, %s135
        %s137 = smul.u32 32, %s9
      $region28: #{resnet_features_pool.22} parent=23 // pred_fallthru
        _
    $region24: #{resnet_features_pool.22} parent=5 // pred_fallthru
      _
    %p138 = scmp.le.s32.totalorder 1, %s9
    %p139 = scmp.lt.s32.totalorder %s9, 3
    %p140 = pnand %p138, %p139
    %p141 = pneg %p140
    // Predicated region
    $region29: #{resnet_features_pool.22} parent=5 // pred_check
      _
    $region30: #{resnet_features_pool.22} parent=5 // pred_check_branch
      %143 = sbr.rel (%p140) target = $region32
    $region31: #{resnet_features_pool.22} parent=5 // pred_region
      %s144 = ssub.s32 %s9, 1
      %s145 = smul.u32 32, %s14
      %p146 = scmp.lt.s32.totalorder %s145, 63
      %s147 = scalar_select %p146, %s145, 63
      %s148 = smul.addr %s147, 2
      %s149 = smul.addr %s148, 4
      %s150 = scalar_lea.vmem %s0, %s149
      %p151 = pneg %p35
      %p152 = pneg %p32
      %p153 = pneg %p56
      %p154 = pneg %p53
      %p155 = pneg %p77
      %p156 = pneg %p74
      %p157 = pneg %p103
      %p158 = pneg %p100
      %s159 = smul.u32 32, %s14
      %p160 = scmp.lt.s32.totalorder %s159, 63
      %s161 = scalar_select %p160, %s159, 63
      %s162 = smul.addr %s161, 4
      %s163 = scalar_lea.vmem %s3, %s162
      %s164 = smul.u32 32, %s14
      %p165 = scmp.lt.s32.totalorder %s164, 63
      %s166 = scalar_select %p165, %s164, 63
      %s167 = smul.addr %s166, 2
      %s168 = smul.addr %s167, 4
      %s169 = scalar_lea.vmem %s0, %s168
      %s170 = smul.u32 32, %s14
      %s171 = smul.u32 32, %s14
      %p172 = scmp.lt.s32.totalorder %s171, 63
      %s173 = scalar_select %p172, %s171, 63
      %s174 = smul.addr %s173, 4
      %s175 = scalar_lea.vmem %s3, %s174
      %s176 = smul.u32 32, %s14
      %v177 = vld [vmem:[%s169] sm:$0xff]
      %v178 = vld [vmem:[%s169 + $0x8] sm:$0xff]
      %v179 = vld [vmem:[%s169 + $0x10] sm:$0xff]
      %v180 = vld [vmem:[%s169 + $0x18] sm:$0xff]
      %v181 = vld [vmem:[%s169 + $0x20] sm:$0xff]
      %v182 = vld [vmem:[%s169 + $0x28] sm:$0xff]
      %v183 = vld [vmem:[%s169 + $0x30] sm:$0xff]
      %v184 = vld [vmem:[%s169 + $0x38] sm:$0xff]
      %v185 = vld [vmem:[%s169 + $0x40] sm:$0xff]
      %v186 = vld [vmem:[%s169 + $0x48] sm:$0xff]
      %v187 = vld [vmem:[%s169 + $0x50] sm:$0xff]
      %v188 = vld [vmem:[%s169 + $0x58] sm:$0xff]
      %v189 = vld [vmem:[%s169 + $0x60] sm:$0xff]
      %v190 = vld [vmem:[%s169 + $0x68] sm:$0xff]
      %v191 = vld [vmem:[%s169 + $0x70] sm:$0xff]
      %v192 = vld [vmem:[%s169 + $0x78] sm:$0xff]
      %v193 = vld [vmem:[%s169 + $0x80] sm:$0xff]
      %v194 = vld [vmem:[%s169 + $0x88] sm:$0xff]
      %v195 = vld [vmem:[%s169 + $0x90] sm:$0xff]
      %v196 = vld [vmem:[%s169 + $0x98] sm:$0xff]
      %v197 = vld [vmem:[%s169 + $0xa0] sm:$0xff]
      %v198 = vld [vmem:[%s169 + $0xa8] sm:$0xff]
      %v199 = vld [vmem:[%s169 + $0xb0] sm:$0xff]
      %v200 = vld [vmem:[%s169 + $0xb8] sm:$0xff]
      %v201 = vld [vmem:[%s169 + $0xc0] sm:$0xff]
      %v202 = vld [vmem:[%s169 + $0xc8] sm:$0xff]
      %v203 = vld [vmem:[%s169 + $0xd0] sm:$0xff]
      %v204 = vld [vmem:[%s169 + $0xd8] sm:$0xff]
      %v205 = vld [vmem:[%s169 + $0xe0] sm:$0xff]
      %v206 = vld [vmem:[%s169 + $0xe8] sm:$0xff]
      %v207 = vld [vmem:[%s169 + $0xf0] sm:$0xff]
      %v208 = vld [vmem:[%s169 + $0xf8] sm:$0xff]
      %v209 = vld [vmem:[%s1] sm:$0xf]
      %v210 = vld [vmem:[%s1 + $0x4] sm:$0xf]
      %v211 = vld [vmem:[%s1 + $0x8] sm:$0xf]
      %v212 = vld [vmem:[%s1 + $0xc] sm:$0xf]
      %v213 = vld [vmem:[%s1 + $0x10] sm:$0xf]
      %v214 = vld [vmem:[%s1 + $0x14] sm:$0xf]
      %v215 = vld [vmem:[%s1 + $0x18] sm:$0xf]
      %v216 = vld [vmem:[%s1 + $0x1c] sm:$0xf]
      %v217 = vld [vmem:[%s1 + $0x20] sm:$0xf]
      %v218 = vld [vmem:[%s1 + $0x24] sm:$0xf]
      %v219 = vld [vmem:[%s1 + $0x28] sm:$0xf]
      %v220 = vld [vmem:[%s1 + $0x2c] sm:$0xf]
      %v221 = vld [vmem:[%s1 + $0x30] sm:$0xf]
      %v222 = vld [vmem:[%s1 + $0x34] sm:$0xf]
      %v223 = vld [vmem:[%s1 + $0x38] sm:$0xf]
      %v224 = vld [vmem:[%s1 + $0x3c] sm:$0xf]
      %v225 = vld [vmem:[%s1 + $0x40] sm:$0xf]
      %v226 = vld [vmem:[%s1 + $0x44] sm:$0xf]
      %v227 = vld [vmem:[%s1 + $0x48] sm:$0xf]
      %v228 = vld [vmem:[%s1 + $0x4c] sm:$0xf]
      %v229 = vld [vmem:[%s1 + $0x50] sm:$0xf]
      %v230 = vld [vmem:[%s1 + $0x54] sm:$0xf]
      %v231 = vld [vmem:[%s1 + $0x58] sm:$0xf]
      %v232 = vld [vmem:[%s1 + $0x5c] sm:$0xf]
      %v233 = vld [vmem:[%s1 + $0x60] sm:$0xf]
      %v234 = vld [vmem:[%s1 + $0x64] sm:$0xf]
      %v235 = vld [vmem:[%s1 + $0x68] sm:$0xf]
      %v236 = vld [vmem:[%s1 + $0x6c] sm:$0xf]
      %v237 = vld [vmem:[%s1 + $0x70] sm:$0xf]
      %v238 = vld [vmem:[%s1 + $0x74] sm:$0xf]
      %v239 = vld [vmem:[%s1 + $0x78] sm:$0xf]
      %v240 = vld [vmem:[%s1 + $0x7c] sm:$0xf]
      %v241 = vld [vmem:[%s2] sm:$0x1]
      %v243 = vperm.slane %v241, 0
      %v277 = vunpack.c.l.b16 %v177
      %v278 = vunpack.c.h.b16 %v177
      %v279 = vunpack.c.l.b16 %v178
      %v280 = vunpack.c.h.b16 %v178
      %v281 = vunpack.c.l.b16 %v179
      %v282 = vunpack.c.h.b16 %v179
      %v283 = vunpack.c.l.b16 %v180
      %v284 = vunpack.c.h.b16 %v180
      %v285 = vunpack.c.l.b16 %v181
      %v286 = vunpack.c.h.b16 %v181
      %v287 = vunpack.c.l.b16 %v182
      %v288 = vunpack.c.h.b16 %v182
      %v289 = vunpack.c.l.b16 %v183
      %v290 = vunpack.c.h.b16 %v183
      %v291 = vunpack.c.l.b16 %v184
      %v292 = vunpack.c.h.b16 %v184
      %v293 = vunpack.c.l.b16 %v185
      %v294 = vunpack.c.h.b16 %v185
      %v295 = vunpack.c.l.b16 %v186
      %v296 = vunpack.c.h.b16 %v186
      %v297 = vunpack.c.l.b16 %v187
      %v298 = vunpack.c.h.b16 %v187
      %v299 = vunpack.c.l.b16 %v188
      %v300 = vunpack.c.h.b16 %v188
      %v301 = vunpack.c.l.b16 %v189
      %v302 = vunpack.c.h.b16 %v189
      %v303 = vunpack.c.l.b16 %v190
      %v304 = vunpack.c.h.b16 %v190
      %v305 = vunpack.c.l.b16 %v191
      %v306 = vunpack.c.h.b16 %v191
      %v307 = vunpack.c.l.b16 %v192
      %v308 = vunpack.c.h.b16 %v192
      %v309 = vunpack.c.l.b16 %v193
      %v310 = vunpack.c.h.b16 %v193
      %v311 = vunpack.c.l.b16 %v194
      %v312 = vunpack.c.h.b16 %v194
      %v313 = vunpack.c.l.b16 %v195
      %v314 = vunpack.c.h.b16 %v195
      %v315 = vunpack.c.l.b16 %v196
      %v316 = vunpack.c.h.b16 %v196
      %v317 = vunpack.c.l.b16 %v197
      %v318 = vunpack.c.h.b16 %v197
      %v319 = vunpack.c.l.b16 %v198
      %v320 = vunpack.c.h.b16 %v198
      %v321 = vunpack.c.l.b16 %v199
      %v322 = vunpack.c.h.b16 %v199
      %v323 = vunpack.c.l.b16 %v200
      %v324 = vunpack.c.h.b16 %v200
      %v325 = vunpack.c.l.b16 %v201
      %v326 = vunpack.c.h.b16 %v201
      %v327 = vunpack.c.l.b16 %v202
      %v328 = vunpack.c.h.b16 %v202
      %v329 = vunpack.c.l.b16 %v203
      %v330 = vunpack.c.h.b16 %v203
      %v331 = vunpack.c.l.b16 %v204
      %v332 = vunpack.c.h.b16 %v204
      %v333 = vunpack.c.l.b16 %v205
      %v334 = vunpack.c.h.b16 %v205
      %v335 = vunpack.c.l.b16 %v206
      %v336 = vunpack.c.h.b16 %v206
      %v337 = vunpack.c.l.b16 %v207
      %v338 = vunpack.c.h.b16 %v207
      %v339 = vunpack.c.l.b16 %v208
      %v340 = vunpack.c.h.b16 %v208
      %v341 = vpack.c.b16 %v279, %v277
      %v342 = vpack.c.b16 %v280, %v278
      %v343 = vpack.c.b16 %v283, %v281
      %v344 = vpack.c.b16 %v284, %v282
      %v345 = vpack.c.b16 %v287, %v285
      %v346 = vpack.c.b16 %v288, %v286
      %v347 = vpack.c.b16 %v291, %v289
      %v348 = vpack.c.b16 %v292, %v290
      %v349 = vpack.c.b16 %v295, %v293
      %v350 = vpack.c.b16 %v296, %v294
      %v351 = vpack.c.b16 %v299, %v297
      %v352 = vpack.c.b16 %v300, %v298
      %v353 = vpack.c.b16 %v303, %v301
      %v354 = vpack.c.b16 %v304, %v302
      %v355 = vpack.c.b16 %v307, %v305
      %v356 = vpack.c.b16 %v308, %v306
      %v357 = vpack.c.b16 %v311, %v309
      %v358 = vpack.c.b16 %v312, %v310
      %v359 = vpack.c.b16 %v315, %v313
      %v360 = vpack.c.b16 %v316, %v314
      %v361 = vpack.c.b16 %v319, %v317
      %v362 = vpack.c.b16 %v320, %v318
      %v363 = vpack.c.b16 %v323, %v321
      %v364 = vpack.c.b16 %v324, %v322
      %v365 = vpack.c.b16 %v327, %v325
      %v366 = vpack.c.b16 %v328, %v326
      %v367 = vpack.c.b16 %v331, %v329
      %v368 = vpack.c.b16 %v332, %v330
      %v369 = vpack.c.b16 %v335, %v333
      %v370 = vpack.c.b16 %v336, %v334
      %v371 = vpack.c.b16 %v339, %v337
      %v372 = vpack.c.b16 %v340, %v338
      %v437 = vunpack.c.l.b16 %v209
      %v438 = vunpack.c.l.b16 %v210
      %v439 = vunpack.c.l.b16 %v211
      %v440 = vunpack.c.l.b16 %v212
      %v441 = vunpack.c.l.b16 %v213
      %v442 = vunpack.c.l.b16 %v214
      %v443 = vunpack.c.l.b16 %v215
      %v444 = vunpack.c.l.b16 %v216
      %v445 = vunpack.c.l.b16 %v217
      %v446 = vunpack.c.l.b16 %v218
      %v447 = vunpack.c.l.b16 %v219
      %v448 = vunpack.c.l.b16 %v220
      %v449 = vunpack.c.l.b16 %v221
      %v450 = vunpack.c.l.b16 %v222
      %v451 = vunpack.c.l.b16 %v223
      %v452 = vunpack.c.l.b16 %v224
      %v453 = vunpack.c.l.b16 %v225
      %v454 = vunpack.c.l.b16 %v226
      %v455 = vunpack.c.l.b16 %v227
      %v456 = vunpack.c.l.b16 %v228
      %v457 = vunpack.c.l.b16 %v229
      %v458 = vunpack.c.l.b16 %v230
      %v459 = vunpack.c.l.b16 %v231
      %v460 = vunpack.c.l.b16 %v232
      %v461 = vunpack.c.l.b16 %v233
      %v462 = vunpack.c.l.b16 %v234
      %v463 = vunpack.c.l.b16 %v235
      %v464 = vunpack.c.l.b16 %v236
      %v465 = vunpack.c.l.b16 %v237
      %v466 = vunpack.c.l.b16 %v238
      %v467 = vunpack.c.l.b16 %v239
      %v468 = vunpack.c.l.b16 %v240
      %v469 = vpack.c.b16 %v438, %v437
      %v470 = vpack.c.b16 %v440, %v439
      %v471 = vpack.c.b16 %v442, %v441
      %v472 = vpack.c.b16 %v444, %v443
      %v473 = vpack.c.b16 %v446, %v445
      %v474 = vpack.c.b16 %v448, %v447
      %v475 = vpack.c.b16 %v450, %v449
      %v476 = vpack.c.b16 %v452, %v451
      %v477 = vpack.c.b16 %v454, %v453
      %v478 = vpack.c.b16 %v456, %v455
      %v479 = vpack.c.b16 %v458, %v457
      %v480 = vpack.c.b16 %v460, %v459
      %v481 = vpack.c.b16 %v462, %v461
      %v482 = vpack.c.b16 %v464, %v463
      %v483 = vpack.c.b16 %v466, %v465
      %v484 = vpack.c.b16 %v468, %v467
      %501 = vmatpush.bf16.msra.mxu0 %v476
      %502 = vmatpush.bf16.msra.mxu0 %v475
      %503 = vmatpush.bf16.msra.mxu0 %v474
      %504 = vmatpush.bf16.msra.mxu0 %v473
      %505 = vmatpush.bf16.msra.mxu0 %v472
      %506 = vmatpush.bf16.msra.mxu0 %v471
      %507 = vmatpush.bf16.msra.mxu0 %v470
      %508 = vmatpush.bf16.msra.mxu0 %v469
      %509 = vmatmul.bf16.gmra.mxu0 %v341
      %v510 = vpop.f32.mrf.mxu0
      %v511 = vadd.f32 %v243, %v510
      %v512 = vpop.f32.mrf.mxu0
      %v513 = vadd.f32 %v243, %v512
      %514 = vmatmul.bf16.gmra.mxu0 %v343
      %v515 = vpop.f32.mrf.mxu0
      %v516 = vadd.f32 %v243, %v515
      %v517 = vpop.f32.mrf.mxu0
      %v518 = vadd.f32 %v243, %v517
      %519 = vmatmul.bf16.gmra.mxu0 %v345
      %v520 = vpop.f32.mrf.mxu0
      %v521 = vadd.f32 %v243, %v520
      %v522 = vpop.f32.mrf.mxu0
      %v523 = vadd.f32 %v243, %v522
      %524 = vmatmul.bf16.gmra.mxu0 %v347
      %v525 = vpop.f32.mrf.mxu0
      %v526 = vadd.f32 %v243, %v525
      %v527 = vpop.f32.mrf.mxu0
      %v528 = vadd.f32 %v243, %v527
      %529 = vmatmul.bf16.gmra.mxu0 %v349
      %v530 = vpop.f32.mrf.mxu0
      %v531 = vadd.f32 %v243, %v530
      %v532 = vpop.f32.mrf.mxu0
      %v533 = vadd.f32 %v243, %v532
      %534 = vmatmul.bf16.gmra.mxu0 %v351
      %v535 = vpop.f32.mrf.mxu0
      %v536 = vadd.f32 %v243, %v535
      %v537 = vpop.f32.mrf.mxu0
      %v538 = vadd.f32 %v243, %v537
      %539 = vmatmul.bf16.gmra.mxu0 %v353
      %v540 = vpop.f32.mrf.mxu0
      %v541 = vadd.f32 %v243, %v540
      %v542 = vpop.f32.mrf.mxu0
      %v543 = vadd.f32 %v243, %v542
      %544 = vmatmul.bf16.gmra.mxu0 %v355
      %v545 = vpop.f32.mrf.mxu0
      %v546 = vadd.f32 %v243, %v545
      %v547 = vpop.f32.mrf.mxu0
      %v548 = vadd.f32 %v243, %v547
      %549 = vmatmul.bf16.gmra.mxu0 %v357
      %v550 = vpop.f32.mrf.mxu0
      %v551 = vadd.f32 %v243, %v550
      %v552 = vpop.f32.mrf.mxu0
      %v553 = vadd.f32 %v243, %v552
      %554 = vmatmul.bf16.gmra.mxu0 %v359
      %v555 = vpop.f32.mrf.mxu0
      %v556 = vadd.f32 %v243, %v555
      %v557 = vpop.f32.mrf.mxu0
      %v558 = vadd.f32 %v243, %v557
      %559 = vmatmul.bf16.gmra.mxu0 %v361
      %v560 = vpop.f32.mrf.mxu0
      %v561 = vadd.f32 %v243, %v560
      %v562 = vpop.f32.mrf.mxu0
      %v563 = vadd.f32 %v243, %v562
      %564 = vmatmul.bf16.gmra.mxu0 %v363
      %v565 = vpop.f32.mrf.mxu0
      %v566 = vadd.f32 %v243, %v565
      %v567 = vpop.f32.mrf.mxu0
      %v568 = vadd.f32 %v243, %v567
      %569 = vmatmul.bf16.gmra.mxu0 %v365
      %v570 = vpop.f32.mrf.mxu0
      %v571 = vadd.f32 %v243, %v570
      %v572 = vpop.f32.mrf.mxu0
      %v573 = vadd.f32 %v243, %v572
      %574 = vmatmul.bf16.gmra.mxu0 %v367
      %v575 = vpop.f32.mrf.mxu0
      %v576 = vadd.f32 %v243, %v575
      %v577 = vpop.f32.mrf.mxu0
      %v578 = vadd.f32 %v243, %v577
      %579 = vmatmul.bf16.gmra.mxu0 %v369
      %v580 = vpop.f32.mrf.mxu0
      %v581 = vadd.f32 %v243, %v580
      %v582 = vpop.f32.mrf.mxu0
      %v583 = vadd.f32 %v243, %v582
      %584 = vmatmul.bf16.gmra.mxu0 %v371
      %v585 = vpop.f32.mrf.mxu0
      %v586 = vadd.f32 %v243, %v585
      %v587 = vpop.f32.mrf.mxu0
      %v588 = vadd.f32 %v243, %v587
      %589 = vdwg.mxu0
      %590 = vmatpush.bf16.msra.mxu0 %v484
      %591 = vmatpush.bf16.msra.mxu0 %v483
      %592 = vmatpush.bf16.msra.mxu0 %v482
      %593 = vmatpush.bf16.msra.mxu0 %v481
      %594 = vmatpush.bf16.msra.mxu0 %v480
      %595 = vmatpush.bf16.msra.mxu0 %v479
      %596 = vmatpush.bf16.msra.mxu0 %v478
      %597 = vmatpush.bf16.msra.mxu0 %v477
      %598 = vmatmul.bf16.gmra.mxu0 %v342
      %v599 = vpop.f32.mrf.mxu0
      %v600 = vadd.f32 %v511, %v599
      %v601 = vpop.f32.mrf.mxu0
      %v602 = vadd.f32 %v513, %v601
      %603 = vmatmul.bf16.gmra.mxu0 %v344
      %v604 = vpop.f32.mrf.mxu0
      %v605 = vadd.f32 %v516, %v604
      %v606 = vpop.f32.mrf.mxu0
      %v607 = vadd.f32 %v518, %v606
      %608 = vmatmul.bf16.gmra.mxu0 %v346
      %v609 = vpop.f32.mrf.mxu0
      %v610 = vadd.f32 %v521, %v609
      %v611 = vpop.f32.mrf.mxu0
      %v612 = vadd.f32 %v523, %v611
      %613 = vmatmul.bf16.gmra.mxu0 %v348
      %v614 = vpop.f32.mrf.mxu0
      %v615 = vadd.f32 %v526, %v614
      %v616 = vpop.f32.mrf.mxu0
      %v617 = vadd.f32 %v528, %v616
      %618 = vmatmul.bf16.gmra.mxu0 %v350
      %v619 = vpop.f32.mrf.mxu0
      %v620 = vadd.f32 %v531, %v619
      %v621 = vpop.f32.mrf.mxu0
      %v622 = vadd.f32 %v533, %v621
      %623 = vmatmul.bf16.gmra.mxu0 %v352
      %v624 = vpop.f32.mrf.mxu0
      %v625 = vadd.f32 %v536, %v624
      %v626 = vpop.f32.mrf.mxu0
      %v627 = vadd.f32 %v538, %v626
      %628 = vmatmul.bf16.gmra.mxu0 %v354
      %v629 = vpop.f32.mrf.mxu0
      %v630 = vadd.f32 %v541, %v629
      %v631 = vpop.f32.mrf.mxu0
      %v632 = vadd.f32 %v543, %v631
      %633 = vmatmul.bf16.gmra.mxu0 %v356
      %v634 = vpop.f32.mrf.mxu0
      %v635 = vadd.f32 %v546, %v634
      %v636 = vpop.f32.mrf.mxu0
      %v637 = vadd.f32 %v548, %v636
      %638 = vmatmul.bf16.gmra.mxu0 %v358
      %v639 = vpop.f32.mrf.mxu0
      %v640 = vadd.f32 %v551, %v639
      %v641 = vpop.f32.mrf.mxu0
      %v642 = vadd.f32 %v553, %v641
      %643 = vmatmul.bf16.gmra.mxu0 %v360
      %v644 = vpop.f32.mrf.mxu0
      %v645 = vadd.f32 %v556, %v644
      %v646 = vpop.f32.mrf.mxu0
      %v647 = vadd.f32 %v558, %v646
      %648 = vmatmul.bf16.gmra.mxu0 %v362
      %v649 = vpop.f32.mrf.mxu0
      %v650 = vadd.f32 %v561, %v649
      %v651 = vpop.f32.mrf.mxu0
      %v652 = vadd.f32 %v563, %v651
      %653 = vmatmul.bf16.gmra.mxu0 %v364
      %v654 = vpop.f32.mrf.mxu0
      %v655 = vadd.f32 %v566, %v654
      %v656 = vpop.f32.mrf.mxu0
      %v657 = vadd.f32 %v568, %v656
      %658 = vmatmul.bf16.gmra.mxu0 %v366
      %v659 = vpop.f32.mrf.mxu0
      %v660 = vadd.f32 %v571, %v659
      %v661 = vpop.f32.mrf.mxu0
      %v662 = vadd.f32 %v573, %v661
      %663 = vmatmul.bf16.gmra.mxu0 %v368
      %v664 = vpop.f32.mrf.mxu0
      %v665 = vadd.f32 %v576, %v664
      %v666 = vpop.f32.mrf.mxu0
      %v667 = vadd.f32 %v578, %v666
      %668 = vmatmul.bf16.gmra.mxu0 %v370
      %v669 = vpop.f32.mrf.mxu0
      %v670 = vadd.f32 %v581, %v669
      %v671 = vpop.f32.mrf.mxu0
      %v672 = vadd.f32 %v583, %v671
      %673 = vmatmul.bf16.gmra.mxu0 %v372
      %v674 = vpop.f32.mrf.mxu0
      %v675 = vadd.f32 %v586, %v674
      %v676 = vpop.f32.mrf.mxu0
      %v677 = vadd.f32 %v588, %v676
      %678 = vdwg.mxu0
      %v679 = vmax.f32 %v600, 0.0
      %v680 = vmax.f32 %v602, 0.0
      %v681 = vmax.f32 %v605, 0.0
      %v682 = vmax.f32 %v607, 0.0
      %v683 = vmax.f32 %v610, 0.0
      %v684 = vmax.f32 %v612, 0.0
      %v685 = vmax.f32 %v615, 0.0
      %v686 = vmax.f32 %v617, 0.0
      %v687 = vmax.f32 %v620, 0.0
      %v688 = vmax.f32 %v622, 0.0
      %v689 = vmax.f32 %v625, 0.0
      %v690 = vmax.f32 %v627, 0.0
      %v691 = vmax.f32 %v630, 0.0
      %v692 = vmax.f32 %v632, 0.0
      %v693 = vmax.f32 %v635, 0.0
      %v694 = vmax.f32 %v637, 0.0
      %v695 = vmax.f32 %v640, 0.0
      %v696 = vmax.f32 %v642, 0.0
      %v697 = vmax.f32 %v645, 0.0
      %v698 = vmax.f32 %v647, 0.0
      %v699 = vmax.f32 %v650, 0.0
      %v700 = vmax.f32 %v652, 0.0
      %v701 = vmax.f32 %v655, 0.0
      %v702 = vmax.f32 %v657, 0.0
      %v703 = vmax.f32 %v660, 0.0
      %v704 = vmax.f32 %v662, 0.0
      %v705 = vmax.f32 %v665, 0.0
      %v706 = vmax.f32 %v667, 0.0
      %v707 = vmax.f32 %v670, 0.0
      %v708 = vmax.f32 %v672, 0.0
      %v709 = vmax.f32 %v675, 0.0
      %v710 = vmax.f32 %v677, 0.0
      %v711 = vpack.c.bf16 %v679, %v679
      %v712 = vpack.c.bf16 %v680, %v680
      %v713 = vpack.c.bf16 %v681, %v681
      %v714 = vpack.c.bf16 %v682, %v682
      %v715 = vpack.c.bf16 %v683, %v683
      %v716 = vpack.c.bf16 %v684, %v684
      %v717 = vpack.c.bf16 %v685, %v685
      %v718 = vpack.c.bf16 %v686, %v686
      %v719 = vpack.c.bf16 %v687, %v687
      %v720 = vpack.c.bf16 %v688, %v688
      %v721 = vpack.c.bf16 %v689, %v689
      %v722 = vpack.c.bf16 %v690, %v690
      %v723 = vpack.c.bf16 %v691, %v691
      %v724 = vpack.c.bf16 %v692, %v692
      %v725 = vpack.c.bf16 %v693, %v693
      %v726 = vpack.c.bf16 %v694, %v694
      %v727 = vpack.c.bf16 %v695, %v695
      %v728 = vpack.c.bf16 %v696, %v696
      %v729 = vpack.c.bf16 %v697, %v697
      %v730 = vpack.c.bf16 %v698, %v698
      %v731 = vpack.c.bf16 %v699, %v699
      %v732 = vpack.c.bf16 %v700, %v700
      %v733 = vpack.c.bf16 %v701, %v701
      %v734 = vpack.c.bf16 %v702, %v702
      %v735 = vpack.c.bf16 %v703, %v703
      %v736 = vpack.c.bf16 %v704, %v704
      %v737 = vpack.c.bf16 %v705, %v705
      %v738 = vpack.c.bf16 %v706, %v706
      %v739 = vpack.c.bf16 %v707, %v707
      %v740 = vpack.c.bf16 %v708, %v708
      %v741 = vpack.c.bf16 %v709, %v709
      %v742 = vpack.c.bf16 %v710, %v710
      %743 = vst [vmem:[%s175] sm:$0xf] %v711
      %744 = vst [vmem:[%s175 + $0x4] sm:$0xf] %v712
      %745 = vst [vmem:[%s175 + $0x8] sm:$0xf] %v713
      %746 = vst [vmem:[%s175 + $0xc] sm:$0xf] %v714
      %747 = vst [vmem:[%s175 + $0x10] sm:$0xf] %v715
      %748 = vst [vmem:[%s175 + $0x14] sm:$0xf] %v716
      %749 = vst [vmem:[%s175 + $0x18] sm:$0xf] %v717
      %750 = vst [vmem:[%s175 + $0x1c] sm:$0xf] %v718
      %751 = vst [vmem:[%s175 + $0x20] sm:$0xf] %v719
      %752 = vst [vmem:[%s175 + $0x24] sm:$0xf] %v720
      %753 = vst [vmem:[%s175 + $0x28] sm:$0xf] %v721
      %754 = vst [vmem:[%s175 + $0x2c] sm:$0xf] %v722
      %755 = vst [vmem:[%s175 + $0x30] sm:$0xf] %v723
      %756 = vst [vmem:[%s175 + $0x34] sm:$0xf] %v724
      %757 = vst [vmem:[%s175 + $0x38] sm:$0xf] %v725
      %758 = vst [vmem:[%s175 + $0x3c] sm:$0xf] %v726
      %759 = vst [vmem:[%s175 + $0x40] sm:$0xf] %v727
      %760 = vst [vmem:[%s175 + $0x44] sm:$0xf] %v728
      %761 = vst [vmem:[%s175 + $0x48] sm:$0xf] %v729
      %762 = vst [vmem:[%s175 + $0x4c] sm:$0xf] %v730
      %763 = vst [vmem:[%s175 + $0x50] sm:$0xf] %v731
      %764 = vst [vmem:[%s175 + $0x54] sm:$0xf] %v732
      %765 = vst [vmem:[%s175 + $0x58] sm:$0xf] %v733
      %766 = vst [vmem:[%s175 + $0x5c] sm:$0xf] %v734
      %767 = vst [vmem:[%s175 + $0x60] sm:$0xf] %v735
      %768 = vst [vmem:[%s175 + $0x64] sm:$0xf] %v736
      %769 = vst [vmem:[%s175 + $0x68] sm:$0xf] %v737
      %770 = vst [vmem:[%s175 + $0x6c] sm:$0xf] %v738
      %771 = vst [vmem:[%s175 + $0x70] sm:$0xf] %v739
      %772 = vst [vmem:[%s175 + $0x74] sm:$0xf] %v740
      %773 = vst [vmem:[%s175 + $0x78] sm:$0xf] %v741
      %774 = vst [vmem:[%s175 + $0x7c] sm:$0xf] %v742
      %s775 = smul.u32 32, %s14
      %p776 = scmp.lt.s32.totalorder %s775, 63
      %s777 = scalar_select %p776, %s775, 63
      %s778 = smul.addr %s777, 4
      %s779 = scalar_lea.vmem %s3, %s778
      // Predicated region
      $region33: #{resnet_features_pool.22} parent=31 // pred_check
        %p780 = pneg %p100
      $region34: #{resnet_features_pool.22} parent=31 // pred_check_branch
        %782 = sbr.rel (%p780) target = $region36
      $region35: #{resnet_features_pool.22} parent=31 // pred_region
        %s783 = smul.u32 32, %s14
      $region36: #{resnet_features_pool.22} parent=31 // pred_fallthru
        _
    $region32: #{resnet_features_pool.22} parent=5 // pred_fallthru
      _
    %p784 = scmp.le.s32.totalorder 2, %s9
    // Predicated region
    $region37: #{resnet_features_pool.22} parent=5 // pred_check
      %p785 = pneg %p784
    $region38: #{resnet_features_pool.22} parent=5 // pred_check_branch
      %787 = sbr.rel (%p785) target = $region40
    $region39: #{resnet_features_pool.22} parent=5 // pred_region
      %s788 = ssub.s32 %s9, 2
      // Predicated region
      $region41: #{resnet_features_pool.22} parent=39 // pred_check
        %p789 = pneg %p106
      $region42: #{resnet_features_pool.22} parent=39 // pred_check_branch
        %791 = sbr.rel (%p789) target = $region44
      $region43: #{resnet_features_pool.22} parent=39 // pred_region
        %s792 = smul.u32 32, %s15
        %p793 = scmp.lt.s32.totalorder %s792, 63
        %s794 = scalar_select %p793, %s792, 63
        %s795 = smul.addr %s794, 4
        %s796 = scalar_lea.vmem %s3, %s795
      $region44: #{resnet_features_pool.22} parent=39 // pred_fallthru
        _
    $region40: #{resnet_features_pool.22} parent=5 // pred_fallthru
      _
  $region6: #{resnet_features_pool.22} parent=0 // loop_footer
    %s13 = sadd.s32 1, %s9
  $region7: #{resnet_features_pool.22} parent=0 // loop_footer_branch
    %8 = sbr.rel target = $region3
  $region8: #{resnet_features_pool.22} parent=0 // loop_exit
    _

// kernel: resnet_features_pool.23
$region0: #{resnet_features_pool.23}
  #allocation0 [shape = 'u32[]', space=smem, size = 0x4, offset = 0x4, fixed_abs, tag = 'smem constant byte address 0x4 - core index']
  #allocation1 [shape = 'u32[72,128]{1,0:T(1,128)}', space=vmem, size = 0x9000, scoped, tag = 'internal scratch']
  %s0 = inlined_call_operand.vmem [shape: bf16[9,128,128], index: 0, kind: input, shape index: {}]
  %s1 = inlined_call_operand.vmem [shape: bf16[128,128], index: 1, kind: output, shape index: {}]
  %s2 = sld [smem:[#allocation0]]
  $region78: #{resnet_features_pool.23} parent=0
    _
  %s4 = ssub.s32 1, %s2
  %s5 = scalar_select 0, %s4, %s2
  $region1: #{resnet_features_pool.23} parent=0
    #allocation2 [shape = 'u8[294912]{0}', space=vmem, size = 0x48000, scoped, tag = 'input window, operand 0']
    loop: start=0, step=1, limit=4
    $region2: #{resnet_features_pool.23} parent=1 // loop_pre_header
      _
    $region3: #{resnet_features_pool.23} parent=1 // loop_header
      %s7 = sphi 0, %s11
      %p8 = scmp.ge.s32.totalorder %s7, 4
      %s17 = sphi 0, %s19
      %s20 = sphi 0, %s17
      %s21 = sphi 0, %s20
      %s37 = sphi 0, %s21
      %s43 = sphi 0, %s45
      %s46 = sphi 0, %s43
      %s47 = sphi 0, %s46
      %s63 = sphi 0, %s47
    $region4: #{resnet_features_pool.23} parent=1 // loop_header_branch
      %10 = sbr.rel (%p8) target = $region8
    $region5: #{resnet_features_pool.23} parent=1 // loop_body
      %s12 = ssub.s32 %s7, 1
      %s13 = ssub.s32 %s7, 2
      %s14 = sadd.s32 %s7, 1
      %s15 = ssub.s32 %s7, %s14
      %p16 = scmp.eq.s32.totalorder %s15, 0
      %s18 = sadd.s32 %s17, 1
      %s19 = scalar_select %p16, %s17, %s18
      %p22 = pneg %p16
      %p23 = scmp.eq.s32.totalorder %s7, 1
      %p24 = por %p22, %p23
      %p25 = scmp.ne.s32.totalorder %s17, %s20
      %p26 = scmp.eq.s32.totalorder %s7, 0
      %p27 = por %p25, %p26
      %p28 = scmp.ne.s32.totalorder %s17, %s20
      %p29 = scmp.eq.s32.totalorder %s12, 1
      %p30 = por %p28, %p29
      %p31 = scmp.ne.s32.totalorder %s20, %s21
      %p32 = scmp.eq.s32.totalorder %s12, 0
      %p33 = por %p31, %p32
      %p34 = scmp.ne.s32.totalorder %s20, %s21
      %p35 = scmp.eq.s32.totalorder %s13, 1
      %p36 = por %p34, %p35
      %p38 = scmp.ne.s32.totalorder %s21, %s37
      %p39 = scmp.eq.s32.totalorder %s13, 0
      %p40 = por %p38, %p39
      %s41 = ssub.s32 %s7, %s14
      %p42 = scmp.eq.s32.totalorder %s41, 0
      %s44 = sadd.s32 %s43, 1
      %s45 = scalar_select %p42, %s43, %s44
      %p48 = pneg %p42
      %p49 = scmp.eq.s32.totalorder %s7, 1
      %p50 = por %p48, %p49
      %p51 = scmp.ne.s32.totalorder %s43, %s46
      %p52 = scmp.eq.s32.totalorder %s7, 0
      %p53 = por %p51, %p52
      %p54 = scmp.ne.s32.totalorder %s43, %s46
      %p55 = scmp.eq.s32.totalorder %s12, 1
      %p56 = por %p54, %p55
      %p57 = scmp.ne.s32.totalorder %s46, %s47
      %p58 = scmp.eq.s32.totalorder %s12, 0
      %p59 = por %p57, %p58
      %p60 = scmp.ne.s32.totalorder %s46, %s47
      %p61 = scmp.eq.s32.totalorder %s13, 1
      %p62 = por %p60, %p61
      %p64 = scmp.ne.s32.totalorder %s47, %s63
      %p65 = scmp.eq.s32.totalorder %s13, 0
      %p66 = por %p64, %p65
      %p67 = scmp.le.s32.totalorder 1, %s7
      %p68 = scmp.lt.s32.totalorder %s7, 3
      %p69 = pnand %p67, %p68
      %p70 = pneg %p69
      // Predicated region
      $region9: #{resnet_features_pool.23} parent=5 // pred_check
        _
      $region10: #{resnet_features_pool.23} parent=5 // pred_check_branch
        %72 = sbr.rel (%p69) target = $region12
      $region11: #{resnet_features_pool.23} parent=5 // pred_region
        %s73 = ssub.s32 %s7, 1
      $region12: #{resnet_features_pool.23} parent=5 // pred_fallthru
        _
      %p74 = scmp.lt.s32.totalorder %s7, 2
      // Predicated region
      $region13: #{resnet_features_pool.23} parent=5 // pred_check
        %p75 = pneg %p74
      $region14: #{resnet_features_pool.23} parent=5 // pred_check_branch
        %77 = sbr.rel (%p75) target = $region16
      $region15: #{resnet_features_pool.23} parent=5 // pred_region
        // Predicated region
        $region17: #{resnet_features_pool.23} parent=15 // pred_check
          %p78 = pneg %p27
        $region18: #{resnet_features_pool.23} parent=15 // pred_check_branch
          %80 = sbr.rel (%p78) target = $region20
        $region19: #{resnet_features_pool.23} parent=15 // pred_region
          %s81 = sand.u32 %s17, 1
          %s82 = sand.u32 %s17, 1
          %s83 = smul.addr %s82, 288
          %s84 = scalar_lea.vmem [#allocation2], %s83
          %s85 = smul.u32 8, %s7
          %s86 = smul.addr %s85, 4
          %s87 = scalar_lea.vmem %s0, %s86
          // Predicated region
          $region21: #{resnet_features_pool.23} parent=19 // pred_check
            _
          $region22: #{resnet_features_pool.23} parent=19 // pred_check_branch
            %89 = sbr.rel (0) target = $region24
          $region23: #{resnet_features_pool.23} parent=19 // pred_region
            // Predicated region
            $region25: #{resnet_features_pool.23} parent=23 // pred_check
              _
            $region26: #{resnet_features_pool.23} parent=23 // pred_check_branch
              %91 = sbr.rel target = $region28
            $region27: #{resnet_features_pool.23} parent=23 // pred_region
              // Predicated region
              $region40: #{resnet_features_pool.23} parent=27 // pred_check
                _
              $region41: #{resnet_features_pool.23} parent=27 // pred_check_branch
                %249 = sbr.rel (0) target = $region43
              $region42: #{resnet_features_pool.23} parent=27 // pred_region
                loop: start=0, step=1, limit=1
                $region44: #{resnet_features_pool.23} parent=42 // loop_pre_header
                  _
                $region45: #{resnet_features_pool.23} parent=42 // loop_header
                  %s251 = sphi 0, %s255
                  %p252 = scmp.ge.s32.totalorder %s251, 1
                  %s256 = sphi %s87, %s87
                  %s257 = sphi %s84, %s84
                $region46: #{resnet_features_pool.23} parent=42 // loop_header_branch
                  %254 = sbr.rel (%p252) target = $region50
                $region47: #{resnet_features_pool.23} parent=42 // loop_body
                  _
                $region48: #{resnet_features_pool.23} parent=42 // loop_footer
                  %s255 = sadd.s32 1, %s251
                $region49: #{resnet_features_pool.23} parent=42 // loop_footer_branch
                  %250 = sbr.rel target = $region45
                $region50: #{resnet_features_pool.23} parent=42 // loop_exit
                  _
                %s259 = ssub.s32 16, 1
                loop: start=0, step=1, limit=1
                $region51: #{resnet_features_pool.23} parent=42 // loop_pre_header
                  _
                $region52: #{resnet_features_pool.23} parent=42 // loop_header
                  %s261 = sphi 0, %s265
                  %p262 = scmp.ge.s32.totalorder %s261, 1
                  %s266 = sphi %s87, %s87
                  %s267 = sphi %s84, %s84
                $region53: #{resnet_features_pool.23} parent=42 // loop_header_branch
                  %264 = sbr.rel (%p262) target = $region57
                $region54: #{resnet_features_pool.23} parent=42 // loop_body
                  %v268 = vld [vmem:[%s266] sm:%s259]
                  %269 = vst [vmem:[%s267] sm:%s259] %v268
                  %v270 = vld [vmem:[%s266 + $0x4] sm:%s259]
                  %271 = vst [vmem:[%s267 + $0x4] sm:%s259] %v270
                  %v272 = vld [vmem:[%s266 + $0x8] sm:%s259]
                  %273 = vst [vmem:[%s267 + $0x8] sm:%s259] %v272
                  %v274 = vld [vmem:[%s266 + $0xc] sm:%s259]
                  %275 = vst [vmem:[%s267 + $0xc] sm:%s259] %v274
                  %v276 = vld [vmem:[%s266 + $0x10] sm:%s259]
                  %277 = vst [vmem:[%s267 + $0x10] sm:%s259] %v276
                  %v278 = vld [vmem:[%s266 + $0x14] sm:%s259]
                  %279 = vst [vmem:[%s267 + $0x14] sm:%s259] %v278
                  %v280 = vld [vmem:[%s266 + $0x18] sm:%s259]
                  %281 = vst [vmem:[%s267 + $0x18] sm:%s259] %v280
                  %v282 = vld [vmem:[%s266 + $0x1c] sm:%s259]
                  %283 = vst [vmem:[%s267 + $0x1c] sm:%s259] %v282
                  %v284 = vld [vmem:[%s266 + $0x40] sm:%s259]
                  %285 = vst [vmem:[%s267 + $0x20] sm:%s259] %v284
                  %v286 = vld [vmem:[%s266 + $0x44] sm:%s259]
                  %287 = vst [vmem:[%s267 + $0x24] sm:%s259] %v286
                  %v288 = vld [vmem:[%s266 + $0x48] sm:%s259]
                  %289 = vst [vmem:[%s267 + $0x28] sm:%s259] %v288
                  %v290 = vld [vmem:[%s266 + $0x4c] sm:%s259]
                  %291 = vst [vmem:[%s267 + $0x2c] sm:%s259] %v290
                  %v292 = vld [vmem:[%s266 + $0x50] sm:%s259]
                  %293 = vst [vmem:[%s267 + $0x30] sm:%s259] %v292
                  %v294 = vld [vmem:[%s266 + $0x54] sm:%s259]
                  %295 = vst [vmem:[%s267 + $0x34] sm:%s259] %v294
                  %v296 = vld [vmem:[%s266 + $0x58] sm:%s259]
                  %297 = vst [vmem:[%s267 + $0x38] sm:%s259] %v296
                  %v298 = vld [vmem:[%s266 + $0x5c] sm:%s259]
                  %299 = vst [vmem:[%s267 + $0x3c] sm:%s259] %v298
                  %v300 = vld [vmem:[%s266 + $0x80] sm:%s259]
                  %301 = vst [vmem:[%s267 + $0x40] sm:%s259] %v300
                  %v302 = vld [vmem:[%s266 + $0x84] sm:%s259]
                  %303 = vst [vmem:[%s267 + $0x44] sm:%s259] %v302
                  %v304 = vld [vmem:[%s266 + $0x88] sm:%s259]
                  %305 = vst [vmem:[%s267 + $0x48] sm:%s259] %v304
                  %v306 = vld [vmem:[%s266 + $0x8c] sm:%s259]
                  %307 = vst [vmem:[%s267 + $0x4c] sm:%s259] %v306
                  %v308 = vld [vmem:[%s266 + $0x90] sm:%s259]
                  %309 = vst [vmem:[%s267 + $0x50] sm:%s259] %v308
                  %v310 = vld [vmem:[%s266 + $0x94] sm:%s259]
                  %311 = vst [vmem:[%s267 + $0x54] sm:%s259] %v310
                  %v312 = vld [vmem:[%s266 + $0x98] sm:%s259]
                  %313 = vst [vmem:[%s267 + $0x58] sm:%s259] %v312
                  %v314 = vld [vmem:[%s266 + $0x9c] sm:%s259]
                  %315 = vst [vmem:[%s267 + $0x5c] sm:%s259] %v314
                  %v316 = vld [vmem:[%s266 + $0xc0] sm:%s259]
                  %317 = vst [vmem:[%s267 + $0x60] sm:%s259] %v316
                  %v318 = vld [vmem:[%s266 + $0xc4] sm:%s259]
                  %319 = vst [vmem:[%s267 + $0x64] sm:%s259] %v318
                  %v320 = vld [vmem:[%s266 + $0xc8] sm:%s259]
                  %321 = vst [vmem:[%s267 + $0x68] sm:%s259] %v320
                  %v322 = vld [vmem:[%s266 + $0xcc] sm:%s259]
                  %323 = vst [vmem:[%s267 + $0x6c] sm:%s259] %v322
                  %v324 = vld [vmem:[%s266 + $0xd0] sm:%s259]
                  %325 = vst [vmem:[%s267 + $0x70] sm:%s259] %v324
                  %v326 = vld [vmem:[%s266 + $0xd4] sm:%s259]
                  %327 = vst [vmem:[%s267 + $0x74] sm:%s259] %v326
                  %v328 = vld [vmem:[%s266 + $0xd8] sm:%s259]
                  %329 = vst [vmem:[%s267 + $0x78] sm:%s259] %v328
                  %v330 = vld [vmem:[%s266 + $0xdc] sm:%s259]
                  %331 = vst [vmem:[%s267 + $0x7c] sm:%s259] %v330
                  %v332 = vld [vmem:[%s266 + $0x100] sm:%s259]
                  %333 = vst [vmem:[%s267 + $0x80] sm:%s259] %v332
                  %v334 = vld [vmem:[%s266 + $0x104] sm:%s259]
                  %335 = vst [vmem:[%s267 + $0x84] sm:%s259] %v334
                  %v336 = vld [vmem:[%s266 + $0x108] sm:%s259]
                  %337 = vst [vmem:[%s267 + $0x88] sm:%s259] %v336
                  %v338 = vld [vmem:[%s266 + $0x10c] sm:%s259]
                  %339 = vst [vmem:[%s267 + $0x8c] sm:%s259] %v338
                  %v340 = vld [vmem:[%s266 + $0x110] sm:%s259]
                  %341 = vst [vmem:[%s267 + $0x90] sm:%s259] %v340
                  %v342 = vld [vmem:[%s266 + $0x114] sm:%s259]
                  %343 = vst [vmem:[%s267 + $0x94] sm:%s259] %v342
                  %v344 = vld [vmem:[%s266 + $0x118] sm:%s259]
                  %345 = vst [vmem:[%s267 + $0x98] sm:%s259] %v344
                  %v346 = vld [vmem:[%s266 + $0x11c] sm:%s259]
                  %347 = vst [vmem:[%s267 + $0x9c] sm:%s259] %v346
                  %v348 = vld [vmem:[%s266 + $0x140] sm:%s259]
                  %349 = vst [vmem:[%s267 + $0xa0] sm:%s259] %v348
                  %v350 = vld [vmem:[%s266 + $0x144] sm:%s259]
                  %351 = vst [vmem:[%s267 + $0xa4] sm:%s259] %v350
                  %v352 = vld [vmem:[%s266 + $0x148] sm:%s259]
                  %353 = vst [vmem:[%s267 + $0xa8] sm:%s259] %v352
                  %v354 = vld [vmem:[%s266 + $0x14c] sm:%s259]
                  %355 = vst [vmem:[%s267 + $0xac] sm:%s259] %v354
                  %v356 = vld [vmem:[%s266 + $0x150] sm:%s259]
                  %357 = vst [vmem:[%s267 + $0xb0] sm:%s259] %v356
                  %v358 = vld [vmem:[%s266 + $0x154] sm:%s259]
                  %359 = vst [vmem:[%s267 + $0xb4] sm:%s259] %v358
                  %v360 = vld [vmem:[%s266 + $0x158] sm:%s259]
                  %361 = vst [vmem:[%s267 + $0xb8] sm:%s259] %v360
                  %v362 = vld [vmem:[%s266 + $0x15c] sm:%s259]
                  %363 = vst [vmem:[%s267 + $0xbc] sm:%s259] %v362
                  %v364 = vld [vmem:[%s266 + $0x180] sm:%s259]
                  %365 = vst [vmem:[%s267 + $0xc0] sm:%s259] %v364
                  %v366 = vld [vmem:[%s266 + $0x184] sm:%s259]
                  %367 = vst [vmem:[%s267 + $0xc4] sm:%s259] %v366
                  %v368 = vld [vmem:[%s266 + $0x188] sm:%s259]
                  %369 = vst [vmem:[%s267 + $0xc8] sm:%s259] %v368
                  %v370 = vld [vmem:[%s266 + $0x18c] sm:%s259]
                  %371 = vst [vmem:[%s267 + $0xcc] sm:%s259] %v370
                  %v372 = vld [vmem:[%s266 + $0x190] sm:%s259]
                  %373 = vst [vmem:[%s267 + $0xd0] sm:%s259] %v372
                  %v374 = vld [vmem:[%s266 + $0x194] sm:%s259]
                  %375 = vst [vmem:[%s267 + $0xd4] sm:%s259] %v374
                  %v376 = vld [vmem:[%s266 + $0x198] sm:%s259]
                  %377 = vst [vmem:[%s267 + $0xd8] sm:%s259] %v376
                  %v378 = vld [vmem:[%s266 + $0x19c] sm:%s259]
                  %379 = vst [vmem:[%s267 + $0xdc] sm:%s259] %v378
                  %v380 = vld [vmem:[%s266 + $0x1c0] sm:%s259]
                  %381 = vst [vmem:[%s267 + $0xe0] sm:%s259] %v380
                  %v382 = vld [vmem:[%s266 + $0x1c4] sm:%s259]
                  %383 = vst [vmem:[%s267 + $0xe4] sm:%s259] %v382
                  %v384 = vld [vmem:[%s266 + $0x1c8] sm:%s259]
                  %385 = vst [vmem:[%s267 + $0xe8] sm:%s259] %v384
                  %v386 = vld [vmem:[%s266 + $0x1cc] sm:%s259]
                  %387 = vst [vmem:[%s267 + $0xec] sm:%s259] %v386
                  %v388 = vld [vmem:[%s266 + $0x1d0] sm:%s259]
                  %389 = vst [vmem:[%s267 + $0xf0] sm:%s259] %v388
                  %v390 = vld [vmem:[%s266 + $0x1d4] sm:%s259]
                  %391 = vst [vmem:[%s267 + $0xf4] sm:%s259] %v390
                  %v392 = vld [vmem:[%s266 + $0x1d8] sm:%s259]
                  %393 = vst [vmem:[%s267 + $0xf8] sm:%s259] %v392
                  %v394 = vld [vmem:[%s266 + $0x1dc] sm:%s259]
                  %395 = vst [vmem:[%s267 + $0xfc] sm:%s259] %v394
                  %v396 = vld [vmem:[%s266 + $0x200] sm:%s259]
                  %397 = vst [vmem:[%s267 + $0x100] sm:%s259] %v396
                  %v398 = vld [vmem:[%s266 + $0x204] sm:%s259]
                  %399 = vst [vmem:[%s267 + $0x104] sm:%s259] %v398
                  %v400 = vld [vmem:[%s266 + $0x208] sm:%s259]
                  %401 = vst [vmem:[%s267 + $0x108] sm:%s259] %v400
                  %v402 = vld [vmem:[%s266 + $0x20c] sm:%s259]
                  %403 = vst [vmem:[%s267 + $0x10c] sm:%s259] %v402
                  %v404 = vld [vmem:[%s266 + $0x210] sm:%s259]
                  %405 = vst [vmem:[%s267 + $0x110] sm:%s259] %v404
                  %v406 = vld [vmem:[%s266 + $0x214] sm:%s259]
                  %407 = vst [vmem:[%s267 + $0x114] sm:%s259] %v406
                  %v408 = vld [vmem:[%s266 + $0x218] sm:%s259]
                  %409 = vst [vmem:[%s267 + $0x118] sm:%s259] %v408
                  %v410 = vld [vmem:[%s266 + $0x21c] sm:%s259]
                  %411 = vst [vmem:[%s267 + $0x11c] sm:%s259] %v410
                $region55: #{resnet_features_pool.23} parent=42 // loop_footer
                  %s265 = sadd.s32 1, %s261
                $region56: #{resnet_features_pool.23} parent=42 // loop_footer_branch
                  %260 = sbr.rel target = $region52
                $region57: #{resnet_features_pool.23} parent=42 // loop_exit
                  _
              $region43: #{resnet_features_pool.23} parent=27 // pred_fallthru
                _
            $region28: #{resnet_features_pool.23} parent=23 // pred_fallthru
              _
            // Predicated region
            $region29: #{resnet_features_pool.23} parent=23 // pred_check
              _
            $region30: #{resnet_features_pool.23} parent=23 // pred_check_branch
              %93 = sbr.rel (0) target = $region32
            $region31: #{resnet_features_pool.23} parent=23 // pred_region
              %s95 = ssub.s32 16, 1
              loop: start=0, step=1, limit=1
              $region33: #{resnet_features_pool.23} parent=31 // loop_pre_header
                _
              $region34: #{resnet_features_pool.23} parent=31 // loop_header
                %s97 = sphi 0, %s101
                %p98 = scmp.ge.s32.totalorder %s97, 1
                %s102 = sphi %s87, %s87
                %s103 = sphi %s84, %s84
              $region35: #{resnet_features_pool.23} parent=31 // loop_header_branch
                %100 = sbr.rel (%p98) target = $region39
              $region36: #{resnet_features_pool.23} parent=31 // loop_body
                %v104 = vld [vmem:[%s102] sm:%s95]
                %105 = vst [vmem:[%s103] sm:%s95] %v104
                %v106 = vld [vmem:[%s102 + $0x4] sm:%s95]
                %107 = vst [vmem:[%s103 + $0x4] sm:%s95] %v106
                %v108 = vld [vmem:[%s102 + $0x8] sm:%s95]
                %109 = vst [vmem:[%s103 + $0x8] sm:%s95] %v108
                %v110 = vld [vmem:[%s102 + $0xc] sm:%s95]
                %111 = vst [vmem:[%s103 + $0xc] sm:%s95] %v110
                %v112 = vld [vmem:[%s102 + $0x10] sm:%s95]
                %113 = vst [vmem:[%s103 + $0x10] sm:%s95] %v112
                %v114 = vld [vmem:[%s102 + $0x14] sm:%s95]
                %115 = vst [vmem:[%s103 + $0x14] sm:%s95] %v114
                %v116 = vld [vmem:[%s102 + $0x18] sm:%s95]
                %117 = vst [vmem:[%s103 + $0x18] sm:%s95] %v116
                %v118 = vld [vmem:[%s102 + $0x1c] sm:%s95]
                %119 = vst [vmem:[%s103 + $0x1c] sm:%s95] %v118
                %v120 = vld [vmem:[%s102 + $0x40] sm:%s95]
                %121 = vst [vmem:[%s103 + $0x20] sm:%s95] %v120
                %v122 = vld [vmem:[%s102 + $0x44] sm:%s95]
                %123 = vst [vmem:[%s103 + $0x24] sm:%s95] %v122
                %v124 = vld [vmem:[%s102 + $0x48] sm:%s95]
                %125 = vst [vmem:[%s103 + $0x28] sm:%s95] %v124
                %v126 = vld [vmem:[%s102 + $0x4c] sm:%s95]
                %127 = vst [vmem:[%s103 + $0x2c] sm:%s95] %v126
                %v128 = vld [vmem:[%s102 + $0x50] sm:%s95]
                %129 = vst [vmem:[%s103 + $0x30] sm:%s95] %v128
                %v130 = vld [vmem:[%s102 + $0x54] sm:%s95]
                %131 = vst [vmem:[%s103 + $0x34] sm:%s95] %v130
                %v132 = vld [vmem:[%s102 + $0x58] sm:%s95]
                %133 = vst [vmem:[%s103 + $0x38] sm:%s95] %v132
                %v134 = vld [vmem:[%s102 + $0x5c] sm:%s95]
                %135 = vst [vmem:[%s103 + $0x3c] sm:%s95] %v134
                %v136 = vld [vmem:[%s102 + $0x80] sm:%s95]
                %137 = vst [vmem:[%s103 + $0x40] sm:%s95] %v136
                %v138 = vld [vmem:[%s102 + $0x84] sm:%s95]
                %139 = vst [vmem:[%s103 + $0x44] sm:%s95] %v138
                %v140 = vld [vmem:[%s102 + $0x88] sm:%s95]
                %141 = vst [vmem:[%s103 + $0x48] sm:%s95] %v140
                %v142 = vld [vmem:[%s102 + $0x8c] sm:%s95]
                %143 = vst [vmem:[%s103 + $0x4c] sm:%s95] %v142
                %v144 = vld [vmem:[%s102 + $0x90] sm:%s95]
                %145 = vst [vmem:[%s103 + $0x50] sm:%s95] %v144
                %v146 = vld [vmem:[%s102 + $0x94] sm:%s95]
                %147 = vst [vmem:[%s103 + $0x54] sm:%s95] %v146
                %v148 = vld [vmem:[%s102 + $0x98] sm:%s95]
                %149 = vst [vmem:[%s103 + $0x58] sm:%s95] %v148
                %v150 = vld [vmem:[%s102 + $0x9c] sm:%s95]
                %151 = vst [vmem:[%s103 + $0x5c] sm:%s95] %v150
                %v152 = vld [vmem:[%s102 + $0xc0] sm:%s95]
                %153 = vst [vmem:[%s103 + $0x60] sm:%s95] %v152
                %v154 = vld [vmem:[%s102 + $0xc4] sm:%s95]
                %155 = vst [vmem:[%s103 + $0x64] sm:%s95] %v154
                %v156 = vld [vmem:[%s102 + $0xc8] sm:%s95]
                %157 = vst [vmem:[%s103 + $0x68] sm:%s95] %v156
                %v158 = vld [vmem:[%s102 + $0xcc] sm:%s95]
                %159 = vst [vmem:[%s103 + $0x6c] sm:%s95] %v158
                %v160 = vld [vmem:[%s102 + $0xd0] sm:%s95]
                %161 = vst [vmem:[%s103 + $0x70] sm:%s95] %v160
                %v162 = vld [vmem:[%s102 + $0xd4] sm:%s95]
                %163 = vst [vmem:[%s103 + $0x74] sm:%s95] %v162
                %v164 = vld [vmem:[%s102 + $0xd8] sm:%s95]
                %165 = vst [vmem:[%s103 + $0x78] sm:%s95] %v164
                %v166 = vld [vmem:[%s102 + $0xdc] sm:%s95]
                %167 = vst [vmem:[%s103 + $0x7c] sm:%s95] %v166
                %v168 = vld [vmem:[%s102 + $0x100] sm:%s95]
                %169 = vst [vmem:[%s103 + $0x80] sm:%s95] %v168
                %v170 = vld [vmem:[%s102 + $0x104] sm:%s95]
                %171 = vst [vmem:[%s103 + $0x84] sm:%s95] %v170
                %v172 = vld [vmem:[%s102 + $0x108] sm:%s95]
                %173 = vst [vmem:[%s103 + $0x88] sm:%s95] %v172
                %v174 = vld [vmem:[%s102 + $0x10c] sm:%s95]
                %175 = vst [vmem:[%s103 + $0x8c] sm:%s95] %v174
                %v176 = vld [vmem:[%s102 + $0x110] sm:%s95]
                %177 = vst [vmem:[%s103 + $0x90] sm:%s95] %v176
                %v178 = vld [vmem:[%s102 + $0x114] sm:%s95]
                %179 = vst [vmem:[%s103 + $0x94] sm:%s95] %v178
                %v180 = vld [vmem:[%s102 + $0x118] sm:%s95]
                %181 = vst [vmem:[%s103 + $0x98] sm:%s95] %v180
                %v182 = vld [vmem:[%s102 + $0x11c] sm:%s95]
                %183 = vst [vmem:[%s103 + $0x9c] sm:%s95] %v182
                %v184 = vld [vmem:[%s102 + $0x140] sm:%s95]
                %185 = vst [vmem:[%s103 + $0xa0] sm:%s95] %v184
                %v186 = vld [vmem:[%s102 + $0x144] sm:%s95]
                %187 = vst [vmem:[%s103 + $0xa4] sm:%s95] %v186
                %v188 = vld [vmem:[%s102 + $0x148] sm:%s95]
                %189 = vst [vmem:[%s103 + $0xa8] sm:%s95] %v188
                %v190 = vld [vmem:[%s102 + $0x14c] sm:%s95]
                %191 = vst [vmem:[%s103 + $0xac] sm:%s95] %v190
                %v192 = vld [vmem:[%s102 + $0x150] sm:%s95]
                %193 = vst [vmem:[%s103 + $0xb0] sm:%s95] %v192
                %v194 = vld [vmem:[%s102 + $0x154] sm:%s95]
                %195 = vst [vmem:[%s103 + $0xb4] sm:%s95] %v194
                %v196 = vld [vmem:[%s102 + $0x158] sm:%s95]
                %197 = vst [vmem:[%s103 + $0xb8] sm:%s95] %v196
                %v198 = vld [vmem:[%s102 + $0x15c] sm:%s95]
                %199 = vst [vmem:[%s103 + $0xbc] sm:%s95] %v198
                %v200 = vld [vmem:[%s102 + $0x180] sm:%s95]
                %201 = vst [vmem:[%s103 + $0xc0] sm:%s95] %v200
                %v202 = vld [vmem:[%s102 + $0x184] sm:%s95]
                %203 = vst [vmem:[%s103 + $0xc4] sm:%s95] %v202
                %v204 = vld [vmem:[%s102 + $0x188] sm:%s95]
                %205 = vst [vmem:[%s103 + $0xc8] sm:%s95] %v204
                %v206 = vld [vmem:[%s102 + $0x18c] sm:%s95]
                %207 = vst [vmem:[%s103 + $0xcc] sm:%s95] %v206
                %v208 = vld [vmem:[%s102 + $0x190] sm:%s95]
                %209 = vst [vmem:[%s103 + $0xd0] sm:%s95] %v208
                %v210 = vld [vmem:[%s102 + $0x194] sm:%s95]
                %211 = vst [vmem:[%s103 + $0xd4] sm:%s95] %v210
                %v212 = vld [vmem:[%s102 + $0x198] sm:%s95]
                %213 = vst [vmem:[%s103 + $0xd8] sm:%s95] %v212
                %v214 = vld [vmem:[%s102 + $0x19c] sm:%s95]
                %215 = vst [vmem:[%s103 + $0xdc] sm:%s95] %v214
                %v216 = vld [vmem:[%s102 + $0x1c0] sm:%s95]
                %217 = vst [vmem:[%s103 + $0xe0] sm:%s95] %v216
                %v218 = vld [vmem:[%s102 + $0x1c4] sm:%s95]
                %219 = vst [vmem:[%s103 + $0xe4] sm:%s95] %v218
                %v220 = vld [vmem:[%s102 + $0x1c8] sm:%s95]
                %221 = vst [vmem:[%s103 + $0xe8] sm:%s95] %v220
                %v222 = vld [vmem:[%s102 + $0x1cc] sm:%s95]
                %223 = vst [vmem:[%s103 + $0xec] sm:%s95] %v222
                %v224 = vld [vmem:[%s102 + $0x1d0] sm:%s95]
                %225 = vst [vmem:[%s103 + $0xf0] sm:%s95] %v224
                %v226 = vld [vmem:[%s102 + $0x1d4] sm:%s95]
                %227 = vst [vmem:[%s103 + $0xf4] sm:%s95] %v226
                %v228 = vld [vmem:[%s102 + $0x1d8] sm:%s95]
                %229 = vst [vmem:[%s103 + $0xf8] sm:%s95] %v228
                %v230 = vld [vmem:[%s102 + $0x1dc] sm:%s95]
                %231 = vst [vmem:[%s103 + $0xfc] sm:%s95] %v230
                %v232 = vld [vmem:[%s102 + $0x200] sm:%s95]
                %233 = vst [vmem:[%s103 + $0x100] sm:%s95] %v232
                %v234 = vld [vmem:[%s102 + $0x204] sm:%s95]
                %235 = vst [vmem:[%s103 + $0x104] sm:%s95] %v234
                %v236 = vld [vmem:[%s102 + $0x208] sm:%s95]
                %237 = vst [vmem:[%s103 + $0x108] sm:%s95] %v236
                %v238 = vld [vmem:[%s102 + $0x20c] sm:%s95]
                %239 = vst [vmem:[%s103 + $0x10c] sm:%s95] %v238
                %v240 = vld [vmem:[%s102 + $0x210] sm:%s95]
                %241 = vst [vmem:[%s103 + $0x110] sm:%s95] %v240
                %v242 = vld [vmem:[%s102 + $0x214] sm:%s95]
                %243 = vst [vmem:[%s103 + $0x114] sm:%s95] %v242
                %v244 = vld [vmem:[%s102 + $0x218] sm:%s95]
                %245 = vst [vmem:[%s103 + $0x118] sm:%s95] %v244
                %v246 = vld [vmem:[%s102 + $0x21c] sm:%s95]
                %247 = vst [vmem:[%s103 + $0x11c] sm:%s95] %v246
              $region37: #{resnet_features_pool.23} parent=31 // loop_footer
                %s101 = sadd.s32 1, %s97
              $region38: #{resnet_features_pool.23} parent=31 // loop_footer_branch
                %96 = sbr.rel target = $region34
              $region39: #{resnet_features_pool.23} parent=31 // loop_exit
                _
            $region32: #{resnet_features_pool.23} parent=23 // pred_fallthru
              _
          $region24: #{resnet_features_pool.23} parent=19 // pred_fallthru
            _
          %412 = vnop
        $region20: #{resnet_features_pool.23} parent=15 // pred_fallthru
          _
      $region16: #{resnet_features_pool.23} parent=5 // pred_fallthru
        _
      %p413 = scmp.le.s32.totalorder 1, %s7
      %p414 = scmp.lt.s32.totalorder %s7, 3
      %p415 = pnand %p413, %p414
      %p416 = pneg %p415
      // Predicated region
      $region58: #{resnet_features_pool.23} parent=5 // pred_check
        _
      $region59: #{resnet_features_pool.23} parent=5 // pred_check_branch
        %418 = sbr.rel (%p415) target = $region61
      $region60: #{resnet_features_pool.23} parent=5 // pred_region
        %s419 = ssub.s32 %s7, 1
        %s420 = sand.u32 %s20, 1
        %s421 = sand.u32 %s20, 1
        %s422 = smul.addr %s421, 288
        %s423 = scalar_lea.vmem [#allocation2], %s422
        // Predicated region
        $region62: #{resnet_features_pool.23} parent=60 // pred_check
          %p424 = pneg %p33
        $region63: #{resnet_features_pool.23} parent=60 // pred_check_branch
          %426 = sbr.rel (%p424) target = $region65
        $region64: #{resnet_features_pool.23} parent=60 // pred_region
          _
        $region65: #{resnet_features_pool.23} parent=60 // pred_fallthru
          _
        %s427 = sand.u32 %s20, 1
        %s428 = sand.u32 %s20, 1
        %s429 = smul.addr %s428, 288
        %s430 = scalar_lea.vmem [#allocation2], %s429
        %p431 = pneg %p33
        %p432 = pneg %p30
        %p433 = pneg %p59
        %p434 = pneg %p56
        %s435 = smul.u32 8, %s12
        %p436 = scmp.lt.s32.totalorder %s435, 15
        %s437 = scalar_select %p436, %s435, 15
        %s438 = smul.addr %s437, 4
        %s439 = scalar_lea.vmem %s1, %s438
        %s440 = smul.u32 8, %s12
        %s441 = smul.u32 8, %s12
        %p442 = scmp.lt.s32.totalorder %s441, 15
        %s443 = scalar_select %p442, %s441, 15
        %s444 = smul.addr %s443, 4
        %s445 = scalar_lea.vmem %s1, %s444
        %s446 = smul.u32 8, %s12
        %v447 = vld [vmem:[%s423] sm:$0xf]
        %v448 = vld [vmem:[%s423 + $0x4] sm:$0xf]
        %v449 = vld [vmem:[%s423 + $0x8] sm:$0xf]
        %v450 = vld [vmem:[%s423 + $0xc] sm:$0xf]
        %v451 = vld [vmem:[%s423 + $0x10] sm:$0xf]
        %v452 = vld [vmem:[%s423 + $0x14] sm:$0xf]
        %v453 = vld [vmem:[%s423 + $0x18] sm:$0xf]
        %v454 = vld [vmem:[%s423 + $0x1c] sm:$0xf]
        %v455 = vld [vmem:[%s423 + $0x20] sm:$0xf]
        %v456 = vld [vmem:[%s423 + $0x24] sm:$0xf]
        %v457 = vld [vmem:[%s423 + $0x28] sm:$0xf]
        %v458 = vld [vmem:[%s423 + $0x2c] sm:$0xf]
        %v459 = vld [vmem:[%s423 + $0x30] sm:$0xf]
        %v460 = vld [vmem:[%s423 + $0x34] sm:$0xf]
        %v461 = vld [vmem:[%s423 + $0x38] sm:$0xf]
        %v462 = vld [vmem:[%s423 + $0x3c] sm:$0xf]
        %v463 = vld [vmem:[%s423 + $0x40] sm:$0xf]
        %v464 = vld [vmem:[%s423 + $0x44] sm:$0xf]
        %v465 = vld [vmem:[%s423 + $0x48] sm:$0xf]
        %v466 = vld [vmem:[%s423 + $0x4c] sm:$0xf]
        %v467 = vld [vmem:[%s423 + $0x50] sm:$0xf]
        %v468 = vld [vmem:[%s423 + $0x54] sm:$0xf]
        %v469 = vld [vmem:[%s423 + $0x58] sm:$0xf]
        %v470 = vld [vmem:[%s423 + $0x5c] sm:$0xf]
        %v471 = vld [vmem:[%s423 + $0x60] sm:$0xf]
        %v472 = vld [vmem:[%s423 + $0x64] sm:$0xf]
        %v473 = vld [vmem:[%s423 + $0x68] sm:$0xf]
        %v474 = vld [vmem:[%s423 + $0x6c] sm:$0xf]
        %v475 = vld [vmem:[%s423 + $0x70] sm:$0xf]
        %v476 = vld [vmem:[%s423 + $0x74] sm:$0xf]
        %v477 = vld [vmem:[%s423 + $0x78] sm:$0xf]
        %v478 = vld [vmem:[%s423 + $0x7c] sm:$0xf]
        %v479 = vld [vmem:[%s423 + $0x80] sm:$0xf]
        %v480 = vld [vmem:[%s423 + $0x84] sm:$0xf]
        %v481 = vld [vmem:[%s423 + $0x88] sm:$0xf]
        %v482 = vld [vmem:[%s423 + $0x8c] sm:$0xf]
        %v483 = vld [vmem:[%s423 + $0x90] sm:$0xf]
        %v484 = vld [vmem:[%s423 + $0x94] sm:$0xf]
        %v485 = vld [vmem:[%s423 + $0x98] sm:$0xf]
        %v486 = vld [vmem:[%s423 + $0x9c] sm:$0xf]
        %v487 = vld [vmem:[%s423 + $0xa0] sm:$0xf]
        %v488 = vld [vmem:[%s423 + $0xa4] sm:$0xf]
        %v489 = vld [vmem:[%s423 + $0xa8] sm:$0xf]
        %v490 = vld [vmem:[%s423 + $0xac] sm:$0xf]
        %v491 = vld [vmem:[%s423 + $0xb0] sm:$0xf]
        %v492 = vld [vmem:[%s423 + $0xb4] sm:$0xf]
        %v493 = vld [vmem:[%s423 + $0xb8] sm:$0xf]
        %v494 = vld [vmem:[%s423 + $0xbc] sm:$0xf]
        %v495 = vld [vmem:[%s423 + $0xc0] sm:$0xf]
        %v496 = vld [vmem:[%s423 + $0xc4] sm:$0xf]
        %v497 = vld [vmem:[%s423 + $0xc8] sm:$0xf]
        %v498 = vld [vmem:[%s423 + $0xcc] sm:$0xf]
        %v499 = vld [vmem:[%s423 + $0xd0] sm:$0xf]
        %v500 = vld [vmem:[%s423 + $0xd4] sm:$0xf]
        %v501 = vld [vmem:[%s423 + $0xd8] sm:$0xf]
        %v502 = vld [vmem:[%s423 + $0xdc] sm:$0xf]
        %v503 = vld [vmem:[%s423 + $0xe0] sm:$0xf]
        %v504 = vld [vmem:[%s423 + $0xe4] sm:$0xf]
        %v505 = vld [vmem:[%s423 + $0xe8] sm:$0xf]
        %v506 = vld [vmem:[%s423 + $0xec] sm:$0xf]
        %v507 = vld [vmem:[%s423 + $0xf0] sm:$0xf]
        %v508 = vld [vmem:[%s423 + $0xf4] sm:$0xf]
        %v509 = vld [vmem:[%s423 + $0xf8] sm:$0xf]
        %v510 = vld [vmem:[%s423 + $0xfc] sm:$0xf]
        %v511 = vld [vmem:[%s423 + $0x100] sm:$0xf]
        %v512 = vld [vmem:[%s423 + $0x104] sm:$0xf]
        %v513 = vld [vmem:[%s423 + $0x108] sm:$0xf]
        %v514 = vld [vmem:[%s423 + $0x10c] sm:$0xf]
        %v515 = vld [vmem:[%s423 + $0x110] sm:$0xf]
        %v516 = vld [vmem:[%s423 + $0x114] sm:$0xf]
        %v517 = vld [vmem:[%s423 + $0x118] sm:$0xf]
        %v518 = vld [vmem:[%s423 + $0x11c] sm:$0xf]
        %v519 = vunpack.c.l.bf16 %v447
        %v520 = vunpack.c.l.bf16 %v448
        %v521 = vunpack.c.l.bf16 %v449
        %v522 = vunpack.c.l.bf16 %v450
        %v523 = vunpack.c.l.bf16 %v451
        %v524 = vunpack.c.l.bf16 %v452
        %v525 = vunpack.c.l.bf16 %v453
        %v526 = vunpack.c.l.bf16 %v454
        %v527 = vunpack.c.l.bf16 %v455
        %v528 = vunpack.c.l.bf16 %v456
        %v529 = vunpack.c.l.bf16 %v457
        %v530 = vunpack.c.l.bf16 %v458
        %v531 = vunpack.c.l.bf16 %v459
        %v532 = vunpack.c.l.bf16 %v460
        %v533 = vunpack.c.l.bf16 %v461
        %v534 = vunpack.c.l.bf16 %v462
        %v535 = vunpack.c.l.bf16 %v463
        %v536 = vunpack.c.l.bf16 %v464
        %v537 = vunpack.c.l.bf16 %v465
        %v538 = vunpack.c.l.bf16 %v466
        %v539 = vunpack.c.l.bf16 %v467
        %v540 = vunpack.c.l.bf16 %v468
        %v541 = vunpack.c.l.bf16 %v469
        %v542 = vunpack.c.l.bf16 %v470
        %v543 = vunpack.c.l.bf16 %v471
        %v544 = vunpack.c.l.bf16 %v472
        %v545 = vunpack.c.l.bf16 %v473
        %v546 = vunpack.c.l.bf16 %v474
        %v547 = vunpack.c.l.bf16 %v475
        %v548 = vunpack.c.l.bf16 %v476
        %v549 = vunpack.c.l.bf16 %v477
        %v550 = vunpack.c.l.bf16 %v478
        %v551 = vunpack.c.l.bf16 %v479
        %v552 = vunpack.c.l.bf16 %v480
        %v553 = vunpack.c.l.bf16 %v481
        %v554 = vunpack.c.l.bf16 %v482
        %v555 = vunpack.c.l.bf16 %v483
        %v556 = vunpack.c.l.bf16 %v484
        %v557 = vunpack.c.l.bf16 %v485
        %v558 = vunpack.c.l.bf16 %v486
        %v559 = vunpack.c.l.bf16 %v487
        %v560 = vunpack.c.l.bf16 %v488
        %v561 = vunpack.c.l.bf16 %v489
        %v562 = vunpack.c.l.bf16 %v490
        %v563 = vunpack.c.l.bf16 %v491
        %v564 = vunpack.c.l.bf16 %v492
        %v565 = vunpack.c.l.bf16 %v493
        %v566 = vunpack.c.l.bf16 %v494
        %v567 = vunpack.c.l.bf16 %v495
        %v568 = vunpack.c.l.bf16 %v496
        %v569 = vunpack.c.l.bf16 %v497
        %v570 = vunpack.c.l.bf16 %v498
        %v571 = vunpack.c.l.bf16 %v499
        %v572 = vunpack.c.l.bf16 %v500
        %v573 = vunpack.c.l.bf16 %v501
        %v574 = vunpack.c.l.bf16 %v502
        %v575 = vunpack.c.l.bf16 %v503
        %v576 = vunpack.c.l.bf16 %v504
        %v577 = vunpack.c.l.bf16 %v505
        %v578 = vunpack.c.l.bf16 %v506
        %v579 = vunpack.c.l.bf16 %v507
        %v580 = vunpack.c.l.bf16 %v508
        %v581 = vunpack.c.l.bf16 %v509
        %v582 = vunpack.c.l.bf16 %v510
        %v583 = vunpack.c.l.bf16 %v511
        %v584 = vunpack.c.l.bf16 %v512
        %v585 = vunpack.c.l.bf16 %v513
        %v586 = vunpack.c.l.bf16 %v514
        %v587 = vunpack.c.l.bf16 %v515
        %v588 = vunpack.c.l.bf16 %v516
        %v589 = vunpack.c.l.bf16 %v517
        %v590 = vunpack.c.l.bf16 %v518
        %v591 = vmax.f32 %v519, %v527
        %v592 = vmax.f32 %v591, %v535
        %v593 = vmax.f32 %v592, %v543
        %v594 = vmax.f32 %v593, %v551
        %v595 = vmax.f32 %v594, %v559
        %v596 = vmax.f32 %v595, %v567
        %v597 = vmax.f32 %v596, %v575
        %v598 = vmax.f32 %v597, %v583
        %v599 = vmax.f32 %v520, %v528
        %v600 = vmax.f32 %v599, %v536
        %v601 = vmax.f32 %v600, %v544
        %v602 = vmax.f32 %v601, %v552
        %v603 = vmax.f32 %v602, %v560
        %v604 = vmax.f32 %v603, %v568
        %v605 = vmax.f32 %v604, %v576
        %v606 = vmax.f32 %v605, %v584
        %v607 = vmax.f32 %v521, %v529
        %v608 = vmax.f32 %v607, %v537
        %v609 = vmax.f32 %v608, %v545
        %v610 = vmax.f32 %v609, %v553
        %v611 = vmax.f32 %v610, %v561
        %v612 = vmax.f32 %v611, %v569
        %v613 = vmax.f32 %v612, %v577
        %v614 = vmax.f32 %v613, %v585
        %v615 = vmax.f32 %v522, %v530
        %v616 = vmax.f32 %v615, %v538
        %v617 = vmax.f32 %v616, %v546
        %v618 = vmax.f32 %v617, %v554
        %v619 = vmax.f32 %v618, %v562
        %v620 = vmax.f32 %v619, %v570
        %v621 = vmax.f32 %v620, %v578
        %v622 = vmax.f32 %v621, %v586
        %v623 = vmax.f32 %v523, %v531
        %v624 = vmax.f32 %v623, %v539
        %v625 = vmax.f32 %v624, %v547
        %v626 = vmax.f32 %v625, %v555
        %v627 = vmax.f32 %v626, %v563
        %v628 = vmax.f32 %v627, %v571
        %v629 = vmax.f32 %v628, %v579
        %v630 = vmax.f32 %v629, %v587
        %v631 = vmax.f32 %v524, %v532
        %v632 = vmax.f32 %v631, %v540
        %v633 = vmax.f32 %v632, %v548
        %v634 = vmax.f32 %v633, %v556
        %v635 = vmax.f32 %v634, %v564
        %v636 = vmax.f32 %v635, %v572
        %v637 = vmax.f32 %v636, %v580
        %v638 = vmax.f32 %v637, %v588
        %v639 = vmax.f32 %v525, %v533
        %v640 = vmax.f32 %v639, %v541
        %v641 = vmax.f32 %v640, %v549
        %v642 = vmax.f32 %v641, %v557
        %v643 = vmax.f32 %v642, %v565
        %v644 = vmax.f32 %v643, %v573
        %v645 = vmax.f32 %v644, %v581
        %v646 = vmax.f32 %v645, %v589
        %v647 = vmax.f32 %v526, %v534
        %v648 = vmax.f32 %v647, %v542
        %v649 = vmax.f32 %v648, %v550
        %v650 = vmax.f32 %v649, %v558
        %v651 = vmax.f32 %v650, %v566
        %v652 = vmax.f32 %v651, %v574
        %v653 = vmax.f32 %v652, %v582
        %v654 = vmax.f32 %v653, %v590
        %v655 = vpack.c.bf16 %v598, %v598
        %v656 = vpack.c.bf16 %v606, %v606
        %v657 = vpack.c.bf16 %v614, %v614
        %v658 = vpack.c.bf16 %v622, %v622
        %v659 = vpack.c.bf16 %v630, %v630
        %v660 = vpack.c.bf16 %v638, %v638
        %v661 = vpack.c.bf16 %v646, %v646
        %v662 = vpack.c.bf16 %v654, %v654
        %663 = vst [vmem:[%s445] sm:$0xf] %v655
        %664 = vst [vmem:[%s445 + $0x4] sm:$0xf] %v656
        %665 = vst [vmem:[%s445 + $0x8] sm:$0xf] %v657
        %666 = vst [vmem:[%s445 + $0xc] sm:$0xf] %v658
        %667 = vst [vmem:[%s445 + $0x10] sm:$0xf] %v659
        %668 = vst [vmem:[%s445 + $0x14] sm:$0xf] %v660
        %669 = vst [vmem:[%s445 + $0x18] sm:$0xf] %v661
        %670 = vst [vmem:[%s445 + $0x1c] sm:$0xf] %v662
        %s671 = smul.u32 8, %s12
        %p672 = scmp.lt.s32.totalorder %s671, 15
        %s673 = scalar_select %p672, %s671, 15
        %s674 = smul.addr %s673, 4
        %s675 = scalar_lea.vmem %s1, %s674
        // Predicated region
        $region66: #{resnet_features_pool.23} parent=60 // pred_check
          %p676 = pneg %p56
        $region67: #{resnet_features_pool.23} parent=60 // pred_check_branch
          %678 = sbr.rel (%p676) target = $region69
        $region68: #{resnet_features_pool.23} parent=60 // pred_region
          %s679 = smul.u32 8, %s12
        $region69: #{resnet_features_pool.23} parent=60 // pred_fallthru
          _
      $region61: #{resnet_features_pool.23} parent=5 // pred_fallthru
        _
      %p680 = scmp.le.s32.totalorder 2, %s7
      // Predicated region
      $region70: #{resnet_features_pool.23} parent=5 // pred_check
        %p681 = pneg %p680
      $region71: #{resnet_features_pool.23} parent=5 // pred_check_branch
        %683 = sbr.rel (%p681) target = $region73
      $region72: #{resnet_features_pool.23} parent=5 // pred_region
        %s684 = ssub.s32 %s7, 2
        // Predicated region
        $region74: #{resnet_features_pool.23} parent=72 // pred_check
          %p685 = pneg %p62
        $region75: #{resnet_features_pool.23} parent=72 // pred_check_branch
          %687 = sbr.rel (%p685) target = $region77
        $region76: #{resnet_features_pool.23} parent=72 // pred_region
          %s688 = smul.u32 8, %s13
          %p689 = scmp.lt.s32.totalorder %s688, 15
          %s690 = scalar_select %p689, %s688, 15
          %s691 = smul.addr %s690, 4
          %s692 = scalar_lea.vmem %s1, %s691
        $region77: #{resnet_features_pool.23} parent=72 // pred_fallthru
          _
      $region73: #{resnet_features_pool.23} parent=5 // pred_fallthru
        _
    $region6: #{resnet_features_pool.23} parent=1 // loop_footer
      %s11 = sadd.s32 1, %s7
    $region7: #{resnet_features_pool.23} parent=1 // loop_footer_branch
      %6 = sbr.rel target = $region3
    $region8: #{resnet_features_pool.23} parent=1 // loop_exit
      _

// kernel: resnet_features_pool.24
$region0: #{resnet_features_pool.24}
  #allocation0 [shape = 'u32[]', space=smem, size = 0x4, offset = 0x4, fixed_abs, tag = 'smem constant byte address 0x4 - core index']
  #allocation1 [shape = 'u32[72,128]{1,0:T(1,128)}', space=vmem, size = 0x9000, scoped, tag = 'internal scratch']
  %s0 = inlined_call_operand.vmem [shape: bf16[128,128], index: 0, kind: input, shape index: {}]
  %s1 = inlined_call_operand.vmem [shape: bf16[128,128], index: 1, kind: input, shape index: {}]
  %s2 = inlined_call_operand.vmem [shape: f32[1,128], index: 2, kind: input, shape index: {}]
  %s3 = inlined_call_operand.vmem [shape: bf16[128,128], index: 3, kind: output, shape index: {}]
  %s4 = sld [smem:[#allocation0]]
  $region45: #{resnet_features_pool.24} parent=0
    _
  %s6 = ssub.s32 1, %s4
  %s7 = scalar_select 0, %s6, %s4
  loop: start=0, step=1, limit=4
  $region2: #{resnet_features_pool.24} parent=0 // loop_pre_header
    _
  $region3: #{resnet_features_pool.24} parent=0 // loop_header
    %s9 = sphi 0, %s13
    %p10 = scmp.ge.s32.totalorder %s9, 4
    %s19 = sphi 0, %s21
    %s22 = sphi 0, %s19
    %s23 = sphi 0, %s22
    %s39 = sphi 0, %s23
    %s43 = sphi 0, %s43
    %s45 = sphi 0, %s43
    %s46 = sphi 0, %s45
    %s60 = sphi 0, %s46
    %s64 = sphi 0, %s64
    %s66 = sphi 0, %s64
    %s67 = sphi 0, %s66
    %s81 = sphi 0, %s67
    %s87 = sphi 0, %s89
    %s90 = sphi 0, %s87
    %s91 = sphi 0, %s90
    %s107 = sphi 0, %s91
  $region4: #{resnet_features_pool.24} parent=0 // loop_header_branch
    %12 = sbr.rel (%p10) target = $region8
  $region5: #{resnet_features_pool.24} parent=0 // loop_body
    %s14 = ssub.s32 %s9, 1
    %s15 = ssub.s32 %s9, 2
    %s16 = sadd.s32 %s9, 1
    %s17 = ssub.s32 %s9, %s16
    %p18 = scmp.eq.s32.totalorder %s17, 0
    %s20 = sadd.s32 %s19, 1
    %s21 = scalar_select %p18, %s19, %s20
    %p24 = pneg %p18
    %p25 = scmp.eq.s32.totalorder %s9, 1
    %p26 = por %p24, %p25
    %p27 = scmp.ne.s32.totalorder %s19, %s22
    %p28 = scmp.eq.s32.totalorder %s9, 0
    %p29 = por %p27, %p28
    %p30 = scmp.ne.s32.totalorder %s19, %s22
    %p31 = scmp.eq.s32.totalorder %s14, 1
    %p32 = por %p30, %p31
    %p33 = scmp.ne.s32.totalorder %s22, %s23
    %p34 = scmp.eq.s32.totalorder %s14, 0
    %p35 = por %p33, %p34
    %p36 = scmp.ne.s32.totalorder %s22, %s23
    %p37 = scmp.eq.s32.totalorder %s15, 1
    %p38 = por %p36, %p37
    %p40 = scmp.ne.s32.totalorder %s23, %s39
    %p41 = scmp.eq.s32.totalorder %s15, 0
    %p42 = por %p40, %p41
    %s44 = sadd.s32 %s43, 1
    %p47 = scmp.eq.s32.totalorder %s9, 1
    %p48 = scmp.ne.s32.totalorder %s43, %s45
    %p49 = scmp.eq.s32.totalorder %s9, 0
    %p50 = por %p48, %p49
    %p51 = scmp.ne.s32.totalorder %s43, %s45
    %p52 = scmp.eq.s32.totalorder %s14, 1
    %p53 = por %p51, %p52
    %p54 = scmp.ne.s32.totalorder %s45, %s46
    %p55 = scmp.eq.s32.totalorder %s14, 0
    %p56 = por %p54, %p55
    %p57 = scmp.ne.s32.totalorder %s45, %s46
    %p58 = scmp.eq.s32.totalorder %s15, 1
    %p59 = por %p57, %p58
    %p61 = scmp.ne.s32.totalorder %s46, %s60
    %p62 = scmp.eq.s32.totalorder %s15, 0
    %p63 = por %p61, %p62
    %s65 = sadd.s32 %s64, 1
    %p68 = scmp.eq.s32.totalorder %s9, 1
    %p69 = scmp.ne.s32.totalorder %s64, %s66
    %p70 = scmp.eq.s32.totalorder %s9, 0
    %p71 = por %p69, %p70
    %p72 = scmp.ne.s32.totalorder %s64, %s66
    %p73 = scmp.eq.s32.totalorder %s14, 1
    %p74 = por %p72, %p73
    %p75 = scmp.ne.s32.totalorder %s66, %s67
    %p76 = scmp.eq.s32.totalorder %s14, 0
    %p77 = por %p75, %p76
    %p78 = scmp.ne.s32.totalorder %s66, %s67
    %p79 = scmp.eq.s32.totalorder %s15, 1
    %p80 = por %p78, %p79
    %p82 = scmp.ne.s32.totalorder %s67, %s81
    %p83 = scmp.eq.s32.totalorder %s15, 0
    %p84 = por %p82, %p83
    %s85 = ssub.s32 %s9, %s16
    %p86 = scmp.eq.s32.totalorder %s85, 0
    %s88 = sadd.s32 %s87, 1
    %s89 = scalar_select %p86, %s87, %s88
    %p92 = pneg %p86
    %p93 = scmp.eq.s32.totalorder %s9, 1
    %p94 = por %p92, %p93
    %p95 = scmp.ne.s32.totalorder %s87, %s90
    %p96 = scmp.eq.s32.totalorder %s9, 0
    %p97 = por %p95, %p96
    %p98 = scmp.ne.s32.totalorder %s87, %s90
    %p99 = scmp.eq.s32.totalorder %s14, 1
    %p100 = por %p98, %p99
    %p101 = scmp.ne.s32.totalorder %s90, %s91
    %p102 = scmp.eq.s32.totalorder %s14, 0
    %p103 = por %p101, %p102
    %p104 = scmp.ne.s32.totalorder %s90, %s91
    %p105 = scmp.eq.s32.totalorder %s15, 1
    %p106 = por %p104, %p105
    %p108 = scmp.ne.s32.totalorder %s91, %s107
    %p109 = scmp.eq.s32.totalorder %s15, 0
    %p110 = por %p108, %p109
    %p111 = scmp.le.s32.totalorder 1, %s9
    %p112 = scmp.lt.s32.totalorder %s9, 3
    %p113 = pnand %p111, %p112
    %p114 = pneg %p113
    // Predicated region
    $region9: #{resnet_features_pool.24} parent=5 // pred_check
      _
    $region10: #{resnet_features_pool.24} parent=5 // pred_check_branch
      %116 = sbr.rel (%p113) target = $region12
    $region11: #{resnet_features_pool.24} parent=5 // pred_region
      %s117 = ssub.s32 %s9, 1
      // Predicated region
      $region13: #{resnet_features_pool.24} parent=11 // pred_check
        %p118 = pneg %p56
      $region14: #{resnet_features_pool.24} parent=11 // pred_check_branch
        %120 = sbr.rel (%p118) target = $region16
      $region15: #{resnet_features_pool.24} parent=11 // pred_region
        _
      $region16: #{resnet_features_pool.24} parent=11 // pred_fallthru
        _
      // Predicated region
      $region17: #{resnet_features_pool.24} parent=11 // pred_check
        %p121 = pneg %p77
      $region18: #{resnet_features_pool.24} parent=11 // pred_check_branch
        %123 = sbr.rel (%p121) target = $region20
      $region19: #{resnet_features_pool.24} parent=11 // pred_region
        _
      $region20: #{resnet_features_pool.24} parent=11 // pred_fallthru
        _
    $region12: #{resnet_features_pool.24} parent=5 // pred_fallthru
      _
    %p124 = scmp.lt.s32.totalorder %s9, 2
    // Predicated region
    $region21: #{resnet_features_pool.24} parent=5 // pred_check
      %p125 = pneg %p124
    $region22: #{resnet_features_pool.24} parent=5 // pred_check_branch
      %127 = sbr.rel (%p125) target = $region24
    $region23: #{resnet_features_pool.24} parent=5 // pred_region
      // Predicated region
      $region25: #{resnet_features_pool.24} parent=23 // pred_check
        %p128 = pneg %p29
      $region26: #{resnet_features_pool.24} parent=23 // pred_check_branch
        %130 = sbr.rel (%p128) target = $region28
      $region27: #{resnet_features_pool.24} parent=23 // pred_region
        %s131 = smul.u32 8, %s9
        %p132 = scmp.lt.s32.totalorder %s131, 15
        %s133 = scalar_select %p132, %s131, 15
        %s134 = smul.addr %s133, 4
        %s135 = scalar_lea.vmem %s0, %s134
        %s136 = smul.u32 8, %s9
      $region28: #{resnet_features_pool.24} parent=23 // pred_fallthru
        _
    $region24: #{resnet_features_pool.24} parent=5 // pred_fallthru
      _
    %p137 = scmp.le.s32.totalorder 1, %s9
    %p138 = scmp.lt.s32.totalorder %s9, 3
    %p139 = pnand %p137, %p138
    %p140 = pneg %p139
    // Predicated region
    $region29: #{resnet_features_pool.24} parent=5 // pred_check
      _
    $region30: #{resnet_features_pool.24} parent=5 // pred_check_branch
      %142 = sbr.rel (%p139) target = $region32
    $region31: #{resnet_features_pool.24} parent=5 // pred_region
      %s143 = ssub.s32 %s9, 1
      %s144 = smul.u32 8, %s14
      %p145 = scmp.lt.s32.totalorder %s144, 15
      %s146 = scalar_select %p145, %s144, 15
      %s147 = smul.addr %s146, 4
      %s148 = scalar_lea.vmem %s0, %s147
      %p149 = pneg %p35
      %p150 = pneg %p32
      %p151 = pneg %p56
      %p152 = pneg %p53
      %p153 = pneg %p77
      %p154 = pneg %p74
      %p155 = pneg %p103
      %p156 = pneg %p100
      %s157 = smul.u32 8, %s14
      %p158 = scmp.lt.s32.totalorder %s157, 15
      %s159 = scalar_select %p158, %s157, 15
      %s160 = smul.addr %s159, 4
      %s161 = scalar_lea.vmem %s3, %s160
      %s162 = smul.u32 8, %s14
      %p163 = scmp.lt.s32.totalorder %s162, 15
      %s164 = scalar_select %p163, %s162, 15
      %s165 = smul.addr %s164, 4
      %s166 = scalar_lea.vmem %s0, %s165
      %s167 = smul.u32 8, %s14
      %s168 = smul.u32 8, %s14
      %p169 = scmp.lt.s32.totalorder %s168, 15
      %s170 = scalar_select %p169, %s168, 15
      %s171 = smul.addr %s170, 4
      %s172 = scalar_lea.vmem %s3, %s171
      %s173 = smul.u32 8, %s14
      %v174 = vld [vmem:[%s166] sm:$0xf]
      %v175 = vld [vmem:[%s166 + $0x4] sm:$0xf]
      %v176 = vld [vmem:[%s166 + $0x8] sm:$0xf]
      %v177 = vld [vmem:[%s166 + $0xc] sm:$0xf]
      %v178 = vld [vmem:[%s166 + $0x10] sm:$0xf]
      %v179 = vld [vmem:[%s166 + $0x14] sm:$0xf]
      %v180 = vld [vmem:[%s166 + $0x18] sm:$0xf]
      %v181 = vld [vmem:[%s166 + $0x1c] sm:$0xf]
      %v182 = vld [vmem:[%s1] sm:$0xf]
      %v183 = vld [vmem:[%s1 + $0x4] sm:$0xf]
      %v184 = vld [vmem:[%s1 + $0x8] sm:$0xf]
      %v185 = vld [vmem:[%s1 + $0xc] sm:$0xf]
      %v186 = vld [vmem:[%s1 + $0x10] sm:$0xf]
      %v187 = vld [vmem:[%s1 + $0x14] sm:$0xf]
      %v188 = vld [vmem:[%s1 + $0x18] sm:$0xf]
      %v189 = vld [vmem:[%s1 + $0x1c] sm:$0xf]
      %v190 = vld [vmem:[%s1 + $0x20] sm:$0xf]
      %v191 = vld [vmem:[%s1 + $0x24] sm:$0xf]
      %v192 = vld [vmem:[%s1 + $0x28] sm:$0xf]
      %v193 = vld [vmem:[%s1 + $0x2c] sm:$0xf]
      %v194 = vld [vmem:[%s1 + $0x30] sm:$0xf]
      %v195 = vld [vmem:[%s1 + $0x34] sm:$0xf]
      %v196 = vld [vmem:[%s1 + $0x38] sm:$0xf]
      %v197 = vld [vmem:[%s1 + $0x3c] sm:$0xf]
      %v198 = vld [vmem:[%s2] sm:$0x1]
      %v200 = vperm.slane %v198, 0
      %v210 = vunpack.c.l.b16 %v174
      %v211 = vunpack.c.l.b16 %v175
      %v212 = vunpack.c.l.b16 %v176
      %v213 = vunpack.c.l.b16 %v177
      %v214 = vunpack.c.l.b16 %v178
      %v215 = vunpack.c.l.b16 %v179
      %v216 = vunpack.c.l.b16 %v180
      %v217 = vunpack.c.l.b16 %v181
      %v218 = vpack.c.b16 %v211, %v210
      %v219 = vpack.c.b16 %v213, %v212
      %v220 = vpack.c.b16 %v215, %v214
      %v221 = vpack.c.b16 %v217, %v216
      %v242 = vunpack.c.l.b16 %v182
      %v243 = vunpack.c.l.b16 %v183
      %v244 = vunpack.c.l.b16 %v184
      %v245 = vunpack.c.l.b16 %v185
      %v246 = vunpack.c.l.b16 %v186
      %v247 = vunpack.c.l.b16 %v187
      %v248 = vunpack.c.l.b16 %v188
      %v249 = vunpack.c.l.b16 %v189
      %v250 = vunpack.c.l.b16 %v190
      %v251 = vunpack.c.l.b16 %v191
      %v252 = vunpack.c.l.b16 %v192
      %v253 = vunpack.c.l.b16 %v193
      %v254 = vunpack.c.l.b16 %v194
      %v255 = vunpack.c.l.b16 %v195
      %v256 = vunpack.c.l.b16 %v196
      %v257 = vunpack.c.l.b16 %v197
      %v258 = vpack.c.b16 %v243, %v242
      %v259 = vpack.c.b16 %v245, %v244
      %v260 = vpack.c.b16 %v247, %v246
      %v261 = vpack.c.b16 %v249, %v248
      %v262 = vpack.c.b16 %v251, %v250
      %v263 = vpack.c.b16 %v253, %v252
      %v264 = vpack.c.b16 %v255, %v254
      %v265 = vpack.c.b16 %v257, %v256
      %274 = vmatpush.bf16.msra.mxu0 %v265
      %275 = vmatpush.bf16.msra.mxu0 %v264
      %276 = vmatpush.bf16.msra.mxu0 %v263
      %277 = vmatpush.bf16.msra.mxu0 %v262
      %278 = vmatpush.bf16.msra.mxu0 %v261
      %279 = vmatpush.bf16.msra.mxu0 %v260
      %280 = vmatpush.bf16.msra.mxu0 %v259
      %281 = vmatpush.bf16.msra.mxu0 %v258
      %282 = vmatmul.bf16.gmra.mxu0 %v218
      %v283 = vpop.f32.mrf.mxu0
      %v284 = vadd.f32 %v200, %v283
      %v285 = vpop.f32.mrf.mxu0
      %v286 = vadd.f32 %v200, %v285
      %287 = vmatmul.bf16.gmra.mxu0 %v219
      %v288 = vpop.f32.mrf.mxu0
      %v289 = vadd.f32 %v200, %v288
      %v290 = vpop.f32.mrf.mxu0
      %v291 = vadd.f32 %v200, %v290
      %292 = vmatmul.bf16.gmra.mxu0 %v220
      %v293 = vpop.f32.mrf.mxu0
      %v294 = vadd.f32 %v200, %v293
      %v295 = vpop.f32.mrf.mxu0
      %v296 = vadd.f32 %v200, %v295
      %297 = vmatmul.bf16.gmra.mxu0 %v221
      %v298 = vpop.f32.mrf.mxu0
      %v299 = vadd.f32 %v200, %v298
      %v300 = vpop.f32.mrf.mxu0
      %v301 = vadd.f32 %v200, %v300
      %302 = vdwg.mxu0
      %v303 = vmax.f32 %v284, 0.0
      %v304 = vmax.f32 %v286, 0.0
      %v305 = vmax.f32 %v289, 0.0
      %v306 = vmax.f32 %v291, 0.0
      %v307 = vmax.f32 %v294, 0.0
      %v308 = vmax.f32 %v296, 0.0
      %v309 = vmax.f32 %v299, 0.0
      %v310 = vmax.f32 %v301, 0.0
      %v311 = vpack.c.bf16 %v303, %v303
      %v312 = vpack.c.bf16 %v304, %v304
      %v313 = vpack.c.bf16 %v305, %v305
      %v314 = vpack.c.bf16 %v306, %v306
      %v315 = vpack.c.bf16 %v307, %v307
      %v316 = vpack.c.bf16 %v308, %v308
      %v317 = vpack.c.bf16 %v309, %v309
      %v318 = vpack.c.bf16 %v310, %v310
      %319 = vst [vmem:[%s172] sm:$0xf] %v311
      %320 = vst [vmem:[%s172 + $0x4] sm:$0xf] %v312
      %321 = vst [vmem:[%s172 + $0x8] sm:$0xf] %v313
      %322 = vst [vmem:[%s172 + $0xc] sm:$0xf] %v314
      %323 = vst [vmem:[%s172 + $0x10] sm:$0xf] %v315
      %324 = vst [vmem:[%s172 + $0x14] sm:$0xf] %v316
      %325 = vst [vmem:[%s172 + $0x18] sm:$0xf] %v317
      %326 = vst [vmem:[%s172 + $0x1c] sm:$0xf] %v318
      %s327 = smul.u32 8, %s14
      %p328 = scmp.lt.s32.totalorder %s327, 15
      %s329 = scalar_select %p328, %s327, 15
      %s330 = smul.addr %s329, 4
      %s331 = scalar_lea.vmem %s3, %s330
      // Predicated region
      $region33: #{resnet_features_pool.24} parent=31 // pred_check
        %p332 = pneg %p100
      $region34: #{resnet_features_pool.24} parent=31 // pred_check_branch
        %334 = sbr.rel (%p332) target = $region36
      $region35: #{resnet_features_pool.24} parent=31 // pred_region
        %s335 = smul.u32 8, %s14
      $region36: #{resnet_features_pool.24} parent=31 // pred_fallthru
        _
    $region32: #{resnet_features_pool.24} parent=5 // pred_fallthru
      _
    %p336 = scmp.le.s32.totalorder 2, %s9
    // Predicated region
    $region37: #{resnet_features_pool.24} parent=5 // pred_check
      %p337 = pneg %p336
    $region38: #{resnet_features_pool.24} parent=5 // pred_check_branch
      %339 = sbr.rel (%p337) target = $region40
    $region39: #{resnet_features_pool.24} parent=5 // pred_region
      %s340 = ssub.s32 %s9, 2
      // Predicated region
      $region41: #{resnet_features_pool.24} parent=39 // pred_check
        %p341 = pneg %p106
      $region42: #{resnet_features_pool.24} parent=39 // pred_check_branch
        %343 = sbr.rel (%p341) target = $region44
      $region43: #{resnet_features_pool.24} parent=39 // pred_region
        %s344 = smul.u32 8, %s15
        %p345 = scmp.lt.s32.totalorder %s344, 15
        %s346 = scalar_select %p345, %s344, 15
        %s347 = smul.addr %s346, 4
        %s348 = scalar_lea.vmem %s3, %s347
      $region44: #{resnet_features_pool.24} parent=39 // pred_fallthru
        _
    $region40: #{resnet_features_pool.24} parent=5 // pred_fallthru
      _
  $region6: #{resnet_features_pool.24} parent=0 // loop_footer
    %s13 = sadd.s32 1, %s9
  $region7: #{resnet_features_pool.24} parent=0 // loop_footer_branch
    %8 = sbr.rel target = $region3
  $region8: #{resnet_features_pool.24} parent=0 // loop_exit
    _

// kernel: resnet_features_pool.25
$region0: #{resnet_features_pool.25}
  #allocation0 [shape = 'u32[]', space=smem, size = 0x4, offset = 0x4, fixed_abs, tag = 'smem constant byte address 0x4 - core index']
  #allocation1 [shape = 'u32[72,128]{1,0:T(1,128)}', space=vmem, size = 0x9000, scoped, tag = 'internal scratch']
  %s0 = inlined_call_operand.vmem [shape: bf16[128,128], index: 0, kind: input, shape index: {}]
  %s1 = inlined_call_operand.vmem [shape: bf16[128,128], index: 1, kind: input, shape index: {}]
  %s2 = inlined_call_operand.vmem [shape: f32[1,128], index: 2, kind: input, shape index: {}]
  %s3 = inlined_call_operand.vmem [shape: bf16[128,128], index: 3, kind: input, shape index: {}]
  %s4 = inlined_call_operand.vmem [shape: bf16[128,128], index: 4, kind: output, shape index: {}]
  %s5 = sld [smem:[#allocation0]]
  $region49: #{resnet_features_pool.25} parent=0
    _
  %s7 = ssub.s32 1, %s5
  %s8 = scalar_select 0, %s7, %s5
  loop: start=0, step=1, limit=4
  $region2: #{resnet_features_pool.25} parent=0 // loop_pre_header
    _
  $region3: #{resnet_features_pool.25} parent=0 // loop_header
    %s10 = sphi 0, %s14
    %p11 = scmp.ge.s32.totalorder %s10, 4
    %s20 = sphi 0, %s22
    %s23 = sphi 0, %s20
    %s24 = sphi 0, %s23
    %s40 = sphi 0, %s24
    %s44 = sphi 0, %s44
    %s46 = sphi 0, %s44
    %s47 = sphi 0, %s46
    %s61 = sphi 0, %s47
    %s65 = sphi 0, %s65
    %s67 = sphi 0, %s65
    %s68 = sphi 0, %s67
    %s82 = sphi 0, %s68
    %s88 = sphi 0, %s90
    %s91 = sphi 0, %s88
    %s92 = sphi 0, %s91
    %s108 = sphi 0, %s92
    %s114 = sphi 0, %s116
    %s117 = sphi 0, %s114
    %s118 = sphi 0, %s117
    %s134 = sphi 0, %s118
  $region4: #{resnet_features_pool.25} parent=0 // loop_header_branch
    %13 = sbr.rel (%p11) target = $region8
  $region5: #{resnet_features_pool.25} parent=0 // loop_body
    %s15 = ssub.s32 %s10, 1
    %s16 = ssub.s32 %s10, 2
    %s17 = sadd.s32 %s10, 1
    %s18 = ssub.s32 %s10, %s17
    %p19 = scmp.eq.s32.totalorder %s18, 0
    %s21 = sadd.s32 %s20, 1
    %s22 = scalar_select %p19, %s20, %s21
    %p25 = pneg %p19
    %p26 = scmp.eq.s32.totalorder %s10, 1
    %p27 = por %p25, %p26
    %p28 = scmp.ne.s32.totalorder %s20, %s23
    %p29 = scmp.eq.s32.totalorder %s10, 0
    %p30 = por %p28, %p29
    %p31 = scmp.ne.s32.totalorder %s20, %s23
    %p32 = scmp.eq.s32.totalorder %s15, 1
    %p33 = por %p31, %p32
    %p34 = scmp.ne.s32.totalorder %s23, %s24
    %p35 = scmp.eq.s32.totalorder %s15, 0
    %p36 = por %p34, %p35
    %p37 = scmp.ne.s32.totalorder %s23, %s24
    %p38 = scmp.eq.s32.totalorder %s16, 1
    %p39 = por %p37, %p38
    %p41 = scmp.ne.s32.totalorder %s24, %s40
    %p42 = scmp.eq.s32.totalorder %s16, 0
    %p43 = por %p41, %p42
    %s45 = sadd.s32 %s44, 1
    %p48 = scmp.eq.s32.totalorder %s10, 1
    %p49 = scmp.ne.s32.totalorder %s44, %s46
    %p50 = scmp.eq.s32.totalorder %s10, 0
    %p51 = por %p49, %p50
    %p52 = scmp.ne.s32.totalorder %s44, %s46
    %p53 = scmp.eq.s32.totalorder %s15, 1
    %p54 = por %p52, %p53
    %p55 = scmp.ne.s32.totalorder %s46, %s47
    %p56 = scmp.eq.s32.totalorder %s15, 0
    %p57 = por %p55, %p56
    %p58 = scmp.ne.s32.totalorder %s46, %s47
    %p59 = scmp.eq.s32.totalorder %s16, 1
    %p60 = por %p58, %p59
    %p62 = scmp.ne.s32.totalorder %s47, %s61
    %p63 = scmp.eq.s32.totalorder %s16, 0
    %p64 = por %p62, %p63
    %s66 = sadd.s32 %s65, 1
    %p69 = scmp.eq.s32.totalorder %s10, 1
    %p70 = scmp.ne.s32.totalorder %s65, %s67
    %p71 = scmp.eq.s32.totalorder %s10, 0
    %p72 = por %p70, %p71
    %p73 = scmp.ne.s32.totalorder %s65, %s67
    %p74 = scmp.eq.s32.totalorder %s15, 1
    %p75 = por %p73, %p74
    %p76 = scmp.ne.s32.totalorder %s67, %s68
    %p77 = scmp.eq.s32.totalorder %s15, 0
    %p78 = por %p76, %p77
    %p79 = scmp.ne.s32.totalorder %s67, %s68
    %p80 = scmp.eq.s32.totalorder %s16, 1
    %p81 = por %p79, %p80
    %p83 = scmp.ne.s32.totalorder %s68, %s82
    %p84 = scmp.eq.s32.totalorder %s16, 0
    %p85 = por %p83, %p84
    %s86 = ssub.s32 %s10, %s17
    %p87 = scmp.eq.s32.totalorder %s86, 0
    %s89 = sadd.s32 %s88, 1
    %s90 = scalar_select %p87, %s88, %s89
    %p93 = pneg %p87
    %p94 = scmp.eq.s32.totalorder %s10, 1
    %p95 = por %p93, %p94
    %p96 = scmp.ne.s32.totalorder %s88, %s91
    %p97 = scmp.eq.s32.totalorder %s10, 0
    %p98 = por %p96, %p97
    %p99 = scmp.ne.s32.totalorder %s88, %s91
    %p100 = scmp.eq.s32.totalorder %s15, 1
    %p101 = por %p99, %p100
    %p102 = scmp.ne.s32.totalorder %s91, %s92
    %p103 = scmp.eq.s32.totalorder %s15, 0
    %p104 = por %p102, %p103
    %p105 = scmp.ne.s32.totalorder %s91, %s92
    %p106 = scmp.eq.s32.totalorder %s16, 1
    %p107 = por %p105, %p106
    %p109 = scmp.ne.s32.totalorder %s92, %s108
    %p110 = scmp.eq.s32.totalorder %s16, 0
    %p111 = por %p109, %p110
    %s112 = ssub.s32 %s10, %s17
    %p113 = scmp.eq.s32.totalorder %s112, 0
    %s115 = sadd.s32 %s114, 1
    %s116 = scalar_select %p113, %s114, %s115
    %p119 = pneg %p113
    %p120 = scmp.eq.s32.totalorder %s10, 1
    %p121 = por %p119, %p120
    %p122 = scmp.ne.s32.totalorder %s114, %s117
    %p123 = scmp.eq.s32.totalorder %s10, 0
    %p124 = por %p122, %p123
    %p125 = scmp.ne.s32.totalorder %s114, %s117
    %p126 = scmp.eq.s32.totalorder %s15, 1
    %p127 = por %p125, %p126
    %p128 = scmp.ne.s32.totalorder %s117, %s118
    %p129 = scmp.eq.s32.totalorder %s15, 0
    %p130 = por %p128, %p129
    %p131 = scmp.ne.s32.totalorder %s117, %s118
    %p132 = scmp.eq.s32.totalorder %s16, 1
    %p133 = por %p131, %p132
    %p135 = scmp.ne.s32.totalorder %s118, %s134
    %p136 = scmp.eq.s32.totalorder %s16, 0
    %p137 = por %p135, %p136
    %p138 = scmp.le.s32.totalorder 1, %s10
    %p139 = scmp.lt.s32.totalorder %s10, 3
    %p140 = pnand %p138, %p139
    %p141 = pneg %p140
    // Predicated region
    $region9: #{resnet_features_pool.25} parent=5 // pred_check
      _
    $region10: #{resnet_features_pool.25} parent=5 // pred_check_branch
      %143 = sbr.rel (%p140) target = $region12
    $region11: #{resnet_features_pool.25} parent=5 // pred_region
      %s144 = ssub.s32 %s10, 1
      // Predicated region
      $region13: #{resnet_features_pool.25} parent=11 // pred_check
        %p145 = pneg %p57
      $region14: #{resnet_features_pool.25} parent=11 // pred_check_branch
        %147 = sbr.rel (%p145) target = $region16
      $region15: #{resnet_features_pool.25} parent=11 // pred_region
        _
      $region16: #{resnet_features_pool.25} parent=11 // pred_fallthru
        _
      // Predicated region
      $region17: #{resnet_features_pool.25} parent=11 // pred_check
        %p148 = pneg %p78
      $region18: #{resnet_features_pool.25} parent=11 // pred_check_branch
        %150 = sbr.rel (%p148) target = $region20
      $region19: #{resnet_features_pool.25} parent=11 // pred_region
        _
      $region20: #{resnet_features_pool.25} parent=11 // pred_fallthru
        _
    $region12: #{resnet_features_pool.25} parent=5 // pred_fallthru
      _
    %p151 = scmp.lt.s32.totalorder %s10, 2
    // Predicated region
    $region21: #{resnet_features_pool.25} parent=5 // pred_check
      %p152 = pneg %p151
    $region22: #{resnet_features_pool.25} parent=5 // pred_check_branch
      %154 = sbr.rel (%p152) target = $region24
    $region23: #{resnet_features_pool.25} parent=5 // pred_region
      // Predicated region
      $region25: #{resnet_features_pool.25} parent=23 // pred_check
        %p155 = pneg %p30
      $region26: #{resnet_features_pool.25} parent=23 // pred_check_branch
        %157 = sbr.rel (%p155) target = $region28
      $region27: #{resnet_features_pool.25} parent=23 // pred_region
        %s158 = smul.u32 8, %s10
        %p159 = scmp.lt.s32.totalorder %s158, 15
        %s160 = scalar_select %p159, %s158, 15
        %s161 = smul.addr %s160, 4
        %s162 = scalar_lea.vmem %s0, %s161
        %s163 = smul.u32 8, %s10
      $region28: #{resnet_features_pool.25} parent=23 // pred_fallthru
        _
      // Predicated region
      $region29: #{resnet_features_pool.25} parent=23 // pred_check
        %p164 = pneg %p98
      $region30: #{resnet_features_pool.25} parent=23 // pred_check_branch
        %166 = sbr.rel (%p164) target = $region32
      $region31: #{resnet_features_pool.25} parent=23 // pred_region
        %s167 = smul.u32 8, %s10
        %p168 = scmp.lt.s32.totalorder %s167, 15
        %s169 = scalar_select %p168, %s167, 15
        %s170 = smul.addr %s169, 4
        %s171 = scalar_lea.vmem %s3, %s170
        %s172 = smul.u32 8, %s10
      $region32: #{resnet_features_pool.25} parent=23 // pred_fallthru
        _
    $region24: #{resnet_features_pool.25} parent=5 // pred_fallthru
      _
    %p173 = scmp.le.s32.totalorder 1, %s10
    %p174 = scmp.lt.s32.totalorder %s10, 3
    %p175 = pnand %p173, %p174
    %p176 = pneg %p175
    // Predicated region
    $region33: #{resnet_features_pool.25} parent=5 // pred_check
      _
    $region34: #{resnet_features_pool.25} parent=5 // pred_check_branch
      %178 = sbr.rel (%p175) target = $region36
    $region35: #{resnet_features_pool.25} parent=5 // pred_region
      %s179 = ssub.s32 %s10, 1
      %s180 = smul.u32 8, %s15
      %p181 = scmp.lt.s32.totalorder %s180, 15
      %s182 = scalar_select %p181, %s180, 15
      %s183 = smul.addr %s182, 4
      %s184 = scalar_lea.vmem %s0, %s183
      %p185 = pneg %p36
      %p186 = pneg %p33
      %p187 = pneg %p57
      %p188 = pneg %p54
      %p189 = pneg %p78
      %p190 = pneg %p75
      %s191 = smul.u32 8, %s15
      %p192 = scmp.lt.s32.totalorder %s191, 15
      %s193 = scalar_select %p192, %s191, 15
      %s194 = smul.addr %s193, 4
      %s195 = scalar_lea.vmem %s3, %s194
      %p196 = pneg %p104
      %p197 = pneg %p101
      %p198 = pneg %p130
      %p199 = pneg %p127
      %s200 = smul.u32 8, %s15
      %p201 = scmp.lt.s32.totalorder %s200, 15
      %s202 = scalar_select %p201, %s200, 15
      %s203 = smul.addr %s202, 4
      %s204 = scalar_lea.vmem %s4, %s203
      %s205 = smul.u32 8, %s15
      %p206 = scmp.lt.s32.totalorder %s205, 15
      %s207 = scalar_select %p206, %s205, 15
      %s208 = smul.addr %s207, 4
      %s209 = scalar_lea.vmem %s0, %s208
      %s210 = smul.u32 8, %s15
      %s211 = smul.u32 8, %s15
      %p212 = scmp.lt.s32.totalorder %s211, 15
      %s213 = scalar_select %p212, %s211, 15
      %s214 = smul.addr %s213, 4
      %s215 = scalar_lea.vmem %s3, %s214
      %s216 = smul.u32 8, %s15
      %s217 = smul.u32 8, %s15
      %p218 = scmp.lt.s32.totalorder %s217, 15
      %s219 = scalar_select %p218, %s217, 15
      %s220 = smul.addr %s219, 4
      %s221 = scalar_lea.vmem %s4, %s220
      %s222 = smul.u32 8, %s15
      %v223 = vld [vmem:[%s209] sm:$0xf]
      %v224 = vld [vmem:[%s209 + $0x4] sm:$0xf]
      %v225 = vld [vmem:[%s209 + $0x8] sm:$0xf]
      %v226 = vld [vmem:[%s209 + $0xc] sm:$0xf]
      %v227 = vld [vmem:[%s209 + $0x10] sm:$0xf]
      %v228 = vld [vmem:[%s209 + $0x14] sm:$0xf]
      %v229 = vld [vmem:[%s209 + $0x18] sm:$0xf]
      %v230 = vld [vmem:[%s209 + $0x1c] sm:$0xf]
      %v231 = vld [vmem:[%s1] sm:$0xf]
      %v232 = vld [vmem:[%s1 + $0x4] sm:$0xf]
      %v233 = vld [vmem:[%s1 + $0x8] sm:$0xf]
      %v234 = vld [vmem:[%s1 + $0xc] sm:$0xf]
      %v235 = vld [vmem:[%s1 + $0x10] sm:$0xf]
      %v236 = vld [vmem:[%s1 + $0x14] sm:$0xf]
      %v237 = vld [vmem:[%s1 + $0x18] sm:$0xf]
      %v238 = vld [vmem:[%s1 + $0x1c] sm:$0xf]
      %v239 = vld [vmem:[%s1 + $0x20] sm:$0xf]
      %v240 = vld [vmem:[%s1 + $0x24] sm:$0xf]
      %v241 = vld [vmem:[%s1 + $0x28] sm:$0xf]
      %v242 = vld [vmem:[%s1 + $0x2c] sm:$0xf]
      %v243 = vld [vmem:[%s1 + $0x30] sm:$0xf]
      %v244 = vld [vmem:[%s1 + $0x34] sm:$0xf]
      %v245 = vld [vmem:[%s1 + $0x38] sm:$0xf]
      %v246 = vld [vmem:[%s1 + $0x3c] sm:$0xf]
      %v247 = vld [vmem:[%s2] sm:$0x1]
      %v249 = vperm.slane %v247, 0
      %v259 = vunpack.c.l.b16 %v223
      %v260 = vunpack.c.l.b16 %v224
      %v261 = vunpack.c.l.b16 %v225
      %v262 = vunpack.c.l.b16 %v226
      %v263 = vunpack.c.l.b16 %v227
      %v264 = vunpack.c.l.b16 %v228
      %v265 = vunpack.c.l.b16 %v229
      %v266 = vunpack.c.l.b16 %v230
      %v267 = vpack.c.b16 %v260, %v259
      %v268 = vpack.c.b16 %v262, %v261
      %v269 = vpack.c.b16 %v264, %v263
      %v270 = vpack.c.b16 %v266, %v265
      %v291 = vunpack.c.l.b16 %v231
      %v292 = vunpack.c.l.b16 %v232
      %v293 = vunpack.c.l.b16 %v233
      %v294 = vunpack.c.l.b16 %v234
      %v295 = vunpack.c.l.b16 %v235
      %v296 = vunpack.c.l.b16 %v236
      %v297 = vunpack.c.l.b16 %v237
      %v298 = vunpack.c.l.b16 %v238
      %v299 = vunpack.c.l.b16 %v239
      %v300 = vunpack.c.l.b16 %v240
      %v301 = vunpack.c.l.b16 %v241
      %v302 = vunpack.c.l.b16 %v242
      %v303 = vunpack.c.l.b16 %v243
      %v304 = vunpack.c.l.b16 %v244
      %v305 = vunpack.c.l.b16 %v245
      %v306 = vunpack.c.l.b16 %v246
      %v307 = vpack.c.b16 %v292, %v291
      %v308 = vpack.c.b16 %v294, %v293
      %v309 = vpack.c.b16 %v296, %v295
      %v310 = vpack.c.b16 %v298, %v297
      %v311 = vpack.c.b16 %v300, %v299
      %v312 = vpack.c.b16 %v302, %v301
      %v313 = vpack.c.b16 %v304, %v303
      %v314 = vpack.c.b16 %v306, %v305
      %323 = vmatpush.bf16.msra.mxu0 %v314
      %324 = vmatpush.bf16.msra.mxu0 %v313
      %325 = vmatpush.bf16.msra.mxu0 %v312
      %326 = vmatpush.bf16.msra.mxu0 %v311
      %327 = vmatpush.bf16.msra.mxu0 %v310
      %328 = vmatpush.bf16.msra.mxu0 %v309
      %329 = vmatpush.bf16.msra.mxu0 %v308
      %330 = vmatpush.bf16.msra.mxu0 %v307
      %331 = vmatmul.bf16.gmra.mxu0 %v267
      %v332 = vpop.f32.mrf.mxu0
      %v333 = vadd.f32 %v249, %v332
      %v334 = vpop.f32.mrf.mxu0
      %v335 = vadd.f32 %v249, %v334
      %336 = vmatmul.bf16.gmra.mxu0 %v268
      %v337 = vpop.f32.mrf.mxu0
      %v338 = vadd.f32 %v249, %v337
      %v339 = vpop.f32.mrf.mxu0
      %v340 = vadd.f32 %v249, %v339
      %341 = vmatmul.bf16.gmra.mxu0 %v269
      %v342 = vpop.f32.mrf.mxu0
      %v343 = vadd.f32 %v249, %v342
      %v344 = vpop.f32.mrf.mxu0
      %v345 = vadd.f32 %v249, %v344
      %346 = vmatmul.bf16.gmra.mxu0 %v270
      %v347 = vpop.f32.mrf.mxu0
      %v348 = vadd.f32 %v249, %v347
      %v349 = vpop.f32.mrf.mxu0
      %v350 = vadd.f32 %v249, %v349
      %351 = vdwg.mxu0
      %v352 = vld [vmem:[%s215] sm:$0xf]
      %v353 = vld [vmem:[%s215 + $0x4] sm:$0xf]
      %v354 = vld [vmem:[%s215 + $0x8] sm:$0xf]
      %v355 = vld [vmem:[%s215 + $0xc] sm:$0xf]
      %v356 = vld [vmem:[%s215 + $0x10] sm:$0xf]
      %v357 = vld [vmem:[%s215 + $0x14] sm:$0xf]
      %v358 = vld [vmem:[%s215 + $0x18] sm:$0xf]
      %v359 = vld [vmem:[%s215 + $0x1c] sm:$0xf]
      %v360 = vunpack.c.l.bf16 %v352
      %v361 = vunpack.c.l.bf16 %v353
      %v362 = vunpack.c.l.bf16 %v354
      %v363 = vunpack.c.l.bf16 %v355
      %v364 = vunpack.c.l.bf16 %v356
      %v365 = vunpack.c.l.bf16 %v357
      %v366 = vunpack.c.l.bf16 %v358
      %v367 = vunpack.c.l.bf16 %v359
      %v368 = vadd.f32 %v333, %v360
      %v369 = vadd.f32 %v335, %v361
      %v370 = vadd.f32 %v338, %v362
      %v371 = vadd.f32 %v340, %v363
      %v372 = vadd.f32 %v343, %v364
      %v373 = vadd.f32 %v345, %v365
      %v374 = vadd.f32 %v348, %v366
      %v375 = vadd.f32 %v350, %v367
      %v376 = vmax.f32 %v368, 0.0
      %v377 = vmax.f32 %v369, 0.0
      %v378 = vmax.f32 %v370, 0.0
      %v379 = vmax.f32 %v371, 0.0
      %v380 = vmax.f32 %v372, 0.0
      %v381 = vmax.f32 %v373, 0.0
      %v382 = vmax.f32 %v374, 0.0
      %v383 = vmax.f32 %v375, 0.0
      %v384 = vpack.c.bf16 %v376, %v376
      %v385 = vpack.c.bf16 %v377, %v377
      %v386 = vpack.c.bf16 %v378, %v378
      %v387 = vpack.c.bf16 %v379, %v379
      %v388 = vpack.c.bf16 %v380, %v380
      %v389 = vpack.c.bf16 %v381, %v381
      %v390 = vpack.c.bf16 %v382, %v382
      %v391 = vpack.c.bf16 %v383, %v383
      %392 = vst [vmem:[%s221] sm:$0xf] %v384
      %393 = vst [vmem:[%s221 + $0x4] sm:$0xf] %v385
      %394 = vst [vmem:[%s221 + $0x8] sm:$0xf] %v386
      %395 = vst [vmem:[%s221 + $0xc] sm:$0xf] %v387
      %396 = vst [vmem:[%s221 + $0x10] sm:$0xf] %v388
      %397 = vst [vmem:[%s221 + $0x14] sm:$0xf] %v389
      %398 = vst [vmem:[%s221 + $0x18] sm:$0xf] %v390
      %399 = vst [vmem:[%s221 + $0x1c] sm:$0xf] %v391
      %s400 = smul.u32 8, %s15
      %p401 = scmp.lt.s32.totalorder %s400, 15
      %s402 = scalar_select %p401, %s400, 15
      %s403 = smul.addr %s402, 4
      %s404 = scalar_lea.vmem %s4, %s403
      // Predicated region
      $region37: #{resnet_features_pool.25} parent=35 // pred_check
        %p405 = pneg %p127
      $region38: #{resnet_features_pool.25} parent=35 // pred_check_branch
        %407 = sbr.rel (%p405) target = $region40
      $region39: #{resnet_features_pool.25} parent=35 // pred_region
        %s408 = smul.u32 8, %s15
      $region40: #{resnet_features_pool.25} parent=35 // pred_fallthru
        _
    $region36: #{resnet_features_pool.25} parent=5 // pred_fallthru
      _
    %p409 = scmp.le.s32.totalorder 2, %s10
    // Predicated region
    $region41: #{resnet_features_pool.25} parent=5 // pred_check
      %p410 = pneg %p409
    $region42: #{resnet_features_pool.25} parent=5 // pred_check_branch
      %412 = sbr.rel (%p410) target = $region44
    $region43: #{resnet_features_pool.25} parent=5 // pred_region
      %s413 = ssub.s32 %s10, 2
      // Predicated region
      $region45: #{resnet_features_pool.25} parent=43 // pred_check
        %p414 = pneg %p133
      $region46: #{resnet_features_pool.25} parent=43 // pred_check_branch
        %416 = sbr.rel (%p414) target = $region48
      $region47: #{resnet_features_pool.25} parent=43 // pred_region
        %s417 = smul.u32 8, %s16
        %p418 = scmp.lt.s32.totalorder %s417, 15
        %s419 = scalar_select %p418, %s417, 15
        %s420 = smul.addr %s419, 4
        %s421 = scalar_lea.vmem %s4, %s420
      $region48: #{resnet_features_pool.25} parent=43 // pred_fallthru
        _
    $region44: #{resnet_features_pool.25} parent=5 // pred_fallthru
      _
  $region6: #{resnet_features_pool.25} parent=0 // loop_footer
    %s14 = sadd.s32 1, %s10
  $region7: #{resnet_features_pool.25} parent=0 // loop_footer_branch
    %9 = sbr.rel target = $region3
  $region8: #{resnet_features_pool.25} parent=0 // loop_exit
    _

// kernel: resnet_features_pool.28
$region0: #{resnet_features_pool.28}
  #allocation0 [shape = 'u32[]', space=smem, size = 0x4, offset = 0x4, fixed_abs, tag = 'smem constant byte address 0x4 - core index']
  #allocation1 [shape = 'u32[72,128]{1,0:T(1,128)}', space=vmem, size = 0x9000, scoped, tag = 'internal scratch']
  %s0 = inlined_call_operand.vmem [shape: bf16[32,128], index: 0, kind: input, shape index: {}]
  %s1 = inlined_call_operand.vmem [shape: bf16[128,128], index: 1, kind: input, shape index: {}]
  %s2 = inlined_call_operand.vmem [shape: f32[1,128], index: 2, kind: input, shape index: {}]
  %s3 = inlined_call_operand.vmem [shape: bf16[32,128], index: 3, kind: output, shape index: {}]
  %s4 = sld [smem:[#allocation0]]
  $region45: #{resnet_features_pool.28} parent=0
    _
  %s6 = ssub.s32 1, %s4
  %s7 = scalar_select 0, %s6, %s4
  loop: start=0, step=1, limit=4
  $region2: #{resnet_features_pool.28} parent=0 // loop_pre_header
    _
  $region3: #{resnet_features_pool.28} parent=0 // loop_header
    %s9 = sphi 0, %s13
    %p10 = scmp.ge.s32.totalorder %s9, 4
    %s19 = sphi 0, %s21
    %s22 = sphi 0, %s19
    %s23 = sphi 0, %s22
    %s39 = sphi 0, %s23
    %s43 = sphi 0, %s43
    %s45 = sphi 0, %s43
    %s46 = sphi 0, %s45
    %s60 = sphi 0, %s46
    %s64 = sphi 0, %s64
    %s66 = sphi 0, %s64
    %s67 = sphi 0, %s66
    %s81 = sphi 0, %s67
    %s87 = sphi 0, %s89
    %s90 = sphi 0, %s87
    %s91 = sphi 0, %s90
    %s107 = sphi 0, %s91
  $region4: #{resnet_features_pool.28} parent=0 // loop_header_branch
    %12 = sbr.rel (%p10) target = $region8
  $region5: #{resnet_features_pool.28} parent=0 // loop_body
    %s14 = ssub.s32 %s9, 1
    %s15 = ssub.s32 %s9, 2
    %s16 = sadd.s32 %s9, 1
    %s17 = ssub.s32 %s9, %s16
    %p18 = scmp.eq.s32.totalorder %s17, 0
    %s20 = sadd.s32 %s19, 1
    %s21 = scalar_select %p18, %s19, %s20
    %p24 = pneg %p18
    %p25 = scmp.eq.s32.totalorder %s9, 1
    %p26 = por %p24, %p25
    %p27 = scmp.ne.s32.totalorder %s19, %s22
    %p28 = scmp.eq.s32.totalorder %s9, 0
    %p29 = por %p27, %p28
    %p30 = scmp.ne.s32.totalorder %s19, %s22
    %p31 = scmp.eq.s32.totalorder %s14, 1
    %p32 = por %p30, %p31
    %p33 = scmp.ne.s32.totalorder %s22, %s23
    %p34 = scmp.eq.s32.totalorder %s14, 0
    %p35 = por %p33, %p34
    %p36 = scmp.ne.s32.totalorder %s22, %s23
    %p37 = scmp.eq.s32.totalorder %s15, 1
    %p38 = por %p36, %p37
    %p40 = scmp.ne.s32.totalorder %s23, %s39
    %p41 = scmp.eq.s32.totalorder %s15, 0
    %p42 = por %p40, %p41
    %s44 = sadd.s32 %s43, 1
    %p47 = scmp.eq.s32.totalorder %s9, 1
    %p48 = scmp.ne.s32.totalorder %s43, %s45
    %p49 = scmp.eq.s32.totalorder %s9, 0
    %p50 = por %p48, %p49
    %p51 = scmp.ne.s32.totalorder %s43, %s45
    %p52 = scmp.eq.s32.totalorder %s14, 1
    %p53 = por %p51, %p52
    %p54 = scmp.ne.s32.totalorder %s45, %s46
    %p55 = scmp.eq.s32.totalorder %s14, 0
    %p56 = por %p54, %p55
    %p57 = scmp.ne.s32.totalorder %s45, %s46
    %p58 = scmp.eq.s32.totalorder %s15, 1
    %p59 = por %p57, %p58
    %p61 = scmp.ne.s32.totalorder %s46, %s60
    %p62 = scmp.eq.s32.totalorder %s15, 0
    %p63 = por %p61, %p62
    %s65 = sadd.s32 %s64, 1
    %p68 = scmp.eq.s32.totalorder %s9, 1
    %p69 = scmp.ne.s32.totalorder %s64, %s66
    %p70 = scmp.eq.s32.totalorder %s9, 0
    %p71 = por %p69, %p70
    %p72 = scmp.ne.s32.totalorder %s64, %s66
    %p73 = scmp.eq.s32.totalorder %s14, 1
    %p74 = por %p72, %p73
    %p75 = scmp.ne.s32.totalorder %s66, %s67
    %p76 = scmp.eq.s32.totalorder %s14, 0
    %p77 = por %p75, %p76
    %p78 = scmp.ne.s32.totalorder %s66, %s67
    %p79 = scmp.eq.s32.totalorder %s15, 1
    %p80 = por %p78, %p79
    %p82 = scmp.ne.s32.totalorder %s67, %s81
    %p83 = scmp.eq.s32.totalorder %s15, 0
    %p84 = por %p82, %p83
    %s85 = ssub.s32 %s9, %s16
    %p86 = scmp.eq.s32.totalorder %s85, 0
    %s88 = sadd.s32 %s87, 1
    %s89 = scalar_select %p86, %s87, %s88
    %p92 = pneg %p86
    %p93 = scmp.eq.s32.totalorder %s9, 1
    %p94 = por %p92, %p93
    %p95 = scmp.ne.s32.totalorder %s87, %s90
    %p96 = scmp.eq.s32.totalorder %s9, 0
    %p97 = por %p95, %p96
    %p98 = scmp.ne.s32.totalorder %s87, %s90
    %p99 = scmp.eq.s32.totalorder %s14, 1
    %p100 = por %p98, %p99
    %p101 = scmp.ne.s32.totalorder %s90, %s91
    %p102 = scmp.eq.s32.totalorder %s14, 0
    %p103 = por %p101, %p102
    %p104 = scmp.ne.s32.totalorder %s90, %s91
    %p105 = scmp.eq.s32.totalorder %s15, 1
    %p106 = por %p104, %p105
    %p108 = scmp.ne.s32.totalorder %s91, %s107
    %p109 = scmp.eq.s32.totalorder %s15, 0
    %p110 = por %p108, %p109
    %p111 = scmp.le.s32.totalorder 1, %s9
    %p112 = scmp.lt.s32.totalorder %s9, 3
    %p113 = pnand %p111, %p112
    %p114 = pneg %p113
    // Predicated region
    $region9: #{resnet_features_pool.28} parent=5 // pred_check
      _
    $region10: #{resnet_features_pool.28} parent=5 // pred_check_branch
      %116 = sbr.rel (%p113) target = $region12
    $region11: #{resnet_features_pool.28} parent=5 // pred_region
      %s117 = ssub.s32 %s9, 1
      // Predicated region
      $region13: #{resnet_features_pool.28} parent=11 // pred_check
        %p118 = pneg %p56
      $region14: #{resnet_features_pool.28} parent=11 // pred_check_branch
        %120 = sbr.rel (%p118) target = $region16
      $region15: #{resnet_features_pool.28} parent=11 // pred_region
        _
      $region16: #{resnet_features_pool.28} parent=11 // pred_fallthru
        _
      // Predicated region
      $region17: #{resnet_features_pool.28} parent=11 // pred_check
        %p121 = pneg %p77
      $region18: #{resnet_features_pool.28} parent=11 // pred_check_branch
        %123 = sbr.rel (%p121) target = $region20
      $region19: #{resnet_features_pool.28} parent=11 // pred_region
        _
      $region20: #{resnet_features_pool.28} parent=11 // pred_fallthru
        _
    $region12: #{resnet_features_pool.28} parent=5 // pred_fallthru
      _
    %p124 = scmp.lt.s32.totalorder %s9, 2
    // Predicated region
    $region21: #{resnet_features_pool.28} parent=5 // pred_check
      %p125 = pneg %p124
    $region22: #{resnet_features_pool.28} parent=5 // pred_check_branch
      %127 = sbr.rel (%p125) target = $region24
    $region23: #{resnet_features_pool.28} parent=5 // pred_region
      // Predicated region
      $region25: #{resnet_features_pool.28} parent=23 // pred_check
        %p128 = pneg %p29
      $region26: #{resnet_features_pool.28} parent=23 // pred_check_branch
        %130 = sbr.rel (%p128) target = $region28
      $region27: #{resnet_features_pool.28} parent=23 // pred_region
        %s131 = smul.u32 2, %s9
        %p132 = scmp.lt.s32.totalorder %s131, 3
        %s133 = scalar_select %p132, %s131, 3
        %s134 = smul.addr %s133, 4
        %s135 = scalar_lea.vmem %s0, %s134
        %s136 = smul.u32 2, %s9
      $region28: #{resnet_features_pool.28} parent=23 // pred_fallthru
        _
    $region24: #{resnet_features_pool.28} parent=5 // pred_fallthru
      _
    %p137 = scmp.le.s32.totalorder 1, %s9
    %p138 = scmp.lt.s32.totalorder %s9, 3
    %p139 = pnand %p137, %p138
    %p140 = pneg %p139
    // Predicated region
    $region29: #{resnet_features_pool.28} parent=5 // pred_check
      _
    $region30: #{resnet_features_pool.28} parent=5 // pred_check_branch
      %142 = sbr.rel (%p139) target = $region32
    $region31: #{resnet_features_pool.28} parent=5 // pred_region
      %s143 = ssub.s32 %s9, 1
      %s144 = smul.u32 2, %s14
      %p145 = scmp.lt.s32.totalorder %s144, 3
      %s146 = scalar_select %p145, %s144, 3
      %s147 = smul.addr %s146, 4
      %s148 = scalar_lea.vmem %s0, %s147
      %p149 = pneg %p35
      %p150 = pneg %p32
      %p151 = pneg %p56
      %p152 = pneg %p53
      %p153 = pneg %p77
      %p154 = pneg %p74
      %p155 = pneg %p103
      %p156 = pneg %p100
      %s157 = smul.u32 2, %s14
      %p158 = scmp.lt.s32.totalorder %s157, 3
      %s159 = scalar_select %p158, %s157, 3
      %s160 = smul.addr %s159, 4
      %s161 = scalar_lea.vmem %s3, %s160
      %s162 = smul.u32 2, %s14
      %p163 = scmp.lt.s32.totalorder %s162, 3
      %s164 = scalar_select %p163, %s162, 3
      %s165 = smul.addr %s164, 4
      %s166 = scalar_lea.vmem %s0, %s165
      %s167 = smul.u32 2, %s14
      %s168 = smul.u32 2, %s14
      %p169 = scmp.lt.s32.totalorder %s168, 3
      %s170 = scalar_select %p169, %s168, 3
      %s171 = smul.addr %s170, 4
      %s172 = scalar_lea.vmem %s3, %s171
      %s173 = smul.u32 2, %s14
      %v174 = vld [vmem:[%s166] sm:$0xf]
      %v175 = vld [vmem:[%s166 + $0x4] sm:$0xf]
      %v176 = vld [vmem:[%s1] sm:$0xf]
      %v177 = vld [vmem:[%s1 + $0x4] sm:$0xf]
      %v178 = vld [vmem:[%s1 + $0x8] sm:$0xf]
      %v179 = vld [vmem:[%s1 + $0xc] sm:$0xf]
      %v180 = vld [vmem:[%s1 + $0x10] sm:$0xf]
      %v181 = vld [vmem:[%s1 + $0x14] sm:$0xf]
      %v182 = vld [vmem:[%s1 + $0x18] sm:$0xf]
      %v183 = vld [vmem:[%s1 + $0x1c] sm:$0xf]
      %v184 = vld [vmem:[%s1 + $0x20] sm:$0xf]
      %v185 = vld [vmem:[%s1 + $0x24] sm:$0xf]
      %v186 = vld [vmem:[%s1 + $0x28] sm:$0xf]
      %v187 = vld [vmem:[%s1 + $0x2c] sm:$0xf]
      %v188 = vld [vmem:[%s1 + $0x30] sm:$0xf]
      %v189 = vld [vmem:[%s1 + $0x34] sm:$0xf]
      %v190 = vld [vmem:[%s1 + $0x38] sm:$0xf]
      %v191 = vld [vmem:[%s1 + $0x3c] sm:$0xf]
      %v192 = vld [vmem:[%s2] sm:$0x1]
      %v194 = vperm.slane %v192, 0
      %v198 = vunpack.c.l.b16 %v174
      %v199 = vunpack.c.l.b16 %v175
      %v200 = vpack.c.b16 %v199, %v198
      %v218 = vunpack.c.l.b16 %v176
      %v219 = vunpack.c.l.b16 %v177
      %v220 = vunpack.c.l.b16 %v178
      %v221 = vunpack.c.l.b16 %v179
      %v222 = vunpack.c.l.b16 %v180
      %v223 = vunpack.c.l.b16 %v181
      %v224 = vunpack.c.l.b16 %v182
      %v225 = vunpack.c.l.b16 %v183
      %v226 = vunpack.c.l.b16 %v184
      %v227 = vunpack.c.l.b16 %v185
      %v228 = vunpack.c.l.b16 %v186
      %v229 = vunpack.c.l.b16 %v187
      %v230 = vunpack.c.l.b16 %v188
      %v231 = vunpack.c.l.b16 %v189
      %v232 = vunpack.c.l.b16 %v190
      %v233 = vunpack.c.l.b16 %v191
      %v234 = vpack.c.b16 %v219, %v218
      %v235 = vpack.c.b16 %v221, %v220
      %v236 = vpack.c.b16 %v223, %v222
      %v237 = vpack.c.b16 %v225, %v224
      %v238 = vpack.c.b16 %v227, %v226
      %v239 = vpack.c.b16 %v229, %v228
      %v240 = vpack.c.b16 %v231, %v230
      %v241 = vpack.c.b16 %v233, %v232
      %250 = vmatpush.bf16.msra.mxu0 %v241
      %251 = vmatpush.bf16.msra.mxu0 %v240
      %252 = vmatpush.bf16.msra.mxu0 %v239
      %253 = vmatpush.bf16.msra.mxu0 %v238
      %254 = vmatpush.bf16.msra.mxu0 %v237
      %255 = vmatpush.bf16.msra.mxu0 %v236
      %256 = vmatpush.bf16.msra.mxu0 %v235
      %257 = vmatpush.bf16.msra.mxu0 %v234
      %258 = vmatmul.bf16.gmra.mxu0 %v200
      %v259 = vpop.f32.mrf.mxu0
      %v260 = vadd.f32 %v194, %v259
      %v261 = vpop.f32.mrf.mxu0
      %v262 = vadd.f32 %v194, %v261
      %263 = vdwg.mxu0
      %v264 = vmax.f32 %v260, 0.0
      %v265 = vmax.f32 %v262, 0.0
      %v266 = vpack.c.bf16 %v264, %v264
      %v267 = vpack.c.bf16 %v265, %v265
      %268 = vst [vmem:[%s172] sm:$0xf] %v266
      %269 = vst [vmem:[%s172 + $0x4] sm:$0xf] %v267
      %s270 = smul.u32 2, %s14
      %p271 = scmp.lt.s32.totalorder %s270, 3
      %s272 = scalar_select %p271, %s270, 3
      %s273 = smul.addr %s272, 4
      %s274 = scalar_lea.vmem %s3, %s273
      // Predicated region
      $region33: #{resnet_features_pool.28} parent=31 // pred_check
        %p275 = pneg %p100
      $region34: #{resnet_features_pool.28} parent=31 // pred_check_branch
        %277 = sbr.rel (%p275) target = $region36
      $region35: #{resnet_features_pool.28} parent=31 // pred_region
        %s278 = smul.u32 2, %s14
      $region36: #{resnet_features_pool.28} parent=31 // pred_fallthru
        _
    $region32: #{resnet_features_pool.28} parent=5 // pred_fallthru
      _
    %p279 = scmp.le.s32.totalorder 2, %s9
    // Predicated region
    $region37: #{resnet_features_pool.28} parent=5 // pred_check
      %p280 = pneg %p279
    $region38: #{resnet_features_pool.28} parent=5 // pred_check_branch
      %282 = sbr.rel (%p280) target = $region40
    $region39: #{resnet_features_pool.28} parent=5 // pred_region
      %s283 = ssub.s32 %s9, 2
      // Predicated region
      $region41: #{resnet_features_pool.28} parent=39 // pred_check
        %p284 = pneg %p106
      $region42: #{resnet_features_pool.28} parent=39 // pred_check_branch
        %286 = sbr.rel (%p284) target = $region44
      $region43: #{resnet_features_pool.28} parent=39 // pred_region
        %s287 = smul.u32 2, %s15
        %p288 = scmp.lt.s32.totalorder %s287, 3
        %s289 = scalar_select %p288, %s287, 3
        %s290 = smul.addr %s289, 4
        %s291 = scalar_lea.vmem %s3, %s290
      $region44: #{resnet_features_pool.28} parent=39 // pred_fallthru
        _
    $region40: #{resnet_features_pool.28} parent=5 // pred_fallthru
      _
  $region6: #{resnet_features_pool.28} parent=0 // loop_footer
    %s13 = sadd.s32 1, %s9
  $region7: #{resnet_features_pool.28} parent=0 // loop_footer_branch
    %8 = sbr.rel target = $region3
  $region8: #{resnet_features_pool.28} parent=0 // loop_exit
    _

// kernel: resnet_features_pool.29
$region0: #{resnet_features_pool.29}
  #allocation0 [shape = 'u32[]', space=smem, size = 0x4, offset = 0x4, fixed_abs, tag = 'smem constant byte address 0x4 - core index']
  #allocation1 [shape = 'u32[72,128]{1,0:T(1,128)}', space=vmem, size = 0x9000, scoped, tag = 'internal scratch']
  %s0 = inlined_call_operand.vmem [shape: bf16[32,128], index: 0, kind: input, shape index: {}]
  %s1 = inlined_call_operand.vmem [shape: bf16[128,128], index: 1, kind: input, shape index: {}]
  %s2 = inlined_call_operand.vmem [shape: f32[1,128], index: 2, kind: input, shape index: {}]
  %s3 = inlined_call_operand.vmem [shape: bf16[32,128], index: 3, kind: output, shape index: {}]
  %s4 = sld [smem:[#allocation0]]
  $region45: #{resnet_features_pool.29} parent=0
    _
  %s6 = ssub.s32 1, %s4
  %s7 = scalar_select 0, %s6, %s4
  loop: start=0, step=1, limit=4
  $region2: #{resnet_features_pool.29} parent=0 // loop_pre_header
    _
  $region3: #{resnet_features_pool.29} parent=0 // loop_header
    %s9 = sphi 0, %s13
    %p10 = scmp.ge.s32.totalorder %s9, 4
    %s19 = sphi 0, %s21
    %s22 = sphi 0, %s19
    %s23 = sphi 0, %s22
    %s39 = sphi 0, %s23
    %s43 = sphi 0, %s43
    %s45 = sphi 0, %s43
    %s46 = sphi 0, %s45
    %s60 = sphi 0, %s46
    %s64 = sphi 0, %s64
    %s66 = sphi 0, %s64
    %s67 = sphi 0, %s66
    %s81 = sphi 0, %s67
    %s87 = sphi 0, %s89
    %s90 = sphi 0, %s87
    %s91 = sphi 0, %s90
    %s107 = sphi 0, %s91
  $region4: #{resnet_features_pool.29} parent=0 // loop_header_branch
    %12 = sbr.rel (%p10) target = $region8
  $region5: #{resnet_features_pool.29} parent=0 // loop_body
    %s14 = ssub.s32 %s9, 1
    %s15 = ssub.s32 %s9, 2
    %s16 = sadd.s32 %s9, 1
    %s17 = ssub.s32 %s9, %s16
    %p18 = scmp.eq.s32.totalorder %s17, 0
    %s20 = sadd.s32 %s19, 1
    %s21 = scalar_select %p18, %s19, %s20
    %p24 = pneg %p18
    %p25 = scmp.eq.s32.totalorder %s9, 1
    %p26 = por %p24, %p25
    %p27 = scmp.ne.s32.totalorder %s19, %s22
    %p28 = scmp.eq.s32.totalorder %s9, 0
    %p29 = por %p27, %p28
    %p30 = scmp.ne.s32.totalorder %s19, %s22
    %p31 = scmp.eq.s32.totalorder %s14, 1
    %p32 = por %p30, %p31
    %p33 = scmp.ne.s32.totalorder %s22, %s23
    %p34 = scmp.eq.s32.totalorder %s14, 0
    %p35 = por %p33, %p34
    %p36 = scmp.ne.s32.totalorder %s22, %s23
    %p37 = scmp.eq.s32.totalorder %s15, 1
    %p38 = por %p36, %p37
    %p40 = scmp.ne.s32.totalorder %s23, %s39
    %p41 = scmp.eq.s32.totalorder %s15, 0
    %p42 = por %p40, %p41
    %s44 = sadd.s32 %s43, 1
    %p47 = scmp.eq.s32.totalorder %s9, 1
    %p48 = scmp.ne.s32.totalorder %s43, %s45
    %p49 = scmp.eq.s32.totalorder %s9, 0
    %p50 = por %p48, %p49
    %p51 = scmp.ne.s32.totalorder %s43, %s45
    %p52 = scmp.eq.s32.totalorder %s14, 1
    %p53 = por %p51, %p52
    %p54 = scmp.ne.s32.totalorder %s45, %s46
    %p55 = scmp.eq.s32.totalorder %s14, 0
    %p56 = por %p54, %p55
    %p57 = scmp.ne.s32.totalorder %s45, %s46
    %p58 = scmp.eq.s32.totalorder %s15, 1
    %p59 = por %p57, %p58
    %p61 = scmp.ne.s32.totalorder %s46, %s60
    %p62 = scmp.eq.s32.totalorder %s15, 0
    %p63 = por %p61, %p62
    %s65 = sadd.s32 %s64, 1
    %p68 = scmp.eq.s32.totalorder %s9, 1
    %p69 = scmp.ne.s32.totalorder %s64, %s66
    %p70 = scmp.eq.s32.totalorder %s9, 0
    %p71 = por %p69, %p70
    %p72 = scmp.ne.s32.totalorder %s64, %s66
    %p73 = scmp.eq.s32.totalorder %s14, 1
    %p74 = por %p72, %p73
    %p75 = scmp.ne.s32.totalorder %s66, %s67
    %p76 = scmp.eq.s32.totalorder %s14, 0
    %p77 = por %p75, %p76
    %p78 = scmp.ne.s32.totalorder %s66, %s67
    %p79 = scmp.eq.s32.totalorder %s15, 1
    %p80 = por %p78, %p79
    %p82 = scmp.ne.s32.totalorder %s67, %s81
    %p83 = scmp.eq.s32.totalorder %s15, 0
    %p84 = por %p82, %p83
    %s85 = ssub.s32 %s9, %s16
    %p86 = scmp.eq.s32.totalorder %s85, 0
    %s88 = sadd.s32 %s87, 1
    %s89 = scalar_select %p86, %s87, %s88
    %p92 = pneg %p86
    %p93 = scmp.eq.s32.totalorder %s9, 1
    %p94 = por %p92, %p93
    %p95 = scmp.ne.s32.totalorder %s87, %s90
    %p96 = scmp.eq.s32.totalorder %s9, 0
    %p97 = por %p95, %p96
    %p98 = scmp.ne.s32.totalorder %s87, %s90
    %p99 = scmp.eq.s32.totalorder %s14, 1
    %p100 = por %p98, %p99
    %p101 = scmp.ne.s32.totalorder %s90, %s91
    %p102 = scmp.eq.s32.totalorder %s14, 0
    %p103 = por %p101, %p102
    %p104 = scmp.ne.s32.totalorder %s90, %s91
    %p105 = scmp.eq.s32.totalorder %s15, 1
    %p106 = por %p104, %p105
    %p108 = scmp.ne.s32.totalorder %s91, %s107
    %p109 = scmp.eq.s32.totalorder %s15, 0
    %p110 = por %p108, %p109
    %p111 = scmp.le.s32.totalorder 1, %s9
    %p112 = scmp.lt.s32.totalorder %s9, 3
    %p113 = pnand %p111, %p112
    %p114 = pneg %p113
    // Predicated region
    $region9: #{resnet_features_pool.29} parent=5 // pred_check
      _
    $region10: #{resnet_features_pool.29} parent=5 // pred_check_branch
      %116 = sbr.rel (%p113) target = $region12
    $region11: #{resnet_features_pool.29} parent=5 // pred_region
      %s117 = ssub.s32 %s9, 1
      // Predicated region
      $region13: #{resnet_features_pool.29} parent=11 // pred_check
        %p118 = pneg %p56
      $region14: #{resnet_features_pool.29} parent=11 // pred_check_branch
        %120 = sbr.rel (%p118) target = $region16
      $region15: #{resnet_features_pool.29} parent=11 // pred_region
        _
      $region16: #{resnet_features_pool.29} parent=11 // pred_fallthru
        _
      // Predicated region
      $region17: #{resnet_features_pool.29} parent=11 // pred_check
        %p121 = pneg %p77
      $region18: #{resnet_features_pool.29} parent=11 // pred_check_branch
        %123 = sbr.rel (%p121) target = $region20
      $region19: #{resnet_features_pool.29} parent=11 // pred_region
        _
      $region20: #{resnet_features_pool.29} parent=11 // pred_fallthru
        _
    $region12: #{resnet_features_pool.29} parent=5 // pred_fallthru
      _
    %p124 = scmp.lt.s32.totalorder %s9, 2
    // Predicated region
    $region21: #{resnet_features_pool.29} parent=5 // pred_check
      %p125 = pneg %p124
    $region22: #{resnet_features_pool.29} parent=5 // pred_check_branch
      %127 = sbr.rel (%p125) target = $region24
    $region23: #{resnet_features_pool.29} parent=5 // pred_region
      // Predicated region
      $region25: #{resnet_features_pool.29} parent=23 // pred_check
        %p128 = pneg %p29
      $region26: #{resnet_features_pool.29} parent=23 // pred_check_branch
        %130 = sbr.rel (%p128) target = $region28
      $region27: #{resnet_features_pool.29} parent=23 // pred_region
        %s131 = smul.u32 2, %s9
        %p132 = scmp.lt.s32.totalorder %s131, 3
        %s133 = scalar_select %p132, %s131, 3
        %s134 = smul.addr %s133, 4
        %s135 = scalar_lea.vmem %s0, %s134
        %s136 = smul.u32 2, %s9
      $region28: #{resnet_features_pool.29} parent=23 // pred_fallthru
        _
    $region24: #{resnet_features_pool.29} parent=5 // pred_fallthru
      _
    %p137 = scmp.le.s32.totalorder 1, %s9
    %p138 = scmp.lt.s32.totalorder %s9, 3
    %p139 = pnand %p137, %p138
    %p140 = pneg %p139
    // Predicated region
    $region29: #{resnet_features_pool.29} parent=5 // pred_check
      _
    $region30: #{resnet_features_pool.29} parent=5 // pred_check_branch
      %142 = sbr.rel (%p139) target = $region32
    $region31: #{resnet_features_pool.29} parent=5 // pred_region
      %s143 = ssub.s32 %s9, 1
      %s144 = smul.u32 2, %s14
      %p145 = scmp.lt.s32.totalorder %s144, 3
      %s146 = scalar_select %p145, %s144, 3
      %s147 = smul.addr %s146, 4
      %s148 = scalar_lea.vmem %s0, %s147
      %p149 = pneg %p35
      %p150 = pneg %p32
      %p151 = pneg %p56
      %p152 = pneg %p53
      %p153 = pneg %p77
      %p154 = pneg %p74
      %p155 = pneg %p103
      %p156 = pneg %p100
      %s157 = smul.u32 2, %s14
      %p158 = scmp.lt.s32.totalorder %s157, 3
      %s159 = scalar_select %p158, %s157, 3
      %s160 = smul.addr %s159, 4
      %s161 = scalar_lea.vmem %s3, %s160
      %s162 = smul.u32 2, %s14
      %p163 = scmp.lt.s32.totalorder %s162, 3
      %s164 = scalar_select %p163, %s162, 3
      %s165 = smul.addr %s164, 4
      %s166 = scalar_lea.vmem %s0, %s165
      %s167 = smul.u32 2, %s14
      %s168 = smul.u32 2, %s14
      %p169 = scmp.lt.s32.totalorder %s168, 3
      %s170 = scalar_select %p169, %s168, 3
      %s171 = smul.addr %s170, 4
      %s172 = scalar_lea.vmem %s3, %s171
      %s173 = smul.u32 2, %s14
      %v174 = vld [vmem:[%s166] sm:$0xf]
      %v175 = vld [vmem:[%s166 + $0x4] sm:$0xf]
      %v176 = vld [vmem:[%s1] sm:$0xf]
      %v177 = vld [vmem:[%s1 + $0x4] sm:$0xf]
      %v178 = vld [vmem:[%s1 + $0x8] sm:$0xf]
      %v179 = vld [vmem:[%s1 + $0xc] sm:$0xf]
      %v180 = vld [vmem:[%s1 + $0x10] sm:$0xf]
      %v181 = vld [vmem:[%s1 + $0x14] sm:$0xf]
      %v182 = vld [vmem:[%s1 + $0x18] sm:$0xf]
      %v183 = vld [vmem:[%s1 + $0x1c] sm:$0xf]
      %v184 = vld [vmem:[%s1 + $0x20] sm:$0xf]
      %v185 = vld [vmem:[%s1 + $0x24] sm:$0xf]
      %v186 = vld [vmem:[%s1 + $0x28] sm:$0xf]
      %v187 = vld [vmem:[%s1 + $0x2c] sm:$0xf]
      %v188 = vld [vmem:[%s1 + $0x30] sm:$0xf]
      %v189 = vld [vmem:[%s1 + $0x34] sm:$0xf]
      %v190 = vld [vmem:[%s1 + $0x38] sm:$0xf]
      %v191 = vld [vmem:[%s1 + $0x3c] sm:$0xf]
      %v192 = vld [vmem:[%s2] sm:$0x1]
      %v194 = vperm.slane %v192, 0
      %v198 = vunpack.c.l.b16 %v174
      %v199 = vunpack.c.l.b16 %v175
      %v200 = vpack.c.b16 %v199, %v198
      %v218 = vunpack.c.l.b16 %v176
      %v219 = vunpack.c.l.b16 %v177
      %v220 = vunpack.c.l.b16 %v178
      %v221 = vunpack.c.l.b16 %v179
      %v222 = vunpack.c.l.b16 %v180
      %v223 = vunpack.c.l.b16 %v181
      %v224 = vunpack.c.l.b16 %v182
      %v225 = vunpack.c.l.b16 %v183
      %v226 = vunpack.c.l.b16 %v184
      %v227 = vunpack.c.l.b16 %v185
      %v228 = vunpack.c.l.b16 %v186
      %v229 = vunpack.c.l.b16 %v187
      %v230 = vunpack.c.l.b16 %v188
      %v231 = vunpack.c.l.b16 %v189
      %v232 = vunpack.c.l.b16 %v190
      %v233 = vunpack.c.l.b16 %v191
      %v234 = vpack.c.b16 %v219, %v218
      %v235 = vpack.c.b16 %v221, %v220
      %v236 = vpack.c.b16 %v223, %v222
      %v237 = vpack.c.b16 %v225, %v224
      %v238 = vpack.c.b16 %v227, %v226
      %v239 = vpack.c.b16 %v229, %v228
      %v240 = vpack.c.b16 %v231, %v230
      %v241 = vpack.c.b16 %v233, %v232
      %250 = vmatpush.bf16.msra.mxu0 %v241
      %251 = vmatpush.bf16.msra.mxu0 %v240
      %252 = vmatpush.bf16.msra.mxu0 %v239
      %253 = vmatpush.bf16.msra.mxu0 %v238
      %254 = vmatpush.bf16.msra.mxu0 %v237
      %255 = vmatpush.bf16.msra.mxu0 %v236
      %256 = vmatpush.bf16.msra.mxu0 %v235
      %257 = vmatpush.bf16.msra.mxu0 %v234
      %258 = vmatmul.bf16.gmra.mxu0 %v200
      %v259 = vpop.f32.mrf.mxu0
      %v260 = vadd.f32 %v194, %v259
      %v261 = vpop.f32.mrf.mxu0
      %v262 = vadd.f32 %v194, %v261
      %263 = vdwg.mxu0
      %v264 = vpack.c.bf16 %v260, %v260
      %v265 = vpack.c.bf16 %v262, %v262
      %266 = vst [vmem:[%s172] sm:$0xf] %v264
      %267 = vst [vmem:[%s172 + $0x4] sm:$0xf] %v265
      %s268 = smul.u32 2, %s14
      %p269 = scmp.lt.s32.totalorder %s268, 3
      %s270 = scalar_select %p269, %s268, 3
      %s271 = smul.addr %s270, 4
      %s272 = scalar_lea.vmem %s3, %s271
      // Predicated region
      $region33: #{resnet_features_pool.29} parent=31 // pred_check
        %p273 = pneg %p100
      $region34: #{resnet_features_pool.29} parent=31 // pred_check_branch
        %275 = sbr.rel (%p273) target = $region36
      $region35: #{resnet_features_pool.29} parent=31 // pred_region
        %s276 = smul.u32 2, %s14
      $region36: #{resnet_features_pool.29} parent=31 // pred_fallthru
        _
    $region32: #{resnet_features_pool.29} parent=5 // pred_fallthru
      _
    %p277 = scmp.le.s32.totalorder 2, %s9
    // Predicated region
    $region37: #{resnet_features_pool.29} parent=5 // pred_check
      %p278 = pneg %p277
    $region38: #{resnet_features_pool.29} parent=5 // pred_check_branch
      %280 = sbr.rel (%p278) target = $region40
    $region39: #{resnet_features_pool.29} parent=5 // pred_region
      %s281 = ssub.s32 %s9, 2
      // Predicated region
      $region41: #{resnet_features_pool.29} parent=39 // pred_check
        %p282 = pneg %p106
      $region42: #{resnet_features_pool.29} parent=39 // pred_check_branch
        %284 = sbr.rel (%p282) target = $region44
      $region43: #{resnet_features_pool.29} parent=39 // pred_region
        %s285 = smul.u32 2, %s15
        %p286 = scmp.lt.s32.totalorder %s285, 3
        %s287 = scalar_select %p286, %s285, 3
        %s288 = smul.addr %s287, 4
        %s289 = scalar_lea.vmem %s3, %s288
      $region44: #{resnet_features_pool.29} parent=39 // pred_fallthru
        _
    $region40: #{resnet_features_pool.29} parent=5 // pred_fallthru
      _
  $region6: #{resnet_features_pool.29} parent=0 // loop_footer
    %s13 = sadd.s32 1, %s9
  $region7: #{resnet_features_pool.29} parent=0 // loop_footer_branch
    %8 = sbr.rel target = $region3
  $region8: #{resnet_features_pool.29} parent=0 // loop_exit
    _

// kernel: resnet_features_pool.30
$region0: #{resnet_features_pool.30}
  #allocation0 [shape = 'u32[]', space=smem, size = 0x4, offset = 0x4, fixed_abs, tag = 'smem constant byte address 0x4 - core index']
  #allocation1 [shape = 'u32[72,128]{1,0:T(1,128)}', space=vmem, size = 0x9000, scoped, tag = 'internal scratch']
  %s0 = inlined_call_operand.vmem [shape: bf16[32,256], index: 0, kind: input, shape index: {}]
  %s1 = inlined_call_operand.vmem [shape: bf16[256,128], index: 1, kind: input, shape index: {}]
  %s2 = inlined_call_operand.vmem [shape: f32[1,128], index: 2, kind: input, shape index: {}]
  %s3 = inlined_call_operand.vmem [shape: bf16[32,128], index: 3, kind: input, shape index: {}]
  %s4 = inlined_call_operand.vmem [shape: bf16[32,128], index: 4, kind: output, shape index: {}]
  %s5 = sld [smem:[#allocation0]]
  $region49: #{resnet_features_pool.30} parent=0
    _
  %s7 = ssub.s32 1, %s5
  %s8 = scalar_select 0, %s7, %s5
  loop: start=0, step=1, limit=4
  $region2: #{resnet_features_pool.30} parent=0 // loop_pre_header
    _
  $region3: #{resnet_features_pool.30} parent=0 // loop_header
    %s10 = sphi 0, %s14
    %p11 = scmp.ge.s32.totalorder %s10, 4
    %s20 = sphi 0, %s22
    %s23 = sphi 0, %s20
    %s24 = sphi 0, %s23
    %s40 = sphi 0, %s24
    %s44 = sphi 0, %s44
    %s46 = sphi 0, %s44
    %s47 = sphi 0, %s46
    %s61 = sphi 0, %s47
    %s65 = sphi 0, %s65
    %s67 = sphi 0, %s65
    %s68 = sphi 0, %s67
    %s82 = sphi 0, %s68
    %s88 = sphi 0, %s90
    %s91 = sphi 0, %s88
    %s92 = sphi 0, %s91
    %s108 = sphi 0, %s92
    %s114 = sphi 0, %s116
    %s117 = sphi 0, %s114
    %s118 = sphi 0, %s117
    %s134 = sphi 0, %s118
  $region4: #{resnet_features_pool.30} parent=0 // loop_header_branch
    %13 = sbr.rel (%p11) target = $region8
  $region5: #{resnet_features_pool.30} parent=0 // loop_body
    %s15 = ssub.s32 %s10, 1
    %s16 = ssub.s32 %s10, 2
    %s17 = sadd.s32 %s10, 1
    %s18 = ssub.s32 %s10, %s17
    %p19 = scmp.eq.s32.totalorder %s18, 0
    %s21 = sadd.s32 %s20, 1
    %s22 = scalar_select %p19, %s20, %s21
    %p25 = pneg %p19
    %p26 = scmp.eq.s32.totalorder %s10, 1
    %p27 = por %p25, %p26
    %p28 = scmp.ne.s32.totalorder %s20, %s23
    %p29 = scmp.eq.s32.totalorder %s10, 0
    %p30 = por %p28, %p29
    %p31 = scmp.ne.s32.totalorder %s20, %s23
    %p32 = scmp.eq.s32.totalorder %s15, 1
    %p33 = por %p31, %p32
    %p34 = scmp.ne.s32.totalorder %s23, %s24
    %p35 = scmp.eq.s32.totalorder %s15, 0
    %p36 = por %p34, %p35
    %p37 = scmp.ne.s32.totalorder %s23, %s24
    %p38 = scmp.eq.s32.totalorder %s16, 1
    %p39 = por %p37, %p38
    %p41 = scmp.ne.s32.totalorder %s24, %s40
    %p42 = scmp.eq.s32.totalorder %s16, 0
    %p43 = por %p41, %p42
    %s45 = sadd.s32 %s44, 1
    %p48 = scmp.eq.s32.totalorder %s10, 1
    %p49 = scmp.ne.s32.totalorder %s44, %s46
    %p50 = scmp.eq.s32.totalorder %s10, 0
    %p51 = por %p49, %p50
    %p52 = scmp.ne.s32.totalorder %s44, %s46
    %p53 = scmp.eq.s32.totalorder %s15, 1
    %p54 = por %p52, %p53
    %p55 = scmp.ne.s32.totalorder %s46, %s47
    %p56 = scmp.eq.s32.totalorder %s15, 0
    %p57 = por %p55, %p56
    %p58 = scmp.ne.s32.totalorder %s46, %s47
    %p59 = scmp.eq.s32.totalorder %s16, 1
    %p60 = por %p58, %p59
    %p62 = scmp.ne.s32.totalorder %s47, %s61
    %p63 = scmp.eq.s32.totalorder %s16, 0
    %p64 = por %p62, %p63
    %s66 = sadd.s32 %s65, 1
    %p69 = scmp.eq.s32.totalorder %s10, 1
    %p70 = scmp.ne.s32.totalorder %s65, %s67
    %p71 = scmp.eq.s32.totalorder %s10, 0
    %p72 = por %p70, %p71
    %p73 = scmp.ne.s32.totalorder %s65, %s67
    %p74 = scmp.eq.s32.totalorder %s15, 1
    %p75 = por %p73, %p74
    %p76 = scmp.ne.s32.totalorder %s67, %s68
    %p77 = scmp.eq.s32.totalorder %s15, 0
    %p78 = por %p76, %p77
    %p79 = scmp.ne.s32.totalorder %s67, %s68
    %p80 = scmp.eq.s32.totalorder %s16, 1
    %p81 = por %p79, %p80
    %p83 = scmp.ne.s32.totalorder %s68, %s82
    %p84 = scmp.eq.s32.totalorder %s16, 0
    %p85 = por %p83, %p84
    %s86 = ssub.s32 %s10, %s17
    %p87 = scmp.eq.s32.totalorder %s86, 0
    %s89 = sadd.s32 %s88, 1
    %s90 = scalar_select %p87, %s88, %s89
    %p93 = pneg %p87
    %p94 = scmp.eq.s32.totalorder %s10, 1
    %p95 = por %p93, %p94
    %p96 = scmp.ne.s32.totalorder %s88, %s91
    %p97 = scmp.eq.s32.totalorder %s10, 0
    %p98 = por %p96, %p97
    %p99 = scmp.ne.s32.totalorder %s88, %s91
    %p100 = scmp.eq.s32.totalorder %s15, 1
    %p101 = por %p99, %p100
    %p102 = scmp.ne.s32.totalorder %s91, %s92
    %p103 = scmp.eq.s32.totalorder %s15, 0
    %p104 = por %p102, %p103
    %p105 = scmp.ne.s32.totalorder %s91, %s92
    %p106 = scmp.eq.s32.totalorder %s16, 1
    %p107 = por %p105, %p106
    %p109 = scmp.ne.s32.totalorder %s92, %s108
    %p110 = scmp.eq.s32.totalorder %s16, 0
    %p111 = por %p109, %p110
    %s112 = ssub.s32 %s10, %s17
    %p113 = scmp.eq.s32.totalorder %s112, 0
    %s115 = sadd.s32 %s114, 1
    %s116 = scalar_select %p113, %s114, %s115
    %p119 = pneg %p113
    %p120 = scmp.eq.s32.totalorder %s10, 1
    %p121 = por %p119, %p120
    %p122 = scmp.ne.s32.totalorder %s114, %s117
    %p123 = scmp.eq.s32.totalorder %s10, 0
    %p124 = por %p122, %p123
    %p125 = scmp.ne.s32.totalorder %s114, %s117
    %p126 = scmp.eq.s32.totalorder %s15, 1
    %p127 = por %p125, %p126
    %p128 = scmp.ne.s32.totalorder %s117, %s118
    %p129 = scmp.eq.s32.totalorder %s15, 0
    %p130 = por %p128, %p129
    %p131 = scmp.ne.s32.totalorder %s117, %s118
    %p132 = scmp.eq.s32.totalorder %s16, 1
    %p133 = por %p131, %p132
    %p135 = scmp.ne.s32.totalorder %s118, %s134
    %p136 = scmp.eq.s32.totalorder %s16, 0
    %p137 = por %p135, %p136
    %p138 = scmp.le.s32.totalorder 1, %s10
    %p139 = scmp.lt.s32.totalorder %s10, 3
    %p140 = pnand %p138, %p139
    %p141 = pneg %p140
    // Predicated region
    $region9: #{resnet_features_pool.30} parent=5 // pred_check
      _
    $region10: #{resnet_features_pool.30} parent=5 // pred_check_branch
      %143 = sbr.rel (%p140) target = $region12
    $region11: #{resnet_features_pool.30} parent=5 // pred_region
      %s144 = ssub.s32 %s10, 1
      // Predicated region
      $region13: #{resnet_features_pool.30} parent=11 // pred_check
        %p145 = pneg %p57
      $region14: #{resnet_features_pool.30} parent=11 // pred_check_branch
        %147 = sbr.rel (%p145) target = $region16
      $region15: #{resnet_features_pool.30} parent=11 // pred_region
        _
      $region16: #{resnet_features_pool.30} parent=11 // pred_fallthru
        _
      // Predicated region
      $region17: #{resnet_features_pool.30} parent=11 // pred_check
        %p148 = pneg %p78
      $region18: #{resnet_features_pool.30} parent=11 // pred_check_branch
        %150 = sbr.rel (%p148) target = $region20
      $region19: #{resnet_features_pool.30} parent=11 // pred_region
        _
      $region20: #{resnet_features_pool.30} parent=11 // pred_fallthru
        _
    $region12: #{resnet_features_pool.30} parent=5 // pred_fallthru
      _
    %p151 = scmp.lt.s32.totalorder %s10, 2
    // Predicated region
    $region21: #{resnet_features_pool.30} parent=5 // pred_check
      %p152 = pneg %p151
    $region22: #{resnet_features_pool.30} parent=5 // pred_check_branch
      %154 = sbr.rel (%p152) target = $region24
    $region23: #{resnet_features_pool.30} parent=5 // pred_region
      // Predicated region
      $region25: #{resnet_features_pool.30} parent=23 // pred_check
        %p155 = pneg %p30
      $region26: #{resnet_features_pool.30} parent=23 // pred_check_branch
        %157 = sbr.rel (%p155) target = $region28
      $region27: #{resnet_features_pool.30} parent=23 // pred_region
        %s158 = smul.u32 2, %s10
        %p159 = scmp.lt.s32.totalorder %s158, 3
        %s160 = scalar_select %p159, %s158, 3
        %s161 = smul.addr %s160, 2
        %s162 = smul.addr %s161, 4
        %s163 = scalar_lea.vmem %s0, %s162
        %s164 = smul.u32 2, %s10
      $region28: #{resnet_features_pool.30} parent=23 // pred_fallthru
        _
      // Predicated region
      $region29: #{resnet_features_pool.30} parent=23 // pred_check
        %p165 = pneg %p98
      $region30: #{resnet_features_pool.30} parent=23 // pred_check_branch
        %167 = sbr.rel (%p165) target = $region32
      $region31: #{resnet_features_pool.30} parent=23 // pred_region
        %s168 = smul.u32 2, %s10
        %p169 = scmp.lt.s32.totalorder %s168, 3
        %s170 = scalar_select %p169, %s168, 3
        %s171 = smul.addr %s170, 4
        %s172 = scalar_lea.vmem %s3, %s171
        %s173 = smul.u32 2, %s10
      $region32: #{resnet_features_pool.30} parent=23 // pred_fallthru
        _
    $region24: #{resnet_features_pool.30} parent=5 // pred_fallthru
      _
    %p174 = scmp.le.s32.totalorder 1, %s10
    %p175 = scmp.lt.s32.totalorder %s10, 3
    %p176 = pnand %p174, %p175
    %p177 = pneg %p176
    // Predicated region
    $region33: #{resnet_features_pool.30} parent=5 // pred_check
      _
    $region34: #{resnet_features_pool.30} parent=5 // pred_check_branch
      %179 = sbr.rel (%p176) target = $region36
    $region35: #{resnet_features_pool.30} parent=5 // pred_region
      %s180 = ssub.s32 %s10, 1
      %s181 = smul.u32 2, %s15
      %p182 = scmp.lt.s32.totalorder %s181, 3
      %s183 = scalar_select %p182, %s181, 3
      %s184 = smul.addr %s183, 2
      %s185 = smul.addr %s184, 4
      %s186 = scalar_lea.vmem %s0, %s185
      %p187 = pneg %p36
      %p188 = pneg %p33
      %p189 = pneg %p57
      %p190 = pneg %p54
      %p191 = pneg %p78
      %p192 = pneg %p75
      %s193 = smul.u32 2, %s15
      %p194 = scmp.lt.s32.totalorder %s193, 3
      %s195 = scalar_select %p194, %s193, 3
      %s196 = smul.addr %s195, 4
      %s197 = scalar_lea.vmem %s3, %s196
      %p198 = pneg %p104
      %p199 = pneg %p101
      %p200 = pneg %p130
      %p201 = pneg %p127
      %s202 = smul.u32 2, %s15
      %p203 = scmp.lt.s32.totalorder %s202, 3
      %s204 = scalar_select %p203, %s202, 3
      %s205 = smul.addr %s204, 4
      %s206 = scalar_lea.vmem %s4, %s205
      %s207 = smul.u32 2, %s15
      %p208 = scmp.lt.s32.totalorder %s207, 3
      %s209 = scalar_select %p208, %s207, 3
      %s210 = smul.addr %s209, 2
      %s211 = smul.addr %s210, 4
      %s212 = scalar_lea.vmem %s0, %s211
      %s213 = smul.u32 2, %s15
      %s214 = smul.u32 2, %s15
      %p215 = scmp.lt.s32.totalorder %s214, 3
      %s216 = scalar_select %p215, %s214, 3
      %s217 = smul.addr %s216, 4
      %s218 = scalar_lea.vmem %s3, %s217
      %s219 = smul.u32 2, %s15
      %s220 = smul.u32 2, %s15
      %p221 = scmp.lt.s32.totalorder %s220, 3
      %s222 = scalar_select %p221, %s220, 3
      %s223 = smul.addr %s222, 4
      %s224 = scalar_lea.vmem %s4, %s223
      %s225 = smul.u32 2, %s15
      %v226 = vld [vmem:[%s212] sm:$0xff]
      %v227 = vld [vmem:[%s212 + $0x8] sm:$0xff]
      %v228 = vld [vmem:[%s1] sm:$0xf]
      %v229 = vld [vmem:[%s1 + $0x4] sm:$0xf]
      %v230 = vld [vmem:[%s1 + $0x8] sm:$0xf]
      %v231 = vld [vmem:[%s1 + $0xc] sm:$0xf]
      %v232 = vld [vmem:[%s1 + $0x10] sm:$0xf]
      %v233 = vld [vmem:[%s1 + $0x14] sm:$0xf]
      %v234 = vld [vmem:[%s1 + $0x18] sm:$0xf]
      %v235 = vld [vmem:[%s1 + $0x1c] sm:$0xf]
      %v236 = vld [vmem:[%s1 + $0x20] sm:$0xf]
      %v237 = vld [vmem:[%s1 + $0x24] sm:$0xf]
      %v238 = vld [vmem:[%s1 + $0x28] sm:$0xf]
      %v239 = vld [vmem:[%s1 + $0x2c] sm:$0xf]
      %v240 = vld [vmem:[%s1 + $0x30] sm:$0xf]
      %v241 = vld [vmem:[%s1 + $0x34] sm:$0xf]
      %v242 = vld [vmem:[%s1 + $0x38] sm:$0xf]
      %v243 = vld [vmem:[%s1 + $0x3c] sm:$0xf]
      %v244 = vld [vmem:[%s1 + $0x40] sm:$0xf]
      %v245 = vld [vmem:[%s1 + $0x44] sm:$0xf]
      %v246 = vld [vmem:[%s1 + $0x48] sm:$0xf]
      %v247 = vld [vmem:[%s1 + $0x4c] sm:$0xf]
      %v248 = vld [vmem:[%s1 + $0x50] sm:$0xf]
      %v249 = vld [vmem:[%s1 + $0x54] sm:$0xf]
      %v250 = vld [vmem:[%s1 + $0x58] sm:$0xf]
      %v251 = vld [vmem:[%s1 + $0x5c] sm:$0xf]
      %v252 = vld [vmem:[%s1 + $0x60] sm:$0xf]
      %v253 = vld [vmem:[%s1 + $0x64] sm:$0xf]
      %v254 = vld [vmem:[%s1 + $0x68] sm:$0xf]
      %v255 = vld [vmem:[%s1 + $0x6c] sm:$0xf]
      %v256 = vld [vmem:[%s1 + $0x70] sm:$0xf]
      %v257 = vld [vmem:[%s1 + $0x74] sm:$0xf]
      %v258 = vld [vmem:[%s1 + $0x78] sm:$0xf]
      %v259 = vld [vmem:[%s1 + $0x7c] sm:$0xf]
      %v260 = vld [vmem:[%s2] sm:$0x1]
      %v262 = vperm.slane %v260, 0
      %v266 = vunpack.c.l.b16 %v226
      %v267 = vunpack.c.h.b16 %v226
      %v268 = vunpack.c.l.b16 %v227
      %v269 = vunpack.c.h.b16 %v227
      %v270 = vpack.c.b16 %v268, %v266
      %v271 = vpack.c.b16 %v269, %v267
      %v306 = vunpack.c.l.b16 %v228
      %v307 = vunpack.c.l.b16 %v229
      %v308 = vunpack.c.l.b16 %v230
      %v309 = vunpack.c.l.b16 %v231
      %v310 = vunpack.c.l.b16 %v232
      %v311 = vunpack.c.l.b16 %v233
      %v312 = vunpack.c.l.b16 %v234
      %v313 = vunpack.c.l.b16 %v235
      %v314 = vunpack.c.l.b16 %v236
      %v315 = vunpack.c.l.b16 %v237
      %v316 = vunpack.c.l.b16 %v238
      %v317 = vunpack.c.l.b16 %v239
      %v318 = vunpack.c.l.b16 %v240
      %v319 = vunpack.c.l.b16 %v241
      %v320 = vunpack.c.l.b16 %v242
      %v321 = vunpack.c.l.b16 %v243
      %v322 = vunpack.c.l.b16 %v244
      %v323 = vunpack.c.l.b16 %v245
      %v324 = vunpack.c.l.b16 %v246
      %v325 = vunpack.c.l.b16 %v247
      %v326 = vunpack.c.l.b16 %v248
      %v327 = vunpack.c.l.b16 %v249
      %v328 = vunpack.c.l.b16 %v250
      %v329 = vunpack.c.l.b16 %v251
      %v330 = vunpack.c.l.b16 %v252
      %v331 = vunpack.c.l.b16 %v253
      %v332 = vunpack.c.l.b16 %v254
      %v333 = vunpack.c.l.b16 %v255
      %v334 = vunpack.c.l.b16 %v256
      %v335 = vunpack.c.l.b16 %v257
      %v336 = vunpack.c.l.b16 %v258
      %v337 = vunpack.c.l.b16 %v259
      %v338 = vpack.c.b16 %v307, %v306
      %v339 = vpack.c.b16 %v309, %v308
      %v340 = vpack.c.b16 %v311, %v310
      %v341 = vpack.c.b16 %v313, %v312
      %v342 = vpack.c.b16 %v315, %v314
      %v343 = vpack.c.b16 %v317, %v316
      %v344 = vpack.c.b16 %v319, %v318
      %v345 = vpack.c.b16 %v321, %v320
      %v346 = vpack.c.b16 %v323, %v322
      %v347 = vpack.c.b16 %v325, %v324
      %v348 = vpack.c.b16 %v327, %v326
      %v349 = vpack.c.b16 %v329, %v328
      %v350 = vpack.c.b16 %v331, %v330
      %v351 = vpack.c.b16 %v333, %v332
      %v352 = vpack.c.b16 %v335, %v334
      %v353 = vpack.c.b16 %v337, %v336
      %370 = vmatpush.bf16.msra.mxu0 %v345
      %371 = vmatpush.bf16.msra.mxu0 %v344
      %372 = vmatpush.bf16.msra.mxu0 %v343
      %373 = vmatpush.bf16.msra.mxu0 %v342
      %374 = vmatpush.bf16.msra.mxu0 %v341
      %375 = vmatpush.bf16.msra.mxu0 %v340
      %376 = vmatpush.bf16.msra.mxu0 %v339
      %377 = vmatpush.bf16.msra.mxu0 %v338
      %378 = vmatmul.bf16.gmra.mxu0 %v270
      %v379 = vpop.f32.mrf.mxu0
      %v380 = vadd.f32 %v262, %v379
      %v381 = vpop.f32.mrf.mxu0
      %v382 = vadd.f32 %v262, %v381
      %383 = vdwg.mxu0
      %384 = vmatpush.bf16.msra.mxu0 %v353
      %385 = vmatpush.bf16.msra.mxu0 %v352
      %386 = vmatpush.bf16.msra.mxu0 %v351
      %387 = vmatpush.bf16.msra.mxu0 %v350
      %388 = vmatpush.bf16.msra.mxu0 %v349
      %389 = vmatpush.bf16.msra.mxu0 %v348
      %390 = vmatpush.bf16.msra.mxu0 %v347
      %391 = vmatpush.bf16.msra.mxu0 %v346
      %392 = vmatmul.bf16.gmra.mxu0 %v271
      %v393 = vpop.f32.mrf.mxu0
      %v394 = vadd.f32 %v380, %v393
      %v395 = vpop.f32.mrf.mxu0
      %v396 = vadd.f32 %v382, %v395
      %397 = vdwg.mxu0
      %v398 = vld [vmem:[%s218] sm:$0xf]
      %v399 = vld [vmem:[%s218 + $0x4] sm:$0xf]
      %v400 = vunpack.c.l.bf16 %v398
      %v401 = vunpack.c.l.bf16 %v399
      %v402 = vadd.f32 %v394, %v400
      %v403 = vadd.f32 %v396, %v401
      %v404 = vmax.f32 %v402, 0.0
      %v405 = vmax.f32 %v403, 0.0
      %v406 = vpack.c.bf16 %v404, %v404
      %v407 = vpack.c.bf16 %v405, %v405
      %408 = vst [vmem:[%s224] sm:$0xf] %v406
      %409 = vst [vmem:[%s224 + $0x4] sm:$0xf] %v407
      %s410 = smul.u32 2, %s15
      %p411 = scmp.lt.s32.totalorder %s410, 3
      %s412 = scalar_select %p411, %s410, 3
      %s413 = smul.addr %s412, 4
      %s414 = scalar_lea.vmem %s4, %s413
      // Predicated region
      $region37: #{resnet_features_pool.30} parent=35 // pred_check
        %p415 = pneg %p127
      $region38: #{resnet_features_pool.30} parent=35 // pred_check_branch
        %417 = sbr.rel (%p415) target = $region40
      $region39: #{resnet_features_pool.30} parent=35 // pred_region
        %s418 = smul.u32 2, %s15
      $region40: #{resnet_features_pool.30} parent=35 // pred_fallthru
        _
    $region36: #{resnet_features_pool.30} parent=5 // pred_fallthru
      _
    %p419 = scmp.le.s32.totalorder 2, %s10
    // Predicated region
    $region41: #{resnet_features_pool.30} parent=5 // pred_check
      %p420 = pneg %p419
    $region42: #{resnet_features_pool.30} parent=5 // pred_check_branch
      %422 = sbr.rel (%p420) target = $region44
    $region43: #{resnet_features_pool.30} parent=5 // pred_region
      %s423 = ssub.s32 %s10, 2
      // Predicated region
      $region45: #{resnet_features_pool.30} parent=43 // pred_check
        %p424 = pneg %p133
      $region46: #{resnet_features_pool.30} parent=43 // pred_check_branch
        %426 = sbr.rel (%p424) target = $region48
      $region47: #{resnet_features_pool.30} parent=43 // pred_region
        %s427 = smul.u32 2, %s16
        %p428 = scmp.lt.s32.totalorder %s427, 3
        %s429 = scalar_select %p428, %s427, 3
        %s430 = smul.addr %s429, 4
        %s431 = scalar_lea.vmem %s4, %s430
      $region48: #{resnet_features_pool.30} parent=43 // pred_fallthru
        _
    $region44: #{resnet_features_pool.30} parent=5 // pred_fallthru
      _
  $region6: #{resnet_features_pool.30} parent=0 // loop_footer
    %s14 = sadd.s32 1, %s10
  $region7: #{resnet_features_pool.30} parent=0 // loop_footer_branch
    %9 = sbr.rel target = $region3
  $region8: #{resnet_features_pool.30} parent=0 // loop_exit
    _

// kernel: resnet_features_pool.31
$region0: #{resnet_features_pool.31}
  #allocation0 [shape = 'u32[]', space=smem, size = 0x4, offset = 0x4, fixed_abs, tag = 'smem constant byte address 0x4 - core index']
  #allocation1 [shape = 'u32[72,128]{1,0:T(1,128)}', space=vmem, size = 0x9000, scoped, tag = 'internal scratch']
  %s0 = inlined_call_operand.vmem [shape: bf16[32,256], index: 0, kind: input, shape index: {}]
  %s1 = inlined_call_operand.vmem [shape: bf16[256,128], index: 1, kind: input, shape index: {}]
  %s2 = inlined_call_operand.vmem [shape: f32[1,128], index: 2, kind: input, shape index: {}]
  %s3 = inlined_call_operand.vmem [shape: bf16[32,128], index: 3, kind: output, shape index: {}]
  %s4 = sld [smem:[#allocation0]]
  $region45: #{resnet_features_pool.31} parent=0
    _
  %s6 = ssub.s32 1, %s4
  %s7 = scalar_select 0, %s6, %s4
  loop: start=0, step=1, limit=4
  $region2: #{resnet_features_pool.31} parent=0 // loop_pre_header
    _
  $region3: #{resnet_features_pool.31} parent=0 // loop_header
    %s9 = sphi 0, %s13
    %p10 = scmp.ge.s32.totalorder %s9, 4
    %s19 = sphi 0, %s21
    %s22 = sphi 0, %s19
    %s23 = sphi 0, %s22
    %s39 = sphi 0, %s23
    %s43 = sphi 0, %s43
    %s45 = sphi 0, %s43
    %s46 = sphi 0, %s45
    %s60 = sphi 0, %s46
    %s64 = sphi 0, %s64
    %s66 = sphi 0, %s64
    %s67 = sphi 0, %s66
    %s81 = sphi 0, %s67
    %s87 = sphi 0, %s89
    %s90 = sphi 0, %s87
    %s91 = sphi 0, %s90
    %s107 = sphi 0, %s91
  $region4: #{resnet_features_pool.31} parent=0 // loop_header_branch
    %12 = sbr.rel (%p10) target = $region8
  $region5: #{resnet_features_pool.31} parent=0 // loop_body
    %s14 = ssub.s32 %s9, 1
    %s15 = ssub.s32 %s9, 2
    %s16 = sadd.s32 %s9, 1
    %s17 = ssub.s32 %s9, %s16
    %p18 = scmp.eq.s32.totalorder %s17, 0
    %s20 = sadd.s32 %s19, 1
    %s21 = scalar_select %p18, %s19, %s20
    %p24 = pneg %p18
    %p25 = scmp.eq.s32.totalorder %s9, 1
    %p26 = por %p24, %p25
    %p27 = scmp.ne.s32.totalorder %s19, %s22
    %p28 = scmp.eq.s32.totalorder %s9, 0
    %p29 = por %p27, %p28
    %p30 = scmp.ne.s32.totalorder %s19, %s22
    %p31 = scmp.eq.s32.totalorder %s14, 1
    %p32 = por %p30, %p31
    %p33 = scmp.ne.s32.totalorder %s22, %s23
    %p34 = scmp.eq.s32.totalorder %s14, 0
    %p35 = por %p33, %p34
    %p36 = scmp.ne.s32.totalorder %s22, %s23
    %p37 = scmp.eq.s32.totalorder %s15, 1
    %p38 = por %p36, %p37
    %p40 = scmp.ne.s32.totalorder %s23, %s39
    %p41 = scmp.eq.s32.totalorder %s15, 0
    %p42 = por %p40, %p41
    %s44 = sadd.s32 %s43, 1
    %p47 = scmp.eq.s32.totalorder %s9, 1
    %p48 = scmp.ne.s32.totalorder %s43, %s45
    %p49 = scmp.eq.s32.totalorder %s9, 0
    %p50 = por %p48, %p49
    %p51 = scmp.ne.s32.totalorder %s43, %s45
    %p52 = scmp.eq.s32.totalorder %s14, 1
    %p53 = por %p51, %p52
    %p54 = scmp.ne.s32.totalorder %s45, %s46
    %p55 = scmp.eq.s32.totalorder %s14, 0
    %p56 = por %p54, %p55
    %p57 = scmp.ne.s32.totalorder %s45, %s46
    %p58 = scmp.eq.s32.totalorder %s15, 1
    %p59 = por %p57, %p58
    %p61 = scmp.ne.s32.totalorder %s46, %s60
    %p62 = scmp.eq.s32.totalorder %s15, 0
    %p63 = por %p61, %p62
    %s65 = sadd.s32 %s64, 1
    %p68 = scmp.eq.s32.totalorder %s9, 1
    %p69 = scmp.ne.s32.totalorder %s64, %s66
    %p70 = scmp.eq.s32.totalorder %s9, 0
    %p71 = por %p69, %p70
    %p72 = scmp.ne.s32.totalorder %s64, %s66
    %p73 = scmp.eq.s32.totalorder %s14, 1
    %p74 = por %p72, %p73
    %p75 = scmp.ne.s32.totalorder %s66, %s67
    %p76 = scmp.eq.s32.totalorder %s14, 0
    %p77 = por %p75, %p76
    %p78 = scmp.ne.s32.totalorder %s66, %s67
    %p79 = scmp.eq.s32.totalorder %s15, 1
    %p80 = por %p78, %p79
    %p82 = scmp.ne.s32.totalorder %s67, %s81
    %p83 = scmp.eq.s32.totalorder %s15, 0
    %p84 = por %p82, %p83
    %s85 = ssub.s32 %s9, %s16
    %p86 = scmp.eq.s32.totalorder %s85, 0
    %s88 = sadd.s32 %s87, 1
    %s89 = scalar_select %p86, %s87, %s88
    %p92 = pneg %p86
    %p93 = scmp.eq.s32.totalorder %s9, 1
    %p94 = por %p92, %p93
    %p95 = scmp.ne.s32.totalorder %s87, %s90
    %p96 = scmp.eq.s32.totalorder %s9, 0
    %p97 = por %p95, %p96
    %p98 = scmp.ne.s32.totalorder %s87, %s90
    %p99 = scmp.eq.s32.totalorder %s14, 1
    %p100 = por %p98, %p99
    %p101 = scmp.ne.s32.totalorder %s90, %s91
    %p102 = scmp.eq.s32.totalorder %s14, 0
    %p103 = por %p101, %p102
    %p104 = scmp.ne.s32.totalorder %s90, %s91
    %p105 = scmp.eq.s32.totalorder %s15, 1
    %p106 = por %p104, %p105
    %p108 = scmp.ne.s32.totalorder %s91, %s107
    %p109 = scmp.eq.s32.totalorder %s15, 0
    %p110 = por %p108, %p109
    %p111 = scmp.le.s32.totalorder 1, %s9
    %p112 = scmp.lt.s32.totalorder %s9, 3
    %p113 = pnand %p111, %p112
    %p114 = pneg %p113
    // Predicated region
    $region9: #{resnet_features_pool.31} parent=5 // pred_check
      _
    $region10: #{resnet_features_pool.31} parent=5 // pred_check_branch
      %116 = sbr.rel (%p113) target = $region12
    $region11: #{resnet_features_pool.31} parent=5 // pred_region
      %s117 = ssub.s32 %s9, 1
      // Predicated region
      $region13: #{resnet_features_pool.31} parent=11 // pred_check
        %p118 = pneg %p56
      $region14: #{resnet_features_pool.31} parent=11 // pred_check_branch
        %120 = sbr.rel (%p118) target = $region16
      $region15: #{resnet_features_pool.31} parent=11 // pred_region
        _
      $region16: #{resnet_features_pool.31} parent=11 // pred_fallthru
        _
      // Predicated region
      $region17: #{resnet_features_pool.31} parent=11 // pred_check
        %p121 = pneg %p77
      $region18: #{resnet_features_pool.31} parent=11 // pred_check_branch
        %123 = sbr.rel (%p121) target = $region20
      $region19: #{resnet_features_pool.31} parent=11 // pred_region
        _
      $region20: #{resnet_features_pool.31} parent=11 // pred_fallthru
        _
    $region12: #{resnet_features_pool.31} parent=5 // pred_fallthru
      _
    %p124 = scmp.lt.s32.totalorder %s9, 2
    // Predicated region
    $region21: #{resnet_features_pool.31} parent=5 // pred_check
      %p125 = pneg %p124
    $region22: #{resnet_features_pool.31} parent=5 // pred_check_branch
      %127 = sbr.rel (%p125) target = $region24
    $region23: #{resnet_features_pool.31} parent=5 // pred_region
      // Predicated region
      $region25: #{resnet_features_pool.31} parent=23 // pred_check
        %p128 = pneg %p29
      $region26: #{resnet_features_pool.31} parent=23 // pred_check_branch
        %130 = sbr.rel (%p128) target = $region28
      $region27: #{resnet_features_pool.31} parent=23 // pred_region
        %s131 = smul.u32 2, %s9
        %p132 = scmp.lt.s32.totalorder %s131, 3
        %s133 = scalar_select %p132, %s131, 3
        %s134 = smul.addr %s133, 2
        %s135 = smul.addr %s134, 4
        %s136 = scalar_lea.vmem %s0, %s135
        %s137 = smul.u32 2, %s9
      $region28: #{resnet_features_pool.31} parent=23 // pred_fallthru
        _
    $region24: #{resnet_features_pool.31} parent=5 // pred_fallthru
      _
    %p138 = scmp.le.s32.totalorder 1, %s9
    %p139 = scmp.lt.s32.totalorder %s9, 3
    %p140 = pnand %p138, %p139
    %p141 = pneg %p140
    // Predicated region
    $region29: #{resnet_features_pool.31} parent=5 // pred_check
      _
    $region30: #{resnet_features_pool.31} parent=5 // pred_check_branch
      %143 = sbr.rel (%p140) target = $region32
    $region31: #{resnet_features_pool.31} parent=5 // pred_region
      %s144 = ssub.s32 %s9, 1
      %s145 = smul.u32 2, %s14
      %p146 = scmp.lt.s32.totalorder %s145, 3
      %s147 = scalar_select %p146, %s145, 3
      %s148 = smul.addr %s147, 2
      %s149 = smul.addr %s148, 4
      %s150 = scalar_lea.vmem %s0, %s149
      %p151 = pneg %p35
      %p152 = pneg %p32
      %p153 = pneg %p56
      %p154 = pneg %p53
      %p155 = pneg %p77
      %p156 = pneg %p74
      %p157 = pneg %p103
      %p158 = pneg %p100
      %s159 = smul.u32 2, %s14
      %p160 = scmp.lt.s32.totalorder %s159, 3
      %s161 = scalar_select %p160, %s159, 3
      %s162 = smul.addr %s161, 4
      %s163 = scalar_lea.vmem %s3, %s162
      %s164 = smul.u32 2, %s14
      %p165 = scmp.lt.s32.totalorder %s164, 3
      %s166 = scalar_select %p165, %s164, 3
      %s167 = smul.addr %s166, 2
      %s168 = smul.addr %s167, 4
      %s169 = scalar_lea.vmem %s0, %s168
      %s170 = smul.u32 2, %s14
      %s171 = smul.u32 2, %s14
      %p172 = scmp.lt.s32.totalorder %s171, 3
      %s173 = scalar_select %p172, %s171, 3
      %s174 = smul.addr %s173, 4
      %s175 = scalar_lea.vmem %s3, %s174
      %s176 = smul.u32 2, %s14
      %v177 = vld [vmem:[%s169] sm:$0xff]
      %v178 = vld [vmem:[%s169 + $0x8] sm:$0xff]
      %v179 = vld [vmem:[%s1] sm:$0xf]
      %v180 = vld [vmem:[%s1 + $0x4] sm:$0xf]
      %v181 = vld [vmem:[%s1 + $0x8] sm:$0xf]
      %v182 = vld [vmem:[%s1 + $0xc] sm:$0xf]
      %v183 = vld [vmem:[%s1 + $0x10] sm:$0xf]
      %v184 = vld [vmem:[%s1 + $0x14] sm:$0xf]
      %v185 = vld [vmem:[%s1 + $0x18] sm:$0xf]
      %v186 = vld [vmem:[%s1 + $0x1c] sm:$0xf]
      %v187 = vld [vmem:[%s1 + $0x20] sm:$0xf]
      %v188 = vld [vmem:[%s1 + $0x24] sm:$0xf]
      %v189 = vld [vmem:[%s1 + $0x28] sm:$0xf]
      %v190 = vld [vmem:[%s1 + $0x2c] sm:$0xf]
      %v191 = vld [vmem:[%s1 + $0x30] sm:$0xf]
      %v192 = vld [vmem:[%s1 + $0x34] sm:$0xf]
      %v193 = vld [vmem:[%s1 + $0x38] sm:$0xf]
      %v194 = vld [vmem:[%s1 + $0x3c] sm:$0xf]
      %v195 = vld [vmem:[%s1 + $0x40] sm:$0xf]
      %v196 = vld [vmem:[%s1 + $0x44] sm:$0xf]
      %v197 = vld [vmem:[%s1 + $0x48] sm:$0xf]
      %v198 = vld [vmem:[%s1 + $0x4c] sm:$0xf]
      %v199 = vld [vmem:[%s1 + $0x50] sm:$0xf]
      %v200 = vld [vmem:[%s1 + $0x54] sm:$0xf]
      %v201 = vld [vmem:[%s1 + $0x58] sm:$0xf]
      %v202 = vld [vmem:[%s1 + $0x5c] sm:$0xf]
      %v203 = vld [vmem:[%s1 + $0x60] sm:$0xf]
      %v204 = vld [vmem:[%s1 + $0x64] sm:$0xf]
      %v205 = vld [vmem:[%s1 + $0x68] sm:$0xf]
      %v206 = vld [vmem:[%s1 + $0x6c] sm:$0xf]
      %v207 = vld [vmem:[%s1 + $0x70] sm:$0xf]
      %v208 = vld [vmem:[%s1 + $0x74] sm:$0xf]
      %v209 = vld [vmem:[%s1 + $0x78] sm:$0xf]
      %v210 = vld [vmem:[%s1 + $0x7c] sm:$0xf]
      %v211 = vld [vmem:[%s2] sm:$0x1]
      %v213 = vperm.slane %v211, 0
      %v217 = vunpack.c.l.b16 %v177
      %v218 = vunpack.c.h.b16 %v177
      %v219 = vunpack.c.l.b16 %v178
      %v220 = vunpack.c.h.b16 %v178
      %v221 = vpack.c.b16 %v219, %v217
      %v222 = vpack.c.b16 %v220, %v218
      %v257 = vunpack.c.l.b16 %v179
      %v258 = vunpack.c.l.b16 %v180
      %v259 = vunpack.c.l.b16 %v181
      %v260 = vunpack.c.l.b16 %v182
      %v261 = vunpack.c.l.b16 %v183
      %v262 = vunpack.c.l.b16 %v184
      %v263 = vunpack.c.l.b16 %v185
      %v264 = vunpack.c.l.b16 %v186
      %v265 = vunpack.c.l.b16 %v187
      %v266 = vunpack.c.l.b16 %v188
      %v267 = vunpack.c.l.b16 %v189
      %v268 = vunpack.c.l.b16 %v190
      %v269 = vunpack.c.l.b16 %v191
      %v270 = vunpack.c.l.b16 %v192
      %v271 = vunpack.c.l.b16 %v193
      %v272 = vunpack.c.l.b16 %v194
      %v273 = vunpack.c.l.b16 %v195
      %v274 = vunpack.c.l.b16 %v196
      %v275 = vunpack.c.l.b16 %v197
      %v276 = vunpack.c.l.b16 %v198
      %v277 = vunpack.c.l.b16 %v199
      %v278 = vunpack.c.l.b16 %v200
      %v279 = vunpack.c.l.b16 %v201
      %v280 = vunpack.c.l.b16 %v202
      %v281 = vunpack.c.l.b16 %v203
      %v282 = vunpack.c.l.b16 %v204
      %v283 = vunpack.c.l.b16 %v205
      %v284 = vunpack.c.l.b16 %v206
      %v285 = vunpack.c.l.b16 %v207
      %v286 = vunpack.c.l.b16 %v208
      %v287 = vunpack.c.l.b16 %v209
      %v288 = vunpack.c.l.b16 %v210
      %v289 = vpack.c.b16 %v258, %v257
      %v290 = vpack.c.b16 %v260, %v259
      %v291 = vpack.c.b16 %v262, %v261
      %v292 = vpack.c.b16 %v264, %v263
      %v293 = vpack.c.b16 %v266, %v265
      %v294 = vpack.c.b16 %v268, %v267
      %v295 = vpack.c.b16 %v270, %v269
      %v296 = vpack.c.b16 %v272, %v271
      %v297 = vpack.c.b16 %v274, %v273
      %v298 = vpack.c.b16 %v276, %v275
      %v299 = vpack.c.b16 %v278, %v277
      %v300 = vpack.c.b16 %v280, %v279
      %v301 = vpack.c.b16 %v282, %v281
      %v302 = vpack.c.b16 %v284, %v283
      %v303 = vpack.c.b16 %v286, %v285
      %v304 = vpack.c.b16 %v288, %v287
      %321 = vmatpush.bf16.msra.mxu0 %v296
      %322 = vmatpush.bf16.msra.mxu0 %v295
      %323 = vmatpush.bf16.msra.mxu0 %v294
      %324 = vmatpush.bf16.msra.mxu0 %v293
      %325 = vmatpush.bf16.msra.mxu0 %v292
      %326 = vmatpush.bf16.msra.mxu0 %v291
      %327 = vmatpush.bf16.msra.mxu0 %v290
      %328 = vmatpush.bf16.msra.mxu0 %v289
      %329 = vmatmul.bf16.gmra.mxu0 %v221
      %v330 = vpop.f32.mrf.mxu0
      %v331 = vadd.f32 %v213, %v330
      %v332 = vpop.f32.mrf.mxu0
      %v333 = vadd.f32 %v213, %v332
      %334 = vdwg.mxu0
      %335 = vmatpush.bf16.msra.mxu0 %v304
      %336 = vmatpush.bf16.msra.mxu0 %v303
      %337 = vmatpush.bf16.msra.mxu0 %v302
      %338 = vmatpush.bf16.msra.mxu0 %v301
      %339 = vmatpush.bf16.msra.mxu0 %v300
      %340 = vmatpush.bf16.msra.mxu0 %v299
      %341 = vmatpush.bf16.msra.mxu0 %v298
      %342 = vmatpush.bf16.msra.mxu0 %v297
      %343 = vmatmul.bf16.gmra.mxu0 %v222
      %v344 = vpop.f32.mrf.mxu0
      %v345 = vadd.f32 %v331, %v344
      %v346 = vpop.f32.mrf.mxu0
      %v347 = vadd.f32 %v333, %v346
      %348 = vdwg.mxu0
      %v349 = vmax.f32 %v345, 0.0
      %v350 = vmax.f32 %v347, 0.0
      %v351 = vpack.c.bf16 %v349, %v349
      %v352 = vpack.c.bf16 %v350, %v350
      %353 = vst [vmem:[%s175] sm:$0xf] %v351
      %354 = vst [vmem:[%s175 + $0x4] sm:$0xf] %v352
      %s355 = smul.u32 2, %s14
      %p356 = scmp.lt.s32.totalorder %s355, 3
      %s357 = scalar_select %p356, %s355, 3
      %s358 = smul.addr %s357, 4
      %s359 = scalar_lea.vmem %s3, %s358
      // Predicated region
      $region33: #{resnet_features_pool.31} parent=31 // pred_check
        %p360 = pneg %p100
      $region34: #{resnet_features_pool.31} parent=31 // pred_check_branch
        %362 = sbr.rel (%p360) target = $region36
      $region35: #{resnet_features_pool.31} parent=31 // pred_region
        %s363 = smul.u32 2, %s14
      $region36: #{resnet_features_pool.31} parent=31 // pred_fallthru
        _
    $region32: #{resnet_features_pool.31} parent=5 // pred_fallthru
      _
    %p364 = scmp.le.s32.totalorder 2, %s9
    // Predicated region
    $region37: #{resnet_features_pool.31} parent=5 // pred_check
      %p365 = pneg %p364
    $region38: #{resnet_features_pool.31} parent=5 // pred_check_branch
      %367 = sbr.rel (%p365) target = $region40
    $region39: #{resnet_features_pool.31} parent=5 // pred_region
      %s368 = ssub.s32 %s9, 2
      // Predicated region
      $region41: #{resnet_features_pool.31} parent=39 // pred_check
        %p369 = pneg %p106
      $region42: #{resnet_features_pool.31} parent=39 // pred_check_branch
        %371 = sbr.rel (%p369) target = $region44
      $region43: #{resnet_features_pool.31} parent=39 // pred_region
        %s372 = smul.u32 2, %s15
        %p373 = scmp.lt.s32.totalorder %s372, 3
        %s374 = scalar_select %p373, %s372, 3
        %s375 = smul.addr %s374, 4
        %s376 = scalar_lea.vmem %s3, %s375
      $region44: #{resnet_features_pool.31} parent=39 // pred_fallthru
        _
    $region40: #{resnet_features_pool.31} parent=5 // pred_fallthru
      _
  $region6: #{resnet_features_pool.31} parent=0 // loop_footer
    %s13 = sadd.s32 1, %s9
  $region7: #{resnet_features_pool.31} parent=0 // loop_footer_branch
    %8 = sbr.rel target = $region3
  $region8: #{resnet_features_pool.31} parent=0 // loop_exit
    _

// kernel: resnet_features_pool.33
$region0: #{resnet_features_pool.33}
  #allocation0 [shape = 'u32[]', space=smem, size = 0x4, offset = 0x4, fixed_abs, tag = 'smem constant byte address 0x4 - core index']
  #allocation1 [shape = 'u32[72,128]{1,0:T(1,128)}', space=vmem, size = 0x9000, scoped, tag = 'internal scratch']
  %s0 = inlined_call_operand.vmem [shape: bf16[8,256], index: 0, kind: input, shape index: {}]
  %s1 = inlined_call_operand.vmem [shape: bf16[256,128], index: 1, kind: input, shape index: {}]
  %s2 = inlined_call_operand.vmem [shape: f32[1,128], index: 2, kind: input, shape index: {}]
  %s3 = inlined_call_operand.vmem [shape: bf16[8,128], index: 3, kind: output, shape index: {}]
  %s4 = sld [smem:[#allocation0]]
  $region22: #{resnet_features_pool.33} parent=0
    _
  %s6 = ssub.s32 1, %s4
  %s7 = scalar_select 0, %s6, %s4
  // Predicated region
  $region2: #{resnet_features_pool.33} parent=0 // pred_check
    _
  $region3: #{resnet_features_pool.33} parent=0 // pred_check_branch
    %9 = sbr.rel (0) target = $region5
  $region4: #{resnet_features_pool.33} parent=0 // pred_region
    _
  $region5: #{resnet_features_pool.33} parent=0 // pred_fallthru
    _
  // Predicated region
  $region6: #{resnet_features_pool.33} parent=0 // pred_check
    _
  $region7: #{resnet_features_pool.33} parent=0 // pred_check_branch
    %11 = sbr.rel (0) target = $region9
  $region8: #{resnet_features_pool.33} parent=0 // pred_region
    _
  $region9: #{resnet_features_pool.33} parent=0 // pred_fallthru
    _
  // Predicated region
  $region10: #{resnet_features_pool.33} parent=0 // pred_check
    _
  $region11: #{resnet_features_pool.33} parent=0 // pred_check_branch
    %13 = sbr.rel (0) target = $region13
  $region12: #{resnet_features_pool.33} parent=0 // pred_region
    _
  $region13: #{resnet_features_pool.33} parent=0 // pred_fallthru
    _
  %v14 = vld [vmem:[%s0] sm:$0xff]
  %v15 = vld [vmem:[%s1] sm:$0xf]
  %v16 = vld [vmem:[%s1 + $0x4] sm:$0xf]
  %v17 = vld [vmem:[%s1 + $0x8] sm:$0xf]
  %v18 = vld [vmem:[%s1 + $0xc] sm:$0xf]
  %v19 = vld [vmem:[%s1 + $0x10] sm:$0xf]
  %v20 = vld [vmem:[%s1 + $0x14] sm:$0xf]
  %v21 = vld [vmem:[%s1 + $0x18] sm:$0xf]
  %v22 = vld [vmem:[%s1 + $0x1c] sm:$0xf]
  %v23 = vld [vmem:[%s1 + $0x20] sm:$0xf]
  %v24 = vld [vmem:[%s1 + $0x24] sm:$0xf]
  %v25 = vld [vmem:[%s1 + $0x28] sm:$0xf]
  %v26 = vld [vmem:[%s1 + $0x2c] sm:$0xf]
  %v27 = vld [vmem:[%s1 + $0x30] sm:$0xf]
  %v28 = vld [vmem:[%s1 + $0x34] sm:$0xf]
  %v29 = vld [vmem:[%s1 + $0x38] sm:$0xf]
  %v30 = vld [vmem:[%s1 + $0x3c] sm:$0xf]
  %v31 = vld [vmem:[%s1 + $0x40] sm:$0xf]
  %v32 = vld [vmem:[%s1 + $0x44] sm:$0xf]
  %v33 = vld [vmem:[%s1 + $0x48] sm:$0xf]
  %v34 = vld [vmem:[%s1 + $0x4c] sm:$0xf]
  %v35 = vld [vmem:[%s1 + $0x50] sm:$0xf]
  %v36 = vld [vmem:[%s1 + $0x54] sm:$0xf]
  %v37 = vld [vmem:[%s1 + $0x58] sm:$0xf]
  %v38 = vld [vmem:[%s1 + $0x5c] sm:$0xf]
  %v39 = vld [vmem:[%s1 + $0x60] sm:$0xf]
  %v40 = vld [vmem:[%s1 + $0x64] sm:$0xf]
  %v41 = vld [vmem:[%s1 + $0x68] sm:$0xf]
  %v42 = vld [vmem:[%s1 + $0x6c] sm:$0xf]
  %v43 = vld [vmem:[%s1 + $0x70] sm:$0xf]
  %v44 = vld [vmem:[%s1 + $0x74] sm:$0xf]
  %v45 = vld [vmem:[%s1 + $0x78] sm:$0xf]
  %v46 = vld [vmem:[%s1 + $0x7c] sm:$0xf]
  %v47 = vld [vmem:[%s2] sm:$0x1]
  %v49 = vperm.slane %v47, 0
  %v52 = vunpack.c.l.b16 %v14
  %v53 = vunpack.c.h.b16 %v14
  %v54 = vpack.c.b16 %v52, %v52
  %v55 = vpack.c.b16 %v53, %v53
  %v90 = vunpack.c.l.b16 %v15
  %v91 = vunpack.c.l.b16 %v16
  %v92 = vunpack.c.l.b16 %v17
  %v93 = vunpack.c.l.b16 %v18
  %v94 = vunpack.c.l.b16 %v19
  %v95 = vunpack.c.l.b16 %v20
  %v96 = vunpack.c.l.b16 %v21
  %v97 = vunpack.c.l.b16 %v22
  %v98 = vunpack.c.l.b16 %v23
  %v99 = vunpack.c.l.b16 %v24
  %v100 = vunpack.c.l.b16 %v25
  %v101 = vunpack.c.l.b16 %v26
  %v102 = vunpack.c.l.b16 %v27
  %v103 = vunpack.c.l.b16 %v28
  %v104 = vunpack.c.l.b16 %v29
  %v105 = vunpack.c.l.b16 %v30
  %v106 = vunpack.c.l.b16 %v31
  %v107 = vunpack.c.l.b16 %v32
  %v108 = vunpack.c.l.b16 %v33
  %v109 = vunpack.c.l.b16 %v34
  %v110 = vunpack.c.l.b16 %v35
  %v111 = vunpack.c.l.b16 %v36
  %v112 = vunpack.c.l.b16 %v37
  %v113 = vunpack.c.l.b16 %v38
  %v114 = vunpack.c.l.b16 %v39
  %v115 = vunpack.c.l.b16 %v40
  %v116 = vunpack.c.l.b16 %v41
  %v117 = vunpack.c.l.b16 %v42
  %v118 = vunpack.c.l.b16 %v43
  %v119 = vunpack.c.l.b16 %v44
  %v120 = vunpack.c.l.b16 %v45
  %v121 = vunpack.c.l.b16 %v46
  %v122 = vpack.c.b16 %v91, %v90
  %v123 = vpack.c.b16 %v93, %v92
  %v124 = vpack.c.b16 %v95, %v94
  %v125 = vpack.c.b16 %v97, %v96
  %v126 = vpack.c.b16 %v99, %v98
  %v127 = vpack.c.b16 %v101, %v100
  %v128 = vpack.c.b16 %v103, %v102
  %v129 = vpack.c.b16 %v105, %v104
  %v130 = vpack.c.b16 %v107, %v106
  %v131 = vpack.c.b16 %v109, %v108
  %v132 = vpack.c.b16 %v111, %v110
  %v133 = vpack.c.b16 %v113, %v112
  %v134 = vpack.c.b16 %v115, %v114
  %v135 = vpack.c.b16 %v117, %v116
  %v136 = vpack.c.b16 %v119, %v118
  %v137 = vpack.c.b16 %v121, %v120
  %154 = vmatpush.bf16.msra.mxu0 %v129
  %155 = vmatpush.bf16.msra.mxu0 %v128
  %156 = vmatpush.bf16.msra.mxu0 %v127
  %157 = vmatpush.bf16.msra.mxu0 %v126
  %158 = vmatpush.bf16.msra.mxu0 %v125
  %159 = vmatpush.bf16.msra.mxu0 %v124
  %160 = vmatpush.bf16.msra.mxu0 %v123
  %161 = vmatpush.bf16.msra.mxu0 %v122
  %162 = vmatmul.bf16.gmra.mxu0 %v54
  %v163 = vpop.f32.mrf.mxu0
  %v164 = vadd.f32 %v49, %v163
  %v165 = vpop.f32.mrf.mxu0
  %166 = vdwg.mxu0
  %167 = vmatpush.bf16.msra.mxu0 %v137
  %168 = vmatpush.bf16.msra.mxu0 %v136
  %169 = vmatpush.bf16.msra.mxu0 %v135
  %170 = vmatpush.bf16.msra.mxu0 %v134
  %171 = vmatpush.bf16.msra.mxu0 %v133
  %172 = vmatpush.bf16.msra.mxu0 %v132
  %173 = vmatpush.bf16.msra.mxu0 %v131
  %174 = vmatpush.bf16.msra.mxu0 %v130
  %175 = vmatmul.bf16.gmra.mxu0 %v55
  %v176 = vpop.f32.mrf.mxu0
  %v177 = vadd.f32 %v164, %v176
  %v178 = vpop.f32.mrf.mxu0
  %179 = vdwg.mxu0
  %v180 = vmax.f32 %v177, 0.0
  %v181 = vpack.c.bf16 %v180, %v180
  %182 = vst [vmem:[%s3] sm:$0xf] %v181
  // Predicated region
  $region14: #{resnet_features_pool.33} parent=0 // pred_check
    _
  $region15: #{resnet_features_pool.33} parent=0 // pred_check_branch
    %184 = sbr.rel (0) target = $region17
  $region16: #{resnet_features_pool.33} parent=0 // pred_region
    _
  $region17: #{resnet_features_pool.33} parent=0 // pred_fallthru
    _
  // Predicated region
  $region18: #{resnet_features_pool.33} parent=0 // pred_check
    _
  $region19: #{resnet_features_pool.33} parent=0 // pred_check_branch
    %186 = sbr.rel (0) target = $region21
  $region20: #{resnet_features_pool.33} parent=0 // pred_region
    _
  $region21: #{resnet_features_pool.33} parent=0 // pred_fallthru
    _

// kernel: resnet_features_pool.34
$region0: #{resnet_features_pool.34}
  #allocation0 [shape = 'u32[]', space=smem, size = 0x4, offset = 0x4, fixed_abs, tag = 'smem constant byte address 0x4 - core index']
  #allocation1 [shape = 'u32[72,128]{1,0:T(1,128)}', space=vmem, size = 0x9000, scoped, tag = 'internal scratch']
  %s0 = inlined_call_operand.vmem [shape: bf16[8,128], index: 0, kind: input, shape index: {}]
  %s1 = inlined_call_operand.vmem [shape: bf16[128,128], index: 1, kind: input, shape index: {}]
  %s2 = inlined_call_operand.vmem [shape: f32[1,128], index: 2, kind: input, shape index: {}]
  %s3 = inlined_call_operand.vmem [shape: bf16[8,128], index: 3, kind: output, shape index: {}]
  %s4 = sld [smem:[#allocation0]]
  $region22: #{resnet_features_pool.34} parent=0
    _
  %s6 = ssub.s32 1, %s4
  %s7 = scalar_select 0, %s6, %s4
  // Predicated region
  $region2: #{resnet_features_pool.34} parent=0 // pred_check
    _
  $region3: #{resnet_features_pool.34} parent=0 // pred_check_branch
    %9 = sbr.rel (0) target = $region5
  $region4: #{resnet_features_pool.34} parent=0 // pred_region
    _
  $region5: #{resnet_features_pool.34} parent=0 // pred_fallthru
    _
  // Predicated region
  $region6: #{resnet_features_pool.34} parent=0 // pred_check
    _
  $region7: #{resnet_features_pool.34} parent=0 // pred_check_branch
    %11 = sbr.rel (0) target = $region9
  $region8: #{resnet_features_pool.34} parent=0 // pred_region
    _
  $region9: #{resnet_features_pool.34} parent=0 // pred_fallthru
    _
  // Predicated region
  $region10: #{resnet_features_pool.34} parent=0 // pred_check
    _
  $region11: #{resnet_features_pool.34} parent=0 // pred_check_branch
    %13 = sbr.rel (0) target = $region13
  $region12: #{resnet_features_pool.34} parent=0 // pred_region
    _
  $region13: #{resnet_features_pool.34} parent=0 // pred_fallthru
    _
  %v14 = vld [vmem:[%s0] sm:$0xf]
  %v15 = vld [vmem:[%s1] sm:$0xf]
  %v16 = vld [vmem:[%s1 + $0x4] sm:$0xf]
  %v17 = vld [vmem:[%s1 + $0x8] sm:$0xf]
  %v18 = vld [vmem:[%s1 + $0xc] sm:$0xf]
  %v19 = vld [vmem:[%s1 + $0x10] sm:$0xf]
  %v20 = vld [vmem:[%s1 + $0x14] sm:$0xf]
  %v21 = vld [vmem:[%s1 + $0x18] sm:$0xf]
  %v22 = vld [vmem:[%s1 + $0x1c] sm:$0xf]
  %v23 = vld [vmem:[%s1 + $0x20] sm:$0xf]
  %v24 = vld [vmem:[%s1 + $0x24] sm:$0xf]
  %v25 = vld [vmem:[%s1 + $0x28] sm:$0xf]
  %v26 = vld [vmem:[%s1 + $0x2c] sm:$0xf]
  %v27 = vld [vmem:[%s1 + $0x30] sm:$0xf]
  %v28 = vld [vmem:[%s1 + $0x34] sm:$0xf]
  %v29 = vld [vmem:[%s1 + $0x38] sm:$0xf]
  %v30 = vld [vmem:[%s1 + $0x3c] sm:$0xf]
  %v31 = vld [vmem:[%s2] sm:$0x1]
  %v33 = vperm.slane %v31, 0
  %v51 = vunpack.c.l.b16 %v15
  %v52 = vunpack.c.l.b16 %v16
  %v53 = vunpack.c.l.b16 %v17
  %v54 = vunpack.c.l.b16 %v18
  %v55 = vunpack.c.l.b16 %v19
  %v56 = vunpack.c.l.b16 %v20
  %v57 = vunpack.c.l.b16 %v21
  %v58 = vunpack.c.l.b16 %v22
  %v59 = vunpack.c.l.b16 %v23
  %v60 = vunpack.c.l.b16 %v24
  %v61 = vunpack.c.l.b16 %v25
  %v62 = vunpack.c.l.b16 %v26
  %v63 = vunpack.c.l.b16 %v27
  %v64 = vunpack.c.l.b16 %v28
  %v65 = vunpack.c.l.b16 %v29
  %v66 = vunpack.c.l.b16 %v30
  %v67 = vpack.c.b16 %v52, %v51
  %v68 = vpack.c.b16 %v54, %v53
  %v69 = vpack.c.b16 %v56, %v55
  %v70 = vpack.c.b16 %v58, %v57
  %v71 = vpack.c.b16 %v60, %v59
  %v72 = vpack.c.b16 %v62, %v61
  %v73 = vpack.c.b16 %v64, %v63
  %v74 = vpack.c.b16 %v66, %v65
  %83 = vmatpush.bf16.msra.mxu0 %v74
  %84 = vmatpush.bf16.msra.mxu0 %v73
  %85 = vmatpush.bf16.msra.mxu0 %v72
  %86 = vmatpush.bf16.msra.mxu0 %v71
  %87 = vmatpush.bf16.msra.mxu0 %v70
  %88 = vmatpush.bf16.msra.mxu0 %v69
  %89 = vmatpush.bf16.msra.mxu0 %v68
  %90 = vmatpush.bf16.msra.mxu0 %v67
  %91 = vmatmul.bf16.gmra.mxu0 %v14
  %v92 = vpop.f32.mrf.mxu0
  %v93 = vadd.f32 %v33, %v92
  %v94 = vpop.f32.mrf.mxu0
  %95 = vdwg.mxu0
  %v96 = vpack.c.bf16 %v93, %v93
  %97 = vst [vmem:[%s3] sm:$0xf] %v96
  // Predicated region
  $region14: #{resnet_features_pool.34} parent=0 // pred_check
    _
  $region15: #{resnet_features_pool.34} parent=0 // pred_check_branch
    %99 = sbr.rel (0) target = $region17
  $region16: #{resnet_features_pool.34} parent=0 // pred_region
    _
  $region17: #{resnet_features_pool.34} parent=0 // pred_fallthru
    _
  // Predicated region
  $region18: #{resnet_features_pool.34} parent=0 // pred_check
    _
  $region19: #{resnet_features_pool.34} parent=0 // pred_check_branch
    %101 = sbr.rel (0) target = $region21
  $region20: #{resnet_features_pool.34} parent=0 // pred_region
    _
  $region21: #{resnet_features_pool.34} parent=0 // pred_fallthru
    _

// kernel: resnet_features_pool.35
$region0: #{resnet_features_pool.35}
  #allocation0 [shape = 'u32[]', space=smem, size = 0x4, offset = 0x4, fixed_abs, tag = 'smem constant byte address 0x4 - core index']
  #allocation1 [shape = 'u32[72,128]{1,0:T(1,128)}', space=vmem, size = 0x9000, scoped, tag = 'internal scratch']
  %s0 = inlined_call_operand.vmem [shape: bf16[8,384], index: 0, kind: input, shape index: {}]
  %s1 = inlined_call_operand.vmem [shape: bf16[384,128], index: 1, kind: input, shape index: {}]
  %s2 = inlined_call_operand.vmem [shape: f32[1,128], index: 2, kind: input, shape index: {}]
  %s3 = inlined_call_operand.vmem [shape: bf16[8,128], index: 3, kind: input, shape index: {}]
  %s4 = inlined_call_operand.vmem [shape: bf16[8,128], index: 4, kind: output, shape index: {}]
  %s5 = sld [smem:[#allocation0]]
  $region26: #{resnet_features_pool.35} parent=0
    _
  %s7 = ssub.s32 1, %s5
  %s8 = scalar_select 0, %s7, %s5
  // Predicated region
  $region2: #{resnet_features_pool.35} parent=0 // pred_check
    _
  $region3: #{resnet_features_pool.35} parent=0 // pred_check_branch
    %10 = sbr.rel (0) target = $region5
  $region4: #{resnet_features_pool.35} parent=0 // pred_region
    _
  $region5: #{resnet_features_pool.35} parent=0 // pred_fallthru
    _
  // Predicated region
  $region6: #{resnet_features_pool.35} parent=0 // pred_check
    _
  $region7: #{resnet_features_pool.35} parent=0 // pred_check_branch
    %12 = sbr.rel (0) target = $region9
  $region8: #{resnet_features_pool.35} parent=0 // pred_region
    _
  $region9: #{resnet_features_pool.35} parent=0 // pred_fallthru
    _
  // Predicated region
  $region10: #{resnet_features_pool.35} parent=0 // pred_check
    _
  $region11: #{resnet_features_pool.35} parent=0 // pred_check_branch
    %14 = sbr.rel (0) target = $region13
  $region12: #{resnet_features_pool.35} parent=0 // pred_region
    _
  $region13: #{resnet_features_pool.35} parent=0 // pred_fallthru
    _
  // Predicated region
  $region14: #{resnet_features_pool.35} parent=0 // pred_check
    _
  $region15: #{resnet_features_pool.35} parent=0 // pred_check_branch
    %16 = sbr.rel (0) target = $region17
  $region16: #{resnet_features_pool.35} parent=0 // pred_region
    _
  $region17: #{resnet_features_pool.35} parent=0 // pred_fallthru
    _
  %v17 = vld [vmem:[%s0] sm:$0xff]
  %v18 = vld [vmem:[%s0 + $0x8] sm:$0xf]
  %v19 = vld [vmem:[%s1] sm:$0xf]
  %v20 = vld [vmem:[%s1 + $0x4] sm:$0xf]
  %v21 = vld [vmem:[%s1 + $0x8] sm:$0xf]
  %v22 = vld [vmem:[%s1 + $0xc] sm:$0xf]
  %v23 = vld [vmem:[%s1 + $0x10] sm:$0xf]
  %v24 = vld [vmem:[%s1 + $0x14] sm:$0xf]
  %v25 = vld [vmem:[%s1 + $0x18] sm:$0xf]
  %v26 = vld [vmem:[%s1 + $0x1c] sm:$0xf]
  %v27 = vld [vmem:[%s1 + $0x20] sm:$0xf]
  %v28 = vld [vmem:[%s1 + $0x24] sm:$0xf]
  %v29 = vld [vmem:[%s1 + $0x28] sm:$0xf]
  %v30 = vld [vmem:[%s1 + $0x2c] sm:$0xf]
  %v31 = vld [vmem:[%s1 + $0x30] sm:$0xf]
  %v32 = vld [vmem:[%s1 + $0x34] sm:$0xf]
  %v33 = vld [vmem:[%s1 + $0x38] sm:$0xf]
  %v34 = vld [vmem:[%s1 + $0x3c] sm:$0xf]
  %v35 = vld [vmem:[%s1 + $0x40] sm:$0xf]
  %v36 = vld [vmem:[%s1 + $0x44] sm:$0xf]
  %v37 = vld [vmem:[%s1 + $0x48] sm:$0xf]
  %v38 = vld [vmem:[%s1 + $0x4c] sm:$0xf]
  %v39 = vld [vmem:[%s1 + $0x50] sm:$0xf]
  %v40 = vld [vmem:[%s1 + $0x54] sm:$0xf]
  %v41 = vld [vmem:[%s1 + $0x58] sm:$0xf]
  %v42 = vld [vmem:[%s1 + $0x5c] sm:$0xf]
  %v43 = vld [vmem:[%s1 + $0x60] sm:$0xf]
  %v44 = vld [vmem:[%s1 + $0x64] sm:$0xf]
  %v45 = vld [vmem:[%s1 + $0x68] sm:$0xf]
  %v46 = vld [vmem:[%s1 + $0x6c] sm:$0xf]
  %v47 = vld [vmem:[%s1 + $0x70] sm:$0xf]
  %v48 = vld [vmem:[%s1 + $0x74] sm:$0xf]
  %v49 = vld [vmem:[%s1 + $0x78] sm:$0xf]
  %v50 = vld [vmem:[%s1 + $0x7c] sm:$0xf]
  %v51 = vld [vmem:[%s1 + $0x80] sm:$0xf]
  %v52 = vld [vmem:[%s1 + $0x84] sm:$0xf]
  %v53 = vld [vmem:[%s1 + $0x88] sm:$0xf]
  %v54 = vld [vmem:[%s1 + $0x8c] sm:$0xf]
  %v55 = vld [vmem:[%s1 + $0x90] sm:$0xf]
  %v56 = vld [vmem:[%s1 + $0x94] sm:$0xf]
  %v57 = vld [vmem:[%s1 + $0x98] sm:$0xf]
  %v58 = vld [vmem:[%s1 + $0x9c] sm:$0xf]
  %v59 = vld [vmem:[%s1 + $0xa0] sm:$0xf]
  %v60 = vld [vmem:[%s1 + $0xa4] sm:$0xf]
  %v61 = vld [vmem:[%s1 + $0xa8] sm:$0xf]
  %v62 = vld [vmem:[%s1 + $0xac] sm:$0xf]
  %v63 = vld [vmem:[%s1 + $0xb0] sm:$0xf]
  %v64 = vld [vmem:[%s1 + $0xb4] sm:$0xf]
  %v65 = vld [vmem:[%s1 + $0xb8] sm:$0xf]
  %v66 = vld [vmem:[%s1 + $0xbc] sm:$0xf]
  %v67 = vld [vmem:[%s2] sm:$0x1]
  %v69 = vperm.slane %v67, 0
  %v73 = vunpack.c.l.b16 %v17
  %v74 = vunpack.c.h.b16 %v17
  %v75 = vunpack.c.l.b16 %v18
  %v76 = vpack.c.b16 %v73, %v73
  %v77 = vpack.c.b16 %v74, %v74
  %v78 = vpack.c.b16 %v75, %v75
  %v130 = vunpack.c.l.b16 %v19
  %v131 = vunpack.c.l.b16 %v20
  %v132 = vunpack.c.l.b16 %v21
  %v133 = vunpack.c.l.b16 %v22
  %v134 = vunpack.c.l.b16 %v23
  %v135 = vunpack.c.l.b16 %v24
  %v136 = vunpack.c.l.b16 %v25
  %v137 = vunpack.c.l.b16 %v26
  %v138 = vunpack.c.l.b16 %v27
  %v139 = vunpack.c.l.b16 %v28
  %v140 = vunpack.c.l.b16 %v29
  %v141 = vunpack.c.l.b16 %v30
  %v142 = vunpack.c.l.b16 %v31
  %v143 = vunpack.c.l.b16 %v32
  %v144 = vunpack.c.l.b16 %v33
  %v145 = vunpack.c.l.b16 %v34
  %v146 = vunpack.c.l.b16 %v35
  %v147 = vunpack.c.l.b16 %v36
  %v148 = vunpack.c.l.b16 %v37
  %v149 = vunpack.c.l.b16 %v38
  %v150 = vunpack.c.l.b16 %v39
  %v151 = vunpack.c.l.b16 %v40
  %v152 = vunpack.c.l.b16 %v41
  %v153 = vunpack.c.l.b16 %v42
  %v154 = vunpack.c.l.b16 %v43
  %v155 = vunpack.c.l.b16 %v44
  %v156 = vunpack.c.l.b16 %v45
  %v157 = vunpack.c.l.b16 %v46
  %v158 = vunpack.c.l.b16 %v47
  %v159 = vunpack.c.l.b16 %v48
  %v160 = vunpack.c.l.b16 %v49
  %v161 = vunpack.c.l.b16 %v50
  %v162 = vunpack.c.l.b16 %v51
  %v163 = vunpack.c.l.b16 %v52
  %v164 = vunpack.c.l.b16 %v53
  %v165 = vunpack.c.l.b16 %v54
  %v166 = vunpack.c.l.b16 %v55
  %v167 = vunpack.c.l.b16 %v56
  %v168 = vunpack.c.l.b16 %v57
  %v169 = vunpack.c.l.b16 %v58
  %v170 = vunpack.c.l.b16 %v59
  %v171 = vunpack.c.l.b16 %v60
  %v172 = vunpack.c.l.b16 %v61
  %v173 = vunpack.c.l.b16 %v62
  %v174 = vunpack.c.l.b16 %v63
  %v175 = vunpack.c.l.b16 %v64
  %v176 = vunpack.c.l.b16 %v65
  %v177 = vunpack.c.l.b16 %v66
  %v178 = vpack.c.b16 %v131, %v130
  %v179 = vpack.c.b16 %v133, %v132
  %v180 = vpack.c.b16 %v135, %v134
  %v181 = vpack.c.b16 %v137, %v136
  %v182 = vpack.c.b16 %v139, %v138
  %v183 = vpack.c.b16 %v141, %v140
  %v184 = vpack.c.b16 %v143, %v142
  %v185 = vpack.c.b16 %v145, %v144
  %v186 = vpack.c.b16 %v147, %v146
  %v187 = vpack.c.b16 %v149, %v148
  %v188 = vpack.c.b16 %v151, %v150
  %v189 = vpack.c.b16 %v153, %v152
  %v190 = vpack.c.b16 %v155, %v154
  %v191 = vpack.c.b16 %v157, %v156
  %v192 = vpack.c.b16 %v159, %v158
  %v193 = vpack.c.b16 %v161, %v160
  %v194 = vpack.c.b16 %v163, %v162
  %v195 = vpack.c.b16 %v165, %v164
  %v196 = vpack.c.b16 %v167, %v166
  %v197 = vpack.c.b16 %v169, %v168
  %v198 = vpack.c.b16 %v171, %v170
  %v199 = vpack.c.b16 %v173, %v172
  %v200 = vpack.c.b16 %v175, %v174
  %v201 = vpack.c.b16 %v177, %v176
  %226 = vmatpush.bf16.msra.mxu0 %v185
  %227 = vmatpush.bf16.msra.mxu0 %v184
  %228 = vmatpush.bf16.msra.mxu0 %v183
  %229 = vmatpush.bf16.msra.mxu0 %v182
  %230 = vmatpush.bf16.msra.mxu0 %v181
  %231 = vmatpush.bf16.msra.mxu0 %v180
  %232 = vmatpush.bf16.msra.mxu0 %v179
  %233 = vmatpush.bf16.msra.mxu0 %v178
  %234 = vmatmul.bf16.gmra.mxu0 %v76
  %v235 = vpop.f32.mrf.mxu0
  %v236 = vadd.f32 %v69, %v235
  %v237 = vpop.f32.mrf.mxu0
  %238 = vdwg.mxu0
  %239 = vmatpush.bf16.msra.mxu0 %v193
  %240 = vmatpush.bf16.msra.mxu0 %v192
  %241 = vmatpush.bf16.msra.mxu0 %v191
  %242 = vmatpush.bf16.msra.mxu0 %v190
  %243 = vmatpush.bf16.msra.mxu0 %v189
  %244 = vmatpush.bf16.msra.mxu0 %v188
  %245 = vmatpush.bf16.msra.mxu0 %v187
  %246 = vmatpush.bf16.msra.mxu0 %v186
  %247 = vmatmul.bf16.gmra.mxu0 %v77
  %v248 = vpop.f32.mrf.mxu0
  %v249 = vadd.f32 %v236, %v248
  %v250 = vpop.f32.mrf.mxu0
  %251 = vdwg.mxu0
  %252 = vmatpush.bf16.msra.mxu0 %v201
  %253 = vmatpush.bf16.msra.mxu0 %v200
  %254 = vmatpush.bf16.msra.mxu0 %v199
  %255 = vmatpush.bf16.msra.mxu0 %v198
  %256 = vmatpush.bf16.msra.mxu0 %v197
  %257 = vmatpush.bf16.msra.mxu0 %v196
  %258 = vmatpush.bf16.msra.mxu0 %v195
  %259 = vmatpush.bf16.msra.mxu0 %v194
  %260 = vmatmul.bf16.gmra.mxu0 %v78
  %v261 = vpop.f32.mrf.mxu0
  %v262 = vadd.f32 %v249, %v261
  %v263 = vpop.f32.mrf.mxu0
  %264 = vdwg.mxu0
  %v265 = vld [vmem:[%s3] sm:$0xf]
  %v266 = vunpack.c.l.bf16 %v265
  %v267 = vadd.f32 %v262, %v266
  %v268 = vmax.f32 %v267, 0.0
  %v269 = vpack.c.bf16 %v268, %v268
  %270 = vst [vmem:[%s4] sm:$0xf] %v269
  // Predicated region
  $region18: #{resnet_features_pool.35} parent=0 // pred_check
    _
  $region19: #{resnet_features_pool.35} parent=0 // pred_check_branch
    %272 = sbr.rel (0) target = $region21
  $region20: #{resnet_features_pool.35} parent=0 // pred_region
    _
  $region21: #{resnet_features_pool.35} parent=0 // pred_fallthru
    _
  // Predicated region
  $region22: #{resnet_features_pool.35} parent=0 // pred_check
    _
  $region23: #{resnet_features_pool.35} parent=0 // pred_check_branch
    %274 = sbr.rel (0) target = $region25
  $region24: #{resnet_features_pool.35} parent=0 // pred_region
    _
  $region25: #{resnet_features_pool.35} parent=0 // pred_fallthru
    _

// kernel: resnet_features_pool.36
$region0: #{resnet_features_pool.36}
  #allocation0 [shape = 'u32[]', space=smem, size = 0x4, offset = 0x4, fixed_abs, tag = 'smem constant byte address 0x4 - core index']
  #allocation1 [shape = 'u32[72,128]{1,0:T(1,128)}', space=vmem, size = 0x9000, scoped, tag = 'internal scratch']
  %s0 = inlined_call_operand.vmem [shape: bf16[8,384], index: 0, kind: input, shape index: {}]
  %s1 = inlined_call_operand.vmem [shape: bf16[384,128], index: 1, kind: input, shape index: {}]
  %s2 = inlined_call_operand.vmem [shape: f32[1,128], index: 2, kind: input, shape index: {}]
  %s3 = inlined_call_operand.vmem [shape: bf16[8,128], index: 3, kind: output, shape index: {}]
  %s4 = sld [smem:[#allocation0]]
  $region22: #{resnet_features_pool.36} parent=0
    _
  %s6 = ssub.s32 1, %s4
  %s7 = scalar_select 0, %s6, %s4
  // Predicated region
  $region2: #{resnet_features_pool.36} parent=0 // pred_check
    _
  $region3: #{resnet_features_pool.36} parent=0 // pred_check_branch
    %9 = sbr.rel (0) target = $region5
  $region4: #{resnet_features_pool.36} parent=0 // pred_region
    _
  $region5: #{resnet_features_pool.36} parent=0 // pred_fallthru
    _
  // Predicated region
  $region6: #{resnet_features_pool.36} parent=0 // pred_check
    _
  $region7: #{resnet_features_pool.36} parent=0 // pred_check_branch
    %11 = sbr.rel (0) target = $region9
  $region8: #{resnet_features_pool.36} parent=0 // pred_region
    _
  $region9: #{resnet_features_pool.36} parent=0 // pred_fallthru
    _
  // Predicated region
  $region10: #{resnet_features_pool.36} parent=0 // pred_check
    _
  $region11: #{resnet_features_pool.36} parent=0 // pred_check_branch
    %13 = sbr.rel (0) target = $region13
  $region12: #{resnet_features_pool.36} parent=0 // pred_region
    _
  $region13: #{resnet_features_pool.36} parent=0 // pred_fallthru
    _
  %v14 = vld [vmem:[%s0] sm:$0xff]
  %v15 = vld [vmem:[%s0 + $0x8] sm:$0xf]
  %v16 = vld [vmem:[%s1] sm:$0xf]
  %v17 = vld [vmem:[%s1 + $0x4] sm:$0xf]
  %v18 = vld [vmem:[%s1 + $0x8] sm:$0xf]
  %v19 = vld [vmem:[%s1 + $0xc] sm:$0xf]
  %v20 = vld [vmem:[%s1 + $0x10] sm:$0xf]
  %v21 = vld [vmem:[%s1 + $0x14] sm:$0xf]
  %v22 = vld [vmem:[%s1 + $0x18] sm:$0xf]
  %v23 = vld [vmem:[%s1 + $0x1c] sm:$0xf]
  %v24 = vld [vmem:[%s1 + $0x20] sm:$0xf]
  %v25 = vld [vmem:[%s1 + $0x24] sm:$0xf]
  %v26 = vld [vmem:[%s1 + $0x28] sm:$0xf]
  %v27 = vld [vmem:[%s1 + $0x2c] sm:$0xf]
  %v28 = vld [vmem:[%s1 + $0x30] sm:$0xf]
  %v29 = vld [vmem:[%s1 + $0x34] sm:$0xf]
  %v30 = vld [vmem:[%s1 + $0x38] sm:$0xf]
  %v31 = vld [vmem:[%s1 + $0x3c] sm:$0xf]
  %v32 = vld [vmem:[%s1 + $0x40] sm:$0xf]
  %v33 = vld [vmem:[%s1 + $0x44] sm:$0xf]
  %v34 = vld [vmem:[%s1 + $0x48] sm:$0xf]
  %v35 = vld [vmem:[%s1 + $0x4c] sm:$0xf]
  %v36 = vld [vmem:[%s1 + $0x50] sm:$0xf]
  %v37 = vld [vmem:[%s1 + $0x54] sm:$0xf]
  %v38 = vld [vmem:[%s1 + $0x58] sm:$0xf]
  %v39 = vld [vmem:[%s1 + $0x5c] sm:$0xf]
  %v40 = vld [vmem:[%s1 + $0x60] sm:$0xf]
  %v41 = vld [vmem:[%s1 + $0x64] sm:$0xf]
  %v42 = vld [vmem:[%s1 + $0x68] sm:$0xf]
  %v43 = vld [vmem:[%s1 + $0x6c] sm:$0xf]
  %v44 = vld [vmem:[%s1 + $0x70] sm:$0xf]
  %v45 = vld [vmem:[%s1 + $0x74] sm:$0xf]
  %v46 = vld [vmem:[%s1 + $0x78] sm:$0xf]
  %v47 = vld [vmem:[%s1 + $0x7c] sm:$0xf]
  %v48 = vld [vmem:[%s1 + $0x80] sm:$0xf]
  %v49 = vld [vmem:[%s1 + $0x84] sm:$0xf]
  %v50 = vld [vmem:[%s1 + $0x88] sm:$0xf]
  %v51 = vld [vmem:[%s1 + $0x8c] sm:$0xf]
  %v52 = vld [vmem:[%s1 + $0x90] sm:$0xf]
  %v53 = vld [vmem:[%s1 + $0x94] sm:$0xf]
  %v54 = vld [vmem:[%s1 + $0x98] sm:$0xf]
  %v55 = vld [vmem:[%s1 + $0x9c] sm:$0xf]
  %v56 = vld [vmem:[%s1 + $0xa0] sm:$0xf]
  %v57 = vld [vmem:[%s1 + $0xa4] sm:$0xf]
  %v58 = vld [vmem:[%s1 + $0xa8] sm:$0xf]
  %v59 = vld [vmem:[%s1 + $0xac] sm:$0xf]
  %v60 = vld [vmem:[%s1 + $0xb0] sm:$0xf]
  %v61 = vld [vmem:[%s1 + $0xb4] sm:$0xf]
  %v62 = vld [vmem:[%s1 + $0xb8] sm:$0xf]
  %v63 = vld [vmem:[%s1 + $0xbc] sm:$0xf]
  %v64 = vld [vmem:[%s2] sm:$0x1]
  %v66 = vperm.slane %v64, 0
  %v70 = vunpack.c.l.b16 %v14
  %v71 = vunpack.c.h.b16 %v14
  %v72 = vunpack.c.l.b16 %v15
  %v73 = vpack.c.b16 %v70, %v70
  %v74 = vpack.c.b16 %v71, %v71
  %v75 = vpack.c.b16 %v72, %v72
  %v127 = vunpack.c.l.b16 %v16
  %v128 = vunpack.c.l.b16 %v17
  %v129 = vunpack.c.l.b16 %v18
  %v130 = vunpack.c.l.b16 %v19
  %v131 = vunpack.c.l.b16 %v20
  %v132 = vunpack.c.l.b16 %v21
  %v133 = vunpack.c.l.b16 %v22
  %v134 = vunpack.c.l.b16 %v23
  %v135 = vunpack.c.l.b16 %v24
  %v136 = vunpack.c.l.b16 %v25
  %v137 = vunpack.c.l.b16 %v26
  %v138 = vunpack.c.l.b16 %v27
  %v139 = vunpack.c.l.b16 %v28
  %v140 = vunpack.c.l.b16 %v29
  %v141 = vunpack.c.l.b16 %v30
  %v142 = vunpack.c.l.b16 %v31
  %v143 = vunpack.c.l.b16 %v32
  %v144 = vunpack.c.l.b16 %v33
  %v145 = vunpack.c.l.b16 %v34
  %v146 = vunpack.c.l.b16 %v35
  %v147 = vunpack.c.l.b16 %v36
  %v148 = vunpack.c.l.b16 %v37
  %v149 = vunpack.c.l.b16 %v38
  %v150 = vunpack.c.l.b16 %v39
  %v151 = vunpack.c.l.b16 %v40
  %v152 = vunpack.c.l.b16 %v41
  %v153 = vunpack.c.l.b16 %v42
  %v154 = vunpack.c.l.b16 %v43
  %v155 = vunpack.c.l.b16 %v44
  %v156 = vunpack.c.l.b16 %v45
  %v157 = vunpack.c.l.b16 %v46
  %v158 = vunpack.c.l.b16 %v47
  %v159 = vunpack.c.l.b16 %v48
  %v160 = vunpack.c.l.b16 %v49
  %v161 = vunpack.c.l.b16 %v50
  %v162 = vunpack.c.l.b16 %v51
  %v163 = vunpack.c.l.b16 %v52
  %v164 = vunpack.c.l.b16 %v53
  %v165 = vunpack.c.l.b16 %v54
  %v166 = vunpack.c.l.b16 %v55
  %v167 = vunpack.c.l.b16 %v56
  %v168 = vunpack.c.l.b16 %v57
  %v169 = vunpack.c.l.b16 %v58
  %v170 = vunpack.c.l.b16 %v59
  %v171 = vunpack.c.l.b16 %v60
  %v172 = vunpack.c.l.b16 %v61
  %v173 = vunpack.c.l.b16 %v62
  %v174 = vunpack.c.l.b16 %v63
  %v175 = vpack.c.b16 %v128, %v127
  %v176 = vpack.c.b16 %v130, %v129
  %v177 = vpack.c.b16 %v132, %v131
  %v178 = vpack.c.b16 %v134, %v133
  %v179 = vpack.c.b16 %v136, %v135
  %v180 = vpack.c.b16 %v138, %v137
  %v181 = vpack.c.b16 %v140, %v139
  %v182 = vpack.c.b16 %v142, %v141
  %v183 = vpack.c.b16 %v144, %v143
  %v184 = vpack.c.b16 %v146, %v145
  %v185 = vpack.c.b16 %v148, %v147
  %v186 = vpack.c.b16 %v150, %v149
  %v187 = vpack.c.b16 %v152, %v151
  %v188 = vpack.c.b16 %v154, %v153
  %v189 = vpack.c.b16 %v156, %v155
  %v190 = vpack.c.b16 %v158, %v157
  %v191 = vpack.c.b16 %v160, %v159
  %v192 = vpack.c.b16 %v162, %v161
  %v193 = vpack.c.b16 %v164, %v163
  %v194 = vpack.c.b16 %v166, %v165
  %v195 = vpack.c.b16 %v168, %v167
  %v196 = vpack.c.b16 %v170, %v169
  %v197 = vpack.c.b16 %v172, %v171
  %v198 = vpack.c.b16 %v174, %v173
  %223 = vmatpush.bf16.msra.mxu0 %v182
  %224 = vmatpush.bf16.msra.mxu0 %v181
  %225 = vmatpush.bf16.msra.mxu0 %v180
  %226 = vmatpush.bf16.msra.mxu0 %v179
  %227 = vmatpush.bf16.msra.mxu0 %v178
  %228 = vmatpush.bf16.msra.mxu0 %v177
  %229 = vmatpush.bf16.msra.mxu0 %v176
  %230 = vmatpush.bf16.msra.mxu0 %v175
  %231 = vmatmul.bf16.gmra.mxu0 %v73
  %v232 = vpop.f32.mrf.mxu0
  %v233 = vadd.f32 %v66, %v232
  %v234 = vpop.f32.mrf.mxu0
  %235 = vdwg.mxu0
  %236 = vmatpush.bf16.msra.mxu0 %v190
  %237 = vmatpush.bf16.msra.mxu0 %v189
  %238 = vmatpush.bf16.msra.mxu0 %v188
  %239 = vmatpush.bf16.msra.mxu0 %v187
  %240 = vmatpush.bf16.msra.mxu0 %v186
  %241 = vmatpush.bf16.msra.mxu0 %v185
  %242 = vmatpush.bf16.msra.mxu0 %v184
  %243 = vmatpush.bf16.msra.mxu0 %v183
  %244 = vmatmul.bf16.gmra.mxu0 %v74
  %v245 = vpop.f32.mrf.mxu0
  %v246 = vadd.f32 %v233, %v245
  %v247 = vpop.f32.mrf.mxu0
  %248 = vdwg.mxu0
  %249 = vmatpush.bf16.msra.mxu0 %v198
  %250 = vmatpush.bf16.msra.mxu0 %v197
  %251 = vmatpush.bf16.msra.mxu0 %v196
  %252 = vmatpush.bf16.msra.mxu0 %v195
  %253 = vmatpush.bf16.msra.mxu0 %v194
  %254 = vmatpush.bf16.msra.mxu0 %v193
  %255 = vmatpush.bf16.msra.mxu0 %v192
  %256 = vmatpush.bf16.msra.mxu0 %v191
  %257 = vmatmul.bf16.gmra.mxu0 %v75
  %v258 = vpop.f32.mrf.mxu0
  %v259 = vadd.f32 %v246, %v258
  %v260 = vpop.f32.mrf.mxu0
  %261 = vdwg.mxu0
  %v262 = vmax.f32 %v259, 0.0
  %v263 = vpack.c.bf16 %v262, %v262
  %264 = vst [vmem:[%s3] sm:$0xf] %v263
  // Predicated region
  $region14: #{resnet_features_pool.36} parent=0 // pred_check
    _
  $region15: #{resnet_features_pool.36} parent=0 // pred_check_branch
    %266 = sbr.rel (0) target = $region17
  $region16: #{resnet_features_pool.36} parent=0 // pred_region
    _
  $region17: #{resnet_features_pool.36} parent=0 // pred_fallthru
    _
  // Predicated region
  $region18: #{resnet_features_pool.36} parent=0 // pred_check
    _
  $region19: #{resnet_features_pool.36} parent=0 // pred_check_branch
    %268 = sbr.rel (0) target = $region21
  $region20: #{resnet_features_pool.36} parent=0 // pred_region
    _
  $region21: #{resnet_features_pool.36} parent=0 // pred_fallthru
    _

// kernel: resnet_features_pool.43
$region0: #{resnet_features_pool.43}
  #allocation0 [shape = 'u32[]', space=smem, size = 0x4, offset = 0x4, fixed_abs, tag = 'smem constant byte address 0x4 - core index']
  #allocation1 [shape = 'u32[72,128]{1,0:T(1,128)}', space=vmem, size = 0x9000, scoped, tag = 'internal scratch']
  %s0 = inlined_call_operand.vmem [shape: bf16[2,1,128], index: 0, kind: input, shape index: {}]
  %s1 = inlined_call_operand.hbm [shape: f32[2,128], index: 1, kind: output, shape index: {}]
  %s2 = sld [smem:[#allocation0]]
  $region14: #{resnet_features_pool.43} parent=0
    _
  %s4 = ssub.s32 1, %s2
  %s5 = scalar_select 0, %s4, %s2
  $region1: #{resnet_features_pool.43} parent=0
    #allocation2 [shape = 'u8[1024]{0}', space=vmem, size = 0x400, scoped, tag = 'output window, operand 0, single buffered']
    #allocation3 [shape = 's32[1]{0}', space=sflag, size = 0x4, scoped, tag = 'scoped memory for resnet_features_pool.43']
    %6 = vsyncpa [#allocation3], 0
    // Predicated region
    $region2: #{resnet_features_pool.43} parent=1 // pred_check
      _
    $region3: #{resnet_features_pool.43} parent=1 // pred_check_branch
      %8 = sbr.rel (0) target = $region5
    $region4: #{resnet_features_pool.43} parent=1 // pred_region
      _
    $region5: #{resnet_features_pool.43} parent=1 // pred_fallthru
      _
    %v9 = vld [vmem:[%s0] sm:$0x1]
    %v10 = vld [vmem:[%s0 + $0x1] sm:$0x1]
    %v11 = vunpack.c.l.bf16 %v9
    %v12 = vunpack.c.l.bf16 %v10
    %v13 = vadd.f32 %v11, 0.0
    %v14 = vadd.f32 %v12, 0.0
    %v17 = vperm.slane %v13, 0
    %v18 = vperm.slane %v14, 0
    %vm19 = vcmask 1041409
    %v20 = vsel %vm19, %v18, %v17
    %22 = vst [vmem:[#allocation2] sm:$0x3] %v20
    // Predicated region
    $region6: #{resnet_features_pool.43} parent=1 // pred_check
      _
    $region7: #{resnet_features_pool.43} parent=1 // pred_check_branch
      %24 = sbr.rel (0) target = $region9
    $region8: #{resnet_features_pool.43} parent=1 // pred_region
      %26 = vsyncadd [#allocation3], 0
      %s28 = sshll.u32 [#allocation2], 4
      %s29 = int_to_ptr.vmem [resolvable:$true] %s28
      %s30 = sshll.u32 %s1, 4
      %s31 = int_to_ptr.hbm [resolvable:$true] %s30
      %33 = dma.vmem_to_hbm [thread:$0]  %s29, 32, %s31, [#allocation3]
    $region9: #{resnet_features_pool.43} parent=1 // pred_fallthru
      _
    // Predicated region
    $region10: #{resnet_features_pool.43} parent=1 // pred_check
      _
    $region11: #{resnet_features_pool.43} parent=1 // pred_check_branch
      %35 = sbr.rel (0) target = $region13
    $region12: #{resnet_features_pool.43} parent=1 // pred_region
      %37 = dma.done [#allocation3], 32
    $region13: #{resnet_features_pool.43} parent=1 // pred_fallthru
      _
    %38 = vsyncpa [#allocation3], 1

// kernel: resnet_features_pool.40
$region0: #{resnet_features_pool.40}
  #allocation0 [shape = 'u32[]', space=smem, size = 0x4, offset = 0x4, fixed_abs, tag = 'smem constant byte address 0x4 - core index']
  #allocation1 [shape = 'u32[72,128]{1,0:T(1,128)}', space=vmem, size = 0x9000, scoped, tag = 'internal scratch']
  %s0 = inlined_call_operand.vmem [shape: bf16[8,640], index: 0, kind: input, shape index: {}]
  %s1 = inlined_call_operand.vmem [shape: bf16[640,128], index: 1, kind: input, shape index: {}]
  %s2 = inlined_call_operand.vmem [shape: f32[1,128], index: 2, kind: input, shape index: {}]
  %s3 = inlined_call_operand.vmem [shape: bf16[8,128], index: 3, kind: input, shape index: {}]
  %s4 = inlined_call_operand.vmem [shape: bf16[8,128], index: 4, kind: output, shape index: {}]
  %s5 = sld [smem:[#allocation0]]
  $region26: #{resnet_features_pool.40} parent=0
    _
  %s7 = ssub.s32 1, %s5
  %s8 = scalar_select 0, %s7, %s5
  // Predicated region
  $region2: #{resnet_features_pool.40} parent=0 // pred_check
    _
  $region3: #{resnet_features_pool.40} parent=0 // pred_check_branch
    %10 = sbr.rel (0) target = $region5
  $region4: #{resnet_features_pool.40} parent=0 // pred_region
    _
  $region5: #{resnet_features_pool.40} parent=0 // pred_fallthru
    _
  // Predicated region
  $region6: #{resnet_features_pool.40} parent=0 // pred_check
    _
  $region7: #{resnet_features_pool.40} parent=0 // pred_check_branch
    %12 = sbr.rel (0) target = $region9
  $region8: #{resnet_features_pool.40} parent=0 // pred_region
    _
  $region9: #{resnet_features_pool.40} parent=0 // pred_fallthru
    _
  // Predicated region
  $region10: #{resnet_features_pool.40} parent=0 // pred_check
    _
  $region11: #{resnet_features_pool.40} parent=0 // pred_check_branch
    %14 = sbr.rel (0) target = $region13
  $region12: #{resnet_features_pool.40} parent=0 // pred_region
    _
  $region13: #{resnet_features_pool.40} parent=0 // pred_fallthru
    _
  // Predicated region
  $region14: #{resnet_features_pool.40} parent=0 // pred_check
    _
  $region15: #{resnet_features_pool.40} parent=0 // pred_check_branch
    %16 = sbr.rel (0) target = $region17
  $region16: #{resnet_features_pool.40} parent=0 // pred_region
    _
  $region17: #{resnet_features_pool.40} parent=0 // pred_fallthru
    _
  %v17 = vld [vmem:[%s0] sm:$0xff]
  %v18 = vld [vmem:[%s0 + $0x8] sm:$0xff]
  %v19 = vld [vmem:[%s0 + $0x10] sm:$0xf]
  %v20 = vld [vmem:[%s1] sm:$0xf]
  %v21 = vld [vmem:[%s1 + $0x4] sm:$0xf]
  %v22 = vld [vmem:[%s1 + $0x8] sm:$0xf]
  %v23 = vld [vmem:[%s1 + $0xc] sm:$0xf]
  %v24 = vld [vmem:[%s1 + $0x10] sm:$0xf]
  %v25 = vld [vmem:[%s1 + $0x14] sm:$0xf]
  %v26 = vld [vmem:[%s1 + $0x18] sm:$0xf]
  %v27 = vld [vmem:[%s1 + $0x1c] sm:$0xf]
  %v28 = vld [vmem:[%s1 + $0x20] sm:$0xf]
  %v29 = vld [vmem:[%s1 + $0x24] sm:$0xf]
  %v30 = vld [vmem:[%s1 + $0x28] sm:$0xf]
  %v31 = vld [vmem:[%s1 + $0x2c] sm:$0xf]
  %v32 = vld [vmem:[%s1 + $0x30] sm:$0xf]
  %v33 = vld [vmem:[%s1 + $0x34] sm:$0xf]
  %v34 = vld [vmem:[%s1 + $0x38] sm:$0xf]
  %v35 = vld [vmem:[%s1 + $0x3c] sm:$0xf]
  %v36 = vld [vmem:[%s1 + $0x40] sm:$0xf]
  %v37 = vld [vmem:[%s1 + $0x44] sm:$0xf]
  %v38 = vld [vmem:[%s1 + $0x48] sm:$0xf]
  %v39 = vld [vmem:[%s1 + $0x4c] sm:$0xf]
  %v40 = vld [vmem:[%s1 + $0x50] sm:$0xf]
  %v41 = vld [vmem:[%s1 + $0x54] sm:$0xf]
  %v42 = vld [vmem:[%s1 + $0x58] sm:$0xf]
  %v43 = vld [vmem:[%s1 + $0x5c] sm:$0xf]
  %v44 = vld [vmem:[%s1 + $0x60] sm:$0xf]
  %v45 = vld [vmem:[%s1 + $0x64] sm:$0xf]
  %v46 = vld [vmem:[%s1 + $0x68] sm:$0xf]
  %v47 = vld [vmem:[%s1 + $0x6c] sm:$0xf]
  %v48 = vld [vmem:[%s1 + $0x70] sm:$0xf]
  %v49 = vld [vmem:[%s1 + $0x74] sm:$0xf]
  %v50 = vld [vmem:[%s1 + $0x78] sm:$0xf]
  %v51 = vld [vmem:[%s1 + $0x7c] sm:$0xf]
  %v52 = vld [vmem:[%s1 + $0x80] sm:$0xf]
  %v53 = vld [vmem:[%s1 + $0x84] sm:$0xf]
  %v54 = vld [vmem:[%s1 + $0x88] sm:$0xf]
  %v55 = vld [vmem:[%s1 + $0x8c] sm:$0xf]
  %v56 = vld [vmem:[%s1 + $0x90] sm:$0xf]
  %v57 = vld [vmem:[%s1 + $0x94] sm:$0xf]
  %v58 = vld [vmem:[%s1 + $0x98] sm:$0xf]
  %v59 = vld [vmem:[%s1 + $0x9c] sm:$0xf]
  %v60 = vld [vmem:[%s1 + $0xa0] sm:$0xf]
  %v61 = vld [vmem:[%s1 + $0xa4] sm:$0xf]
  %v62 = vld [vmem:[%s1 + $0xa8] sm:$0xf]
  %v63 = vld [vmem:[%s1 + $0xac] sm:$0xf]
  %v64 = vld [vmem:[%s1 + $0xb0] sm:$0xf]
  %v65 = vld [vmem:[%s1 + $0xb4] sm:$0xf]
  %v66 = vld [vmem:[%s1 + $0xb8] sm:$0xf]
  %v67 = vld [vmem:[%s1 + $0xbc] sm:$0xf]
  %v68 = vld [vmem:[%s1 + $0xc0] sm:$0xf]
  %v69 = vld [vmem:[%s1 + $0xc4] sm:$0xf]
  %v70 = vld [vmem:[%s1 + $0xc8] sm:$0xf]
  %v71 = vld [vmem:[%s1 + $0xcc] sm:$0xf]
  %v72 = vld [vmem:[%s1 + $0xd0] sm:$0xf]
  %v73 = vld [vmem:[%s1 + $0xd4] sm:$0xf]
  %v74 = vld [vmem:[%s1 + $0xd8] sm:$0xf]
  %v75 = vld [vmem:[%s1 + $0xdc] sm:$0xf]
  %v76 = vld [vmem:[%s1 + $0xe0] sm:$0xf]
  %v77 = vld [vmem:[%s1 + $0xe4] sm:$0xf]
  %v78 = vld [vmem:[%s1 + $0xe8] sm:$0xf]
  %v79 = vld [vmem:[%s1 + $0xec] sm:$0xf]
  %v80 = vld [vmem:[%s1 + $0xf0] sm:$0xf]
  %v81 = vld [vmem:[%s1 + $0xf4] sm:$0xf]
  %v82 = vld [vmem:[%s1 + $0xf8] sm:$0xf]
  %v83 = vld [vmem:[%s1 + $0xfc] sm:$0xf]
  %v84 = vld [vmem:[%s1 + $0x100] sm:$0xf]
  %v85 = vld [vmem:[%s1 + $0x104] sm:$0xf]
  %v86 = vld [vmem:[%s1 + $0x108] sm:$0xf]
  %v87 = vld [vmem:[%s1 + $0x10c] sm:$0xf]
  %v88 = vld [vmem:[%s1 + $0x110] sm:$0xf]
  %v89 = vld [vmem:[%s1 + $0x114] sm:$0xf]
  %v90 = vld [vmem:[%s1 + $0x118] sm:$0xf]
  %v91 = vld [vmem:[%s1 + $0x11c] sm:$0xf]
  %v92 = vld [vmem:[%s1 + $0x120] sm:$0xf]
  %v93 = vld [vmem:[%s1 + $0x124] sm:$0xf]
  %v94 = vld [vmem:[%s1 + $0x128] sm:$0xf]
  %v95 = vld [vmem:[%s1 + $0x12c] sm:$0xf]
  %v96 = vld [vmem:[%s1 + $0x130] sm:$0xf]
  %v97 = vld [vmem:[%s1 + $0x134] sm:$0xf]
  %v98 = vld [vmem:[%s1 + $0x138] sm:$0xf]
  %v99 = vld [vmem:[%s1 + $0x13c] sm:$0xf]
  %v100 = vld [vmem:[%s2] sm:$0x1]
  %v102 = vperm.slane %v100, 0
  %v107 = vunpack.c.l.b16 %v17
  %v108 = vunpack.c.h.b16 %v17
  %v109 = vunpack.c.l.b16 %v18
  %v110 = vunpack.c.h.b16 %v18
  %v111 = vunpack.c.l.b16 %v19
  %v112 = vpack.c.b16 %v107, %v107
  %v113 = vpack.c.b16 %v108, %v108
  %v114 = vpack.c.b16 %v109, %v109
  %v115 = vpack.c.b16 %v110, %v110
  %v116 = vpack.c.b16 %v111, %v111
  %v202 = vunpack.c.l.b16 %v20
  %v203 = vunpack.c.l.b16 %v21
  %v204 = vunpack.c.l.b16 %v22
  %v205 = vunpack.c.l.b16 %v23
  %v206 = vunpack.c.l.b16 %v24
  %v207 = vunpack.c.l.b16 %v25
  %v208 = vunpack.c.l.b16 %v26
  %v209 = vunpack.c.l.b16 %v27
  %v210 = vunpack.c.l.b16 %v28
  %v211 = vunpack.c.l.b16 %v29
  %v212 = vunpack.c.l.b16 %v30
  %v213 = vunpack.c.l.b16 %v31
  %v214 = vunpack.c.l.b16 %v32
  %v215 = vunpack.c.l.b16 %v33
  %v216 = vunpack.c.l.b16 %v34
  %v217 = vunpack.c.l.b16 %v35
  %v218 = vunpack.c.l.b16 %v36
  %v219 = vunpack.c.l.b16 %v37
  %v220 = vunpack.c.l.b16 %v38
  %v221 = vunpack.c.l.b16 %v39
  %v222 = vunpack.c.l.b16 %v40
  %v223 = vunpack.c.l.b16 %v41
  %v224 = vunpack.c.l.b16 %v42
  %v225 = vunpack.c.l.b16 %v43
  %v226 = vunpack.c.l.b16 %v44
  %v227 = vunpack.c.l.b16 %v45
  %v228 = vunpack.c.l.b16 %v46
  %v229 = vunpack.c.l.b16 %v47
  %v230 = vunpack.c.l.b16 %v48
  %v231 = vunpack.c.l.b16 %v49
  %v232 = vunpack.c.l.b16 %v50
  %v233 = vunpack.c.l.b16 %v51
  %v234 = vunpack.c.l.b16 %v52
  %v235 = vunpack.c.l.b16 %v53
  %v236 = vunpack.c.l.b16 %v54
  %v237 = vunpack.c.l.b16 %v55
  %v238 = vunpack.c.l.b16 %v56
  %v239 = vunpack.c.l.b16 %v57
  %v240 = vunpack.c.l.b16 %v58
  %v241 = vunpack.c.l.b16 %v59
  %v242 = vunpack.c.l.b16 %v60
  %v243 = vunpack.c.l.b16 %v61
  %v244 = vunpack.c.l.b16 %v62
  %v245 = vunpack.c.l.b16 %v63
  %v246 = vunpack.c.l.b16 %v64
  %v247 = vunpack.c.l.b16 %v65
  %v248 = vunpack.c.l.b16 %v66
  %v249 = vunpack.c.l.b16 %v67
  %v250 = vunpack.c.l.b16 %v68
  %v251 = vunpack.c.l.b16 %v69
  %v252 = vunpack.c.l.b16 %v70
  %v253 = vunpack.c.l.b16 %v71
  %v254 = vunpack.c.l.b16 %v72
  %v255 = vunpack.c.l.b16 %v73
  %v256 = vunpack.c.l.b16 %v74
  %v257 = vunpack.c.l.b16 %v75
  %v258 = vunpack.c.l.b16 %v76
  %v259 = vunpack.c.l.b16 %v77
  %v260 = vunpack.c.l.b16 %v78
  %v261 = vunpack.c.l.b16 %v79
  %v262 = vunpack.c.l.b16 %v80
  %v263 = vunpack.c.l.b16 %v81
  %v264 = vunpack.c.l.b16 %v82
  %v265 = vunpack.c.l.b16 %v83
  %v266 = vunpack.c.l.b16 %v84
  %v267 = vunpack.c.l.b16 %v85
  %v268 = vunpack.c.l.b16 %v86
  %v269 = vunpack.c.l.b16 %v87
  %v270 = vunpack.c.l.b16 %v88
  %v271 = vunpack.c.l.b16 %v89
  %v272 = vunpack.c.l.b16 %v90
  %v273 = vunpack.c.l.b16 %v91
  %v274 = vunpack.c.l.b16 %v92
  %v275 = vunpack.c.l.b16 %v93
  %v276 = vunpack.c.l.b16 %v94
  %v277 = vunpack.c.l.b16 %v95
  %v278 = vunpack.c.l.b16 %v96
  %v279 = vunpack.c.l.b16 %v97
  %v280 = vunpack.c.l.b16 %v98
  %v281 = vunpack.c.l.b16 %v99
  %v282 = vpack.c.b16 %v203, %v202
  %v283 = vpack.c.b16 %v205, %v204
  %v284 = vpack.c.b16 %v207, %v206
  %v285 = vpack.c.b16 %v209, %v208
  %v286 = vpack.c.b16 %v211, %v210
  %v287 = vpack.c.b16 %v213, %v212
  %v288 = vpack.c.b16 %v215, %v214
  %v289 = vpack.c.b16 %v217, %v216
  %v290 = vpack.c.b16 %v219, %v218
  %v291 = vpack.c.b16 %v221, %v220
  %v292 = vpack.c.b16 %v223, %v222
  %v293 = vpack.c.b16 %v225, %v224
  %v294 = vpack.c.b16 %v227, %v226
  %v295 = vpack.c.b16 %v229, %v228
  %v296 = vpack.c.b16 %v231, %v230
  %v297 = vpack.c.b16 %v233, %v232
  %v298 = vpack.c.b16 %v235, %v234
  %v299 = vpack.c.b16 %v237, %v236
  %v300 = vpack.c.b16 %v239, %v238
  %v301 = vpack.c.b16 %v241, %v240
  %v302 = vpack.c.b16 %v243, %v242
  %v303 = vpack.c.b16 %v245, %v244
  %v304 = vpack.c.b16 %v247, %v246
  %v305 = vpack.c.b16 %v249, %v248
  %v306 = vpack.c.b16 %v251, %v250
  %v307 = vpack.c.b16 %v253, %v252
  %v308 = vpack.c.b16 %v255, %v254
  %v309 = vpack.c.b16 %v257, %v256
  %v310 = vpack.c.b16 %v259, %v258
  %v311 = vpack.c.b16 %v261, %v260
  %v312 = vpack.c.b16 %v263, %v262
  %v313 = vpack.c.b16 %v265, %v264
  %v314 = vpack.c.b16 %v267, %v266
  %v315 = vpack.c.b16 %v269, %v268
  %v316 = vpack.c.b16 %v271, %v270
  %v317 = vpack.c.b16 %v273, %v272
  %v318 = vpack.c.b16 %v275, %v274
  %v319 = vpack.c.b16 %v277, %v276
  %v320 = vpack.c.b16 %v279, %v278
  %v321 = vpack.c.b16 %v281, %v280
  %362 = vmatpush.bf16.msra.mxu0 %v289
  %363 = vmatpush.bf16.msra.mxu0 %v288
  %364 = vmatpush.bf16.msra.mxu0 %v287
  %365 = vmatpush.bf16.msra.mxu0 %v286
  %366 = vmatpush.bf16.msra.mxu0 %v285
  %367 = vmatpush.bf16.msra.mxu0 %v284
  %368 = vmatpush.bf16.msra.mxu0 %v283
  %369 = vmatpush.bf16.msra.mxu0 %v282
  %370 = vmatmul.bf16.gmra.mxu0 %v112
  %v371 = vpop.f32.mrf.mxu0
  %v372 = vadd.f32 %v102, %v371
  %v373 = vpop.f32.mrf.mxu0
  %374 = vdwg.mxu0
  %375 = vmatpush.bf16.msra.mxu0 %v297
  %376 = vmatpush.bf16.msra.mxu0 %v296
  %377 = vmatpush.bf16.msra.mxu0 %v295
  %378 = vmatpush.bf16.msra.mxu0 %v294
  %379 = vmatpush.bf16.msra.mxu0 %v293
  %380 = vmatpush.bf16.msra.mxu0 %v292
  %381 = vmatpush.bf16.msra.mxu0 %v291
  %382 = vmatpush.bf16.msra.mxu0 %v290
  %383 = vmatmul.bf16.gmra.mxu0 %v113
  %v384 = vpop.f32.mrf.mxu0
  %v385 = vadd.f32 %v372, %v384
  %v386 = vpop.f32.mrf.mxu0
  %387 = vdwg.mxu0
  %388 = vmatpush.bf16.msra.mxu0 %v305
  %389 = vmatpush.bf16.msra.mxu0 %v304
  %390 = vmatpush.bf16.msra.mxu0 %v303
  %391 = vmatpush.bf16.msra.mxu0 %v302
  %392 = vmatpush.bf16.msra.mxu0 %v301
  %393 = vmatpush.bf16.msra.mxu0 %v300
  %394 = vmatpush.bf16.msra.mxu0 %v299
  %395 = vmatpush.bf16.msra.mxu0 %v298
  %396 = vmatmul.bf16.gmra.mxu0 %v114
  %v397 = vpop.f32.mrf.mxu0
  %v398 = vadd.f32 %v385, %v397
  %v399 = vpop.f32.mrf.mxu0
  %400 = vdwg.mxu0
  %401 = vmatpush.bf16.msra.mxu0 %v313
  %402 = vmatpush.bf16.msra.mxu0 %v312
  %403 = vmatpush.bf16.msra.mxu0 %v311
  %404 = vmatpush.bf16.msra.mxu0 %v310
  %405 = vmatpush.bf16.msra.mxu0 %v309
  %406 = vmatpush.bf16.msra.mxu0 %v308
  %407 = vmatpush.bf16.msra.mxu0 %v307
  %408 = vmatpush.bf16.msra.mxu0 %v306
  %409 = vmatmul.bf16.gmra.mxu0 %v115
  %v410 = vpop.f32.mrf.mxu0
  %v411 = vadd.f32 %v398, %v410
  %v412 = vpop.f32.mrf.mxu0
  %413 = vdwg.mxu0
  %414 = vmatpush.bf16.msra.mxu0 %v321
  %415 = vmatpush.bf16.msra.mxu0 %v320
  %416 = vmatpush.bf16.msra.mxu0 %v319
  %417 = vmatpush.bf16.msra.mxu0 %v318
  %418 = vmatpush.bf16.msra.mxu0 %v317
  %419 = vmatpush.bf16.msra.mxu0 %v316
  %420 = vmatpush.bf16.msra.mxu0 %v315
  %421 = vmatpush.bf16.msra.mxu0 %v314
  %422 = vmatmul.bf16.gmra.mxu0 %v116
  %v423 = vpop.f32.mrf.mxu0
  %v424 = vadd.f32 %v411, %v423
  %v425 = vpop.f32.mrf.mxu0
  %426 = vdwg.mxu0
  %v427 = vld [vmem:[%s3] sm:$0xf]
  %v428 = vunpack.c.l.bf16 %v427
  %v429 = vadd.f32 %v424, %v428
  %v430 = vmax.f32 %v429, 0.0
  %v431 = vpack.c.bf16 %v430, %v430
  %432 = vst [vmem:[%s4] sm:$0xf] %v431
  // Predicated region
  $region18: #{resnet_features_pool.40} parent=0 // pred_check
    _
  $region19: #{resnet_features_pool.40} parent=0 // pred_check_branch
    %434 = sbr.rel (0) target = $region21
  $region20: #{resnet_features_pool.40} parent=0 // pred_region
    _
  $region21: #{resnet_features_pool.40} parent=0 // pred_fallthru
    _
  // Predicated region
  $region22: #{resnet_features_pool.40} parent=0 // pred_check
    _
  $region23: #{resnet_features_pool.40} parent=0 // pred_check_branch
    %436 = sbr.rel (0) target = $region25
  $region24: #{resnet_features_pool.40} parent=0 // pred_region
    _
  $region25: #{resnet_features_pool.40} parent=0 // pred_fallthru
    _

// kernel: resnet_features_pool.41
$region0: #{resnet_features_pool.41}
  #allocation0 [shape = 'u32[]', space=smem, size = 0x4, offset = 0x4, fixed_abs, tag = 'smem constant byte address 0x4 - core index']
  #allocation1 [shape = 'u32[72,128]{1,0:T(1,128)}', space=vmem, size = 0x9000, scoped, tag = 'internal scratch']
  %s0 = inlined_call_operand.vmem [shape: bf16[8,640], index: 0, kind: input, shape index: {}]
  %s1 = inlined_call_operand.vmem [shape: bf16[640,128], index: 1, kind: input, shape index: {}]
  %s2 = inlined_call_operand.vmem [shape: f32[1,128], index: 2, kind: input, shape index: {}]
  %s3 = inlined_call_operand.vmem [shape: bf16[8,128], index: 3, kind: output, shape index: {}]
  %s4 = sld [smem:[#allocation0]]
  $region22: #{resnet_features_pool.41} parent=0
    _
  %s6 = ssub.s32 1, %s4
  %s7 = scalar_select 0, %s6, %s4
  // Predicated region
  $region2: #{resnet_features_pool.41} parent=0 // pred_check
    _
  $region3: #{resnet_features_pool.41} parent=0 // pred_check_branch
    %9 = sbr.rel (0) target = $region5
  $region4: #{resnet_features_pool.41} parent=0 // pred_region
    _
  $region5: #{resnet_features_pool.41} parent=0 // pred_fallthru
    _
  // Predicated region
  $region6: #{resnet_features_pool.41} parent=0 // pred_check
    _
  $region7: #{resnet_features_pool.41} parent=0 // pred_check_branch
    %11 = sbr.rel (0) target = $region9
  $region8: #{resnet_features_pool.41} parent=0 // pred_region
    _
  $region9: #{resnet_features_pool.41} parent=0 // pred_fallthru
    _
  // Predicated region
  $region10: #{resnet_features_pool.41} parent=0 // pred_check
    _
  $region11: #{resnet_features_pool.41} parent=0 // pred_check_branch
    %13 = sbr.rel (0) target = $region13
  $region12: #{resnet_features_pool.41} parent=0 // pred_region
    _
  $region13: #{resnet_features_pool.41} parent=0 // pred_fallthru
    _
  %v14 = vld [vmem:[%s0] sm:$0xff]
  %v15 = vld [vmem:[%s0 + $0x8] sm:$0xff]
  %v16 = vld [vmem:[%s0 + $0x10] sm:$0xf]
  %v17 = vld [vmem:[%s1] sm:$0xf]
  %v18 = vld [vmem:[%s1 + $0x4] sm:$0xf]
  %v19 = vld [vmem:[%s1 + $0x8] sm:$0xf]
  %v20 = vld [vmem:[%s1 + $0xc] sm:$0xf]
  %v21 = vld [vmem:[%s1 + $0x10] sm:$0xf]
  %v22 = vld [vmem:[%s1 + $0x14] sm:$0xf]
  %v23 = vld [vmem:[%s1 + $0x18] sm:$0xf]
  %v24 = vld [vmem:[%s1 + $0x1c] sm:$0xf]
  %v25 = vld [vmem:[%s1 + $0x20] sm:$0xf]
  %v26 = vld [vmem:[%s1 + $0x24] sm:$0xf]
  %v27 = vld [vmem:[%s1 + $0x28] sm:$0xf]
  %v28 = vld [vmem:[%s1 + $0x2c] sm:$0xf]
  %v29 = vld [vmem:[%s1 + $0x30] sm:$0xf]
  %v30 = vld [vmem:[%s1 + $0x34] sm:$0xf]
  %v31 = vld [vmem:[%s1 + $0x38] sm:$0xf]
  %v32 = vld [vmem:[%s1 + $0x3c] sm:$0xf]
  %v33 = vld [vmem:[%s1 + $0x40] sm:$0xf]
  %v34 = vld [vmem:[%s1 + $0x44] sm:$0xf]
  %v35 = vld [vmem:[%s1 + $0x48] sm:$0xf]
  %v36 = vld [vmem:[%s1 + $0x4c] sm:$0xf]
  %v37 = vld [vmem:[%s1 + $0x50] sm:$0xf]
  %v38 = vld [vmem:[%s1 + $0x54] sm:$0xf]
  %v39 = vld [vmem:[%s1 + $0x58] sm:$0xf]
  %v40 = vld [vmem:[%s1 + $0x5c] sm:$0xf]
  %v41 = vld [vmem:[%s1 + $0x60] sm:$0xf]
  %v42 = vld [vmem:[%s1 + $0x64] sm:$0xf]
  %v43 = vld [vmem:[%s1 + $0x68] sm:$0xf]
  %v44 = vld [vmem:[%s1 + $0x6c] sm:$0xf]
  %v45 = vld [vmem:[%s1 + $0x70] sm:$0xf]
  %v46 = vld [vmem:[%s1 + $0x74] sm:$0xf]
  %v47 = vld [vmem:[%s1 + $0x78] sm:$0xf]
  %v48 = vld [vmem:[%s1 + $0x7c] sm:$0xf]
  %v49 = vld [vmem:[%s1 + $0x80] sm:$0xf]
  %v50 = vld [vmem:[%s1 + $0x84] sm:$0xf]
  %v51 = vld [vmem:[%s1 + $0x88] sm:$0xf]
  %v52 = vld [vmem:[%s1 + $0x8c] sm:$0xf]
  %v53 = vld [vmem:[%s1 + $0x90] sm:$0xf]
  %v54 = vld [vmem:[%s1 + $0x94] sm:$0xf]
  %v55 = vld [vmem:[%s1 + $0x98] sm:$0xf]
  %v56 = vld [vmem:[%s1 + $0x9c] sm:$0xf]
  %v57 = vld [vmem:[%s1 + $0xa0] sm:$0xf]
  %v58 = vld [vmem:[%s1 + $0xa4] sm:$0xf]
  %v59 = vld [vmem:[%s1 + $0xa8] sm:$0xf]
  %v60 = vld [vmem:[%s1 + $0xac] sm:$0xf]
  %v61 = vld [vmem:[%s1 + $0xb0] sm:$0xf]
  %v62 = vld [vmem:[%s1 + $0xb4] sm:$0xf]
  %v63 = vld [vmem:[%s1 + $0xb8] sm:$0xf]
  %v64 = vld [vmem:[%s1 + $0xbc] sm:$0xf]
  %v65 = vld [vmem:[%s1 + $0xc0] sm:$0xf]
  %v66 = vld [vmem:[%s1 + $0xc4] sm:$0xf]
  %v67 = vld [vmem:[%s1 + $0xc8] sm:$0xf]
  %v68 = vld [vmem:[%s1 + $0xcc] sm:$0xf]
  %v69 = vld [vmem:[%s1 + $0xd0] sm:$0xf]
  %v70 = vld [vmem:[%s1 + $0xd4] sm:$0xf]
  %v71 = vld [vmem:[%s1 + $0xd8] sm:$0xf]
  %v72 = vld [vmem:[%s1 + $0xdc] sm:$0xf]
  %v73 = vld [vmem:[%s1 + $0xe0] sm:$0xf]
  %v74 = vld [vmem:[%s1 + $0xe4] sm:$0xf]
  %v75 = vld [vmem:[%s1 + $0xe8] sm:$0xf]
  %v76 = vld [vmem:[%s1 + $0xec] sm:$0xf]
  %v77 = vld [vmem:[%s1 + $0xf0] sm:$0xf]
  %v78 = vld [vmem:[%s1 + $0xf4] sm:$0xf]
  %v79 = vld [vmem:[%s1 + $0xf8] sm:$0xf]
  %v80 = vld [vmem:[%s1 + $0xfc] sm:$0xf]
  %v81 = vld [vmem:[%s1 + $0x100] sm:$0xf]
  %v82 = vld [vmem:[%s1 + $0x104] sm:$0xf]
  %v83 = vld [vmem:[%s1 + $0x108] sm:$0xf]
  %v84 = vld [vmem:[%s1 + $0x10c] sm:$0xf]
  %v85 = vld [vmem:[%s1 + $0x110] sm:$0xf]
  %v86 = vld [vmem:[%s1 + $0x114] sm:$0xf]
  %v87 = vld [vmem:[%s1 + $0x118] sm:$0xf]
  %v88 = vld [vmem:[%s1 + $0x11c] sm:$0xf]
  %v89 = vld [vmem:[%s1 + $0x120] sm:$0xf]
  %v90 = vld [vmem:[%s1 + $0x124] sm:$0xf]
  %v91 = vld [vmem:[%s1 + $0x128] sm:$0xf]
  %v92 = vld [vmem:[%s1 + $0x12c] sm:$0xf]
  %v93 = vld [vmem:[%s1 + $0x130] sm:$0xf]
  %v94 = vld [vmem:[%s1 + $0x134] sm:$0xf]
  %v95 = vld [vmem:[%s1 + $0x138] sm:$0xf]
  %v96 = vld [vmem:[%s1 + $0x13c] sm:$0xf]
  %v97 = vld [vmem:[%s2] sm:$0x1]
  %v99 = vperm.slane %v97, 0
  %v104 = vunpack.c.l.b16 %v14
  %v105 = vunpack.c.h.b16 %v14
  %v106 = vunpack.c.l.b16 %v15
  %v107 = vunpack.c.h.b16 %v15
  %v108 = vunpack.c.l.b16 %v16
  %v109 = vpack.c.b16 %v104, %v104
  %v110 = vpack.c.b16 %v105, %v105
  %v111 = vpack.c.b16 %v106, %v106
  %v112 = vpack.c.b16 %v107, %v107
  %v113 = vpack.c.b16 %v108, %v108
  %v199 = vunpack.c.l.b16 %v17
  %v200 = vunpack.c.l.b16 %v18
  %v201 = vunpack.c.l.b16 %v19
  %v202 = vunpack.c.l.b16 %v20
  %v203 = vunpack.c.l.b16 %v21
  %v204 = vunpack.c.l.b16 %v22
  %v205 = vunpack.c.l.b16 %v23
  %v206 = vunpack.c.l.b16 %v24
  %v207 = vunpack.c.l.b16 %v25
  %v208 = vunpack.c.l.b16 %v26
  %v209 = vunpack.c.l.b16 %v27
  %v210 = vunpack.c.l.b16 %v28
  %v211 = vunpack.c.l.b16 %v29
  %v212 = vunpack.c.l.b16 %v30
  %v213 = vunpack.c.l.b16 %v31
  %v214 = vunpack.c.l.b16 %v32
  %v215 = vunpack.c.l.b16 %v33
  %v216 = vunpack.c.l.b16 %v34
  %v217 = vunpack.c.l.b16 %v35
  %v218 = vunpack.c.l.b16 %v36
  %v219 = vunpack.c.l.b16 %v37
  %v220 = vunpack.c.l.b16 %v38
  %v221 = vunpack.c.l.b16 %v39
  %v222 = vunpack.c.l.b16 %v40
  %v223 = vunpack.c.l.b16 %v41
  %v224 = vunpack.c.l.b16 %v42
  %v225 = vunpack.c.l.b16 %v43
  %v226 = vunpack.c.l.b16 %v44
  %v227 = vunpack.c.l.b16 %v45
  %v228 = vunpack.c.l.b16 %v46
  %v229 = vunpack.c.l.b16 %v47
  %v230 = vunpack.c.l.b16 %v48
  %v231 = vunpack.c.l.b16 %v49
  %v232 = vunpack.c.l.b16 %v50
  %v233 = vunpack.c.l.b16 %v51
  %v234 = vunpack.c.l.b16 %v52
  %v235 = vunpack.c.l.b16 %v53
  %v236 = vunpack.c.l.b16 %v54
  %v237 = vunpack.c.l.b16 %v55
  %v238 = vunpack.c.l.b16 %v56
  %v239 = vunpack.c.l.b16 %v57
  %v240 = vunpack.c.l.b16 %v58
  %v241 = vunpack.c.l.b16 %v59
  %v242 = vunpack.c.l.b16 %v60
  %v243 = vunpack.c.l.b16 %v61
  %v244 = vunpack.c.l.b16 %v62
  %v245 = vunpack.c.l.b16 %v63
  %v246 = vunpack.c.l.b16 %v64
  %v247 = vunpack.c.l.b16 %v65
  %v248 = vunpack.c.l.b16 %v66
  %v249 = vunpack.c.l.b16 %v67
  %v250 = vunpack.c.l.b16 %v68
  %v251 = vunpack.c.l.b16 %v69
  %v252 = vunpack.c.l.b16 %v70
  %v253 = vunpack.c.l.b16 %v71
  %v254 = vunpack.c.l.b16 %v72
  %v255 = vunpack.c.l.b16 %v73
  %v256 = vunpack.c.l.b16 %v74
  %v257 = vunpack.c.l.b16 %v75
  %v258 = vunpack.c.l.b16 %v76
  %v259 = vunpack.c.l.b16 %v77
  %v260 = vunpack.c.l.b16 %v78
  %v261 = vunpack.c.l.b16 %v79
  %v262 = vunpack.c.l.b16 %v80
  %v263 = vunpack.c.l.b16 %v81
  %v264 = vunpack.c.l.b16 %v82
  %v265 = vunpack.c.l.b16 %v83
  %v266 = vunpack.c.l.b16 %v84
  %v267 = vunpack.c.l.b16 %v85
  %v268 = vunpack.c.l.b16 %v86
  %v269 = vunpack.c.l.b16 %v87
  %v270 = vunpack.c.l.b16 %v88
  %v271 = vunpack.c.l.b16 %v89
  %v272 = vunpack.c.l.b16 %v90
  %v273 = vunpack.c.l.b16 %v91
  %v274 = vunpack.c.l.b16 %v92
  %v275 = vunpack.c.l.b16 %v93
  %v276 = vunpack.c.l.b16 %v94
  %v277 = vunpack.c.l.b16 %v95
  %v278 = vunpack.c.l.b16 %v96
  %v279 = vpack.c.b16 %v200, %v199
  %v280 = vpack.c.b16 %v202, %v201
  %v281 = vpack.c.b16 %v204, %v203
  %v282 = vpack.c.b16 %v206, %v205
  %v283 = vpack.c.b16 %v208, %v207
  %v284 = vpack.c.b16 %v210, %v209
  %v285 = vpack.c.b16 %v212, %v211
  %v286 = vpack.c.b16 %v214, %v213
  %v287 = vpack.c.b16 %v216, %v215
  %v288 = vpack.c.b16 %v218, %v217
  %v289 = vpack.c.b16 %v220, %v219
  %v290 = vpack.c.b16 %v222, %v221
  %v291 = vpack.c.b16 %v224, %v223
  %v292 = vpack.c.b16 %v226, %v225
  %v293 = vpack.c.b16 %v228, %v227
  %v294 = vpack.c.b16 %v230, %v229
  %v295 = vpack.c.b16 %v232, %v231
  %v296 = vpack.c.b16 %v234, %v233
  %v297 = vpack.c.b16 %v236, %v235
  %v298 = vpack.c.b16 %v238, %v237
  %v299 = vpack.c.b16 %v240, %v239
  %v300 = vpack.c.b16 %v242, %v241
  %v301 = vpack.c.b16 %v244, %v243
  %v302 = vpack.c.b16 %v246, %v245
  %v303 = vpack.c.b16 %v248, %v247
  %v304 = vpack.c.b16 %v250, %v249
  %v305 = vpack.c.b16 %v252, %v251
  %v306 = vpack.c.b16 %v254, %v253
  %v307 = vpack.c.b16 %v256, %v255
  %v308 = vpack.c.b16 %v258, %v257
  %v309 = vpack.c.b16 %v260, %v259
  %v310 = vpack.c.b16 %v262, %v261
  %v311 = vpack.c.b16 %v264, %v263
  %v312 = vpack.c.b16 %v266, %v265
  %v313 = vpack.c.b16 %v268, %v267
  %v314 = vpack.c.b16 %v270, %v269
  %v315 = vpack.c.b16 %v272, %v271
  %v316 = vpack.c.b16 %v274, %v273
  %v317 = vpack.c.b16 %v276, %v275
  %v318 = vpack.c.b16 %v278, %v277
  %359 = vmatpush.bf16.msra.mxu0 %v286
  %360 = vmatpush.bf16.msra.mxu0 %v285
  %361 = vmatpush.bf16.msra.mxu0 %v284
  %362 = vmatpush.bf16.msra.mxu0 %v283
  %363 = vmatpush.bf16.msra.mxu0 %v282
  %364 = vmatpush.bf16.msra.mxu0 %v281
  %365 = vmatpush.bf16.msra.mxu0 %v280
  %366 = vmatpush.bf16.msra.mxu0 %v279
  %367 = vmatmul.bf16.gmra.mxu0 %v109
  %v368 = vpop.f32.mrf.mxu0
  %v369 = vadd.f32 %v99, %v368
  %v370 = vpop.f32.mrf.mxu0
  %371 = vdwg.mxu0
  %372 = vmatpush.bf16.msra.mxu0 %v294
  %373 = vmatpush.bf16.msra.mxu0 %v293
  %374 = vmatpush.bf16.msra.mxu0 %v292
  %375 = vmatpush.bf16.msra.mxu0 %v291
  %376 = vmatpush.bf16.msra.mxu0 %v290
  %377 = vmatpush.bf16.msra.mxu0 %v289
  %378 = vmatpush.bf16.msra.mxu0 %v288
  %379 = vmatpush.bf16.msra.mxu0 %v287
  %380 = vmatmul.bf16.gmra.mxu0 %v110
  %v381 = vpop.f32.mrf.mxu0
  %v382 = vadd.f32 %v369, %v381
  %v383 = vpop.f32.mrf.mxu0
  %384 = vdwg.mxu0
  %385 = vmatpush.bf16.msra.mxu0 %v302
  %386 = vmatpush.bf16.msra.mxu0 %v301
  %387 = vmatpush.bf16.msra.mxu0 %v300
  %388 = vmatpush.bf16.msra.mxu0 %v299
  %389 = vmatpush.bf16.msra.mxu0 %v298
  %390 = vmatpush.bf16.msra.mxu0 %v297
  %391 = vmatpush.bf16.msra.mxu0 %v296
  %392 = vmatpush.bf16.msra.mxu0 %v295
  %393 = vmatmul.bf16.gmra.mxu0 %v111
  %v394 = vpop.f32.mrf.mxu0
  %v395 = vadd.f32 %v382, %v394
  %v396 = vpop.f32.mrf.mxu0
  %397 = vdwg.mxu0
  %398 = vmatpush.bf16.msra.mxu0 %v310
  %399 = vmatpush.bf16.msra.mxu0 %v309
  %400 = vmatpush.bf16.msra.mxu0 %v308
  %401 = vmatpush.bf16.msra.mxu0 %v307
  %402 = vmatpush.bf16.msra.mxu0 %v306
  %403 = vmatpush.bf16.msra.mxu0 %v305
  %404 = vmatpush.bf16.msra.mxu0 %v304
  %405 = vmatpush.bf16.msra.mxu0 %v303
  %406 = vmatmul.bf16.gmra.mxu0 %v112
  %v407 = vpop.f32.mrf.mxu0
  %v408 = vadd.f32 %v395, %v407
  %v409 = vpop.f32.mrf.mxu0
  %410 = vdwg.mxu0
  %411 = vmatpush.bf16.msra.mxu0 %v318
  %412 = vmatpush.bf16.msra.mxu0 %v317
  %413 = vmatpush.bf16.msra.mxu0 %v316
  %414 = vmatpush.bf16.msra.mxu0 %v315
  %415 = vmatpush.bf16.msra.mxu0 %v314
  %416 = vmatpush.bf16.msra.mxu0 %v313
  %417 = vmatpush.bf16.msra.mxu0 %v312
  %418 = vmatpush.bf16.msra.mxu0 %v311
  %419 = vmatmul.bf16.gmra.mxu0 %v113
  %v420 = vpop.f32.mrf.mxu0
  %v421 = vadd.f32 %v408, %v420
  %v422 = vpop.f32.mrf.mxu0
  %423 = vdwg.mxu0
  %v424 = vmax.f32 %v421, 0.0
  %v425 = vpack.c.bf16 %v424, %v424
  %426 = vst [vmem:[%s3] sm:$0xf] %v425
  // Predicated region
  $region14: #{resnet_features_pool.41} parent=0 // pred_check
    _
  $region15: #{resnet_features_pool.41} parent=0 // pred_check_branch
    %428 = sbr.rel (0) target = $region17
  $region16: #{resnet_features_pool.41} parent=0 // pred_region
    _
  $region17: #{resnet_features_pool.41} parent=0 // pred_fallthru
    _
  // Predicated region
  $region18: #{resnet_features_pool.41} parent=0 // pred_check
    _
  $region19: #{resnet_features_pool.41} parent=0 // pred_check_branch
    %430 = sbr.rel (0) target = $region21
  $region20: #{resnet_features_pool.41} parent=0 // pred_region
    _
  $region21: #{resnet_features_pool.41} parent=0 // pred_fallthru
    _

</llo_original>
